<compile_context>
chip_gen: v5e
topology: v5e:2x2
jax: 0.10.0
libtpu: 0.0.40
codegen_flags: <defaults>
</compile_context>

<pallas_src>
import functools

import jax
import jax.numpy as jnp
import numpy as np
from jax.experimental import pallas as pl
from jax.experimental.pallas import tpu as pltpu


_POOL_KS = (2, 4, 8)   # AvgPool2d kernel size of stage 1/2/3
_CH = 3                # in/out channels of every LapConv2d

LAP = jnp.array([[0.0, -1.0, 0.0],
                 [-1.0, 4.0, -1.0],
                 [0.0, -1.0, 0.0]], dtype=jnp.float32)


def _pool_mat(n_in: int, k: int) -> np.ndarray:
    """(n_in//k, n_in) averaging matrix: M[a, h] = 1/k iff h // k == a."""
    n_out = n_in // k
    m = np.zeros((n_out, n_in), np.float32)
    for a in range(n_out):
        m[a, a * k:(a + 1) * k] = 1.0 / k
    return m


def _lap1d(n: int) -> np.ndarray:
    """1-D zero-padded Laplacian [-1, 2, -1] as an (n, n) tridiagonal matrix."""
    return (2.0 * np.eye(n) - np.eye(n, k=1) - np.eye(n, k=-1)).astype(np.float32)


def _lapnet_kernel(x_ref,
                   ph1, la1, pwt1, lb1,
                   ph2, la2, pwt2, lb2,
                   ph3, la3, pwt3, lb3,
                   b1_ref, b2_ref, b3_ref,
                   o_ref):
    # x_ref : (1, C, H, W)              VMEM  (one batch element)
    # ph*   : (Ho, Hi)                  VMEM  row-pooling matrix
    # la*   : (Ho, Hi)                  VMEM  (Kh @ Ph): row-Laplacian folded into row pooling
    # pwt*  : (Wi, Wo)                  VMEM  column-pooling matrix (transposed)
    # lb*   : (Wi, Wo)                  VMEM  (PwT @ Kw): col-Laplacian folded into col pooling
    # b*_ref: (Co,)                     SMEM  conv biases
    # o_ref : (1, Co, H/64, W/64)       VMEM
    f32 = jnp.float32
    C = x_ref.shape[1]
    Co = o_ref.shape[1]
    dot = functools.partial(jnp.dot, preferred_element_type=f32,
                            precision=jax.lax.Precision.HIGHEST)

    def lap_pool(s, ph_r, la_r, pwt_r, lb_r):
        # Laplacian(AvgPool(s)) = (Kh@Ph)@s@PwT + Ph@s@(PwT@Kw)
        t_lap = dot(la_r[...], s)      # (Ho, Wi)
        t_pool = dot(ph_r[...], s)     # (Ho, Wi)
        return dot(t_lap, pwt_r[...]) + dot(t_pool, lb_r[...])   # (Ho, Wo)

    def bias_sum(b_ref):
        tot = b_ref[0]
        for i in range(1, b_ref.shape[0]):
            tot = tot + b_ref[i]
        return tot

    # Channel sum: identical per-(co,ci) Laplacian weights =>
    # sum_ci L(P(x_ci)) == L(P(sum_ci x_ci)); carry one summed field per stage.
    s = x_ref[0, 0].astype(f32)
    for c in range(1, C):
        s = s + x_ref[0, c].astype(f32)

    # Stage 1: AvgPool2d(2) + LapConv.  All Co outputs share y1; next stage only
    # needs their sum, i.e. Co*y1 + sum(b1).
    y1 = lap_pool(s, ph1, la1, pwt1, lb1)
    s = float(b1_ref.shape[0]) * y1 + bias_sum(b1_ref)

    # Stage 2: AvgPool2d(4) + LapConv.
    y2 = lap_pool(s, ph2, la2, pwt2, lb2)
    s = float(b2_ref.shape[0]) * y2 + bias_sum(b2_ref)

    # Stage 3: AvgPool2d(8) + LapConv.  Per-channel output = shared field + bias.
    y3 = lap_pool(s, ph3, la3, pwt3, lb3)
    for co in range(Co):
        o_ref[0, co] = (y3 + b3_ref[co]).astype(o_ref.dtype)


def lap_net_forward(x: jnp.ndarray, biases) -> jnp.ndarray:
    """LapNet.forward: (AvgPool2d(2)+LapConv) -> (AvgPool2d(4)+LapConv) -> (AvgPool2d(8)+LapConv)."""
    N, C, H, W = x.shape
    assert C == _CH, "LapNet expects 3 input channels"
    Co = _CH

    mats = []
    h, w = H, W
    for k in _POOL_KS:
        if (h % k) or (w % k):
            raise ValueError("spatial dims must be divisible by 2*4*8 = 64")
        ho, wo = h // k, w // k
        ph = _pool_mat(h, k)              # (ho, h)
        pwt = _pool_mat(w, k).T           # (w, wo)
        la = _lap1d(ho) @ ph              # (ho, h)   Kh @ Ph
        lb = pwt @ _lap1d(wo)             # (w, wo)   PwT @ Kw
        mats += [jnp.asarray(ph), jnp.asarray(la), jnp.asarray(pwt), jnp.asarray(lb)]
        h, w = ho, wo

    in_specs = [pl.BlockSpec((1, C, H, W), lambda n: (n, 0, 0, 0))]
    in_specs += [pl.BlockSpec(m.shape, lambda n: (0, 0)) for m in mats]
    in_specs += [pl.BlockSpec(memory_space=pltpu.MemorySpace.SMEM)] * 3

    return pl.pallas_call(
        _lapnet_kernel,
        out_shape=jax.ShapeDtypeStruct((N, Co, h, w), jnp.float32),
        grid=(N,),
        in_specs=in_specs,
        out_specs=pl.BlockSpec((1, Co, h, w), lambda n: (n, 0, 0, 0)),
        compiler_params=pltpu.CompilerParams(dimension_semantics=("parallel",)),
    )(x, *mats, *(b.astype(jnp.float32) for b in biases))


def _reference_forward(x: jnp.ndarray, biases) -> jnp.ndarray:
    """Pure-JAX reference (mirrors the PyTorch module)."""
    weight = jnp.broadcast_to(LAP, (3, 3, 3, 3))

    def avg_pool(t, k):
        N, C, H, W = t.shape
        return t.reshape(N, C, H // k, k, W // k, k).mean(axis=(3, 5))

    def conv(t, b):
        y = jax.lax.conv_general_dilated(
            t, weight, window_strides=(1, 1), padding=((1, 1), (1, 1)),
            dimension_numbers=("NCHW", "OIHW", "NCHW"),
            precision=jax.lax.Precision.HIGHEST)
        return y + b[None, :, None, None]

    y = conv(avg_pool(x, 2), biases[0])
    y = conv(avg_pool(y, 4), biases[1])
    y = conv(avg_pool(y, 8), biases[2])
    return y


if __name__ == "__main__":
    key = jax.random.PRNGKey(0)
    kb1, kb2, kb3, kx = jax.random.split(key, 4)

    # Deterministic bias init mimicking nn.Conv2d default: U(-1/sqrt(fan_in), 1/sqrt(fan_in)),
    # fan_in = in_channels * 3 * 3 = 27.  (Conv weights are the fixed Laplacian.)
    bound = 1.0 / np.sqrt(27.0)
    biases = (
        jax.random.uniform(kb1, (3,), jnp.float32, -bound, bound),
        jax.random.uniform(kb2, (3,), jnp.float32, -bound, bound),
        jax.random.uniform(kb3, (3,), jnp.float32, -bound, bound),
    )

    # Spatial dims must be divisible by 2*4*8 = 64 for the cascade.
    x = jax.random.normal(kx, (2, 3, 64, 64), jnp.float32)

    out = jax.block_until_ready(lap_net_forward(x, biases))      # (2, 3, 1, 1)
    ref = jax.block_until_ready(_reference_forward(x, biases))

    assert out.shape == (2, 3, 1, 1), out.shape
    err = float(np.max(np.abs(np.asarray(out) - np.asarray(ref))))
    # Tolerance covers MXU f32 pass behaviour; observed error is far smaller.
    assert np.allclose(np.asarray(out), np.asarray(ref), rtol=1e-2, atol=1e-2), err
    print("KERNEL_OK")
</pallas_src>

<mosaic_0001>
module attributes {stable_mosaic.version = 11 : i64} {
  func.func @_lapnet_kernel(%arg0: i32, %arg1: memref<1x3x64x64xf32, #tpu.memory_space<vmem>>, %arg2: memref<32x64xf32, #tpu.memory_space<vmem>>, %arg3: memref<32x64xf32, #tpu.memory_space<vmem>>, %arg4: memref<64x32xf32, #tpu.memory_space<vmem>>, %arg5: memref<64x32xf32, #tpu.memory_space<vmem>>, %arg6: memref<8x32xf32, #tpu.memory_space<vmem>>, %arg7: memref<8x32xf32, #tpu.memory_space<vmem>>, %arg8: memref<32x8xf32, #tpu.memory_space<vmem>>, %arg9: memref<32x8xf32, #tpu.memory_space<vmem>>, %arg10: memref<1x8xf32, #tpu.memory_space<vmem>>, %arg11: memref<1x8xf32, #tpu.memory_space<vmem>>, %arg12: memref<8x1xf32, #tpu.memory_space<vmem>>, %arg13: memref<8x1xf32, #tpu.memory_space<vmem>>, %arg14: memref<3xf32, #tpu.memory_space<smem>>, %arg15: memref<3xf32, #tpu.memory_space<smem>>, %arg16: memref<3xf32, #tpu.memory_space<smem>>, %arg17: memref<1x3x1x1xf32, #tpu.memory_space<vmem>>) attributes {dimension_semantics = [#tpu.dimension_semantics<parallel>], iteration_bounds = array<i64: 2>, scalar_prefetch = 0 : i64, scratch_operands = 0 : i64, tpu.core_type = #tpu.core_type<tc>, window_params = [{transform_indices = @transform_0, window_bounds = array<i64: 1, 3, 64, 64>}, {pipeline_mode = #tpu.pipeline_mode<synchronous>, transform_indices = @transform_1, window_bounds = array<i64: 32, 64>}, {pipeline_mode = #tpu.pipeline_mode<synchronous>, transform_indices = @transform_2, window_bounds = array<i64: 32, 64>}, {pipeline_mode = #tpu.pipeline_mode<synchronous>, transform_indices = @transform_3, window_bounds = array<i64: 64, 32>}, {pipeline_mode = #tpu.pipeline_mode<synchronous>, transform_indices = @transform_4, window_bounds = array<i64: 64, 32>}, {pipeline_mode = #tpu.pipeline_mode<synchronous>, transform_indices = @transform_5, window_bounds = array<i64: 8, 32>}, {pipeline_mode = #tpu.pipeline_mode<synchronous>, transform_indices = @transform_6, window_bounds = array<i64: 8, 32>}, {pipeline_mode = #tpu.pipeline_mode<synchronous>, transform_indices = @transform_7, window_bounds = array<i64: 32, 8>}, {pipeline_mode = #tpu.pipeline_mode<synchronous>, transform_indices = @transform_8, window_bounds = array<i64: 32, 8>}, {pipeline_mode = #tpu.pipeline_mode<synchronous>, transform_indices = @transform_9, window_bounds = array<i64: 1, 8>}, {pipeline_mode = #tpu.pipeline_mode<synchronous>, transform_indices = @transform_10, window_bounds = array<i64: 1, 8>}, {pipeline_mode = #tpu.pipeline_mode<synchronous>, transform_indices = @transform_11, window_bounds = array<i64: 8, 1>}, {pipeline_mode = #tpu.pipeline_mode<synchronous>, transform_indices = @transform_12, window_bounds = array<i64: 8, 1>}, {transform_indices = @transform_13, window_bounds = array<i64: 3>}, {transform_indices = @transform_14, window_bounds = array<i64: 3>}, {transform_indices = @transform_15, window_bounds = array<i64: 3>}, {transform_indices = @transform_16, window_bounds = array<i64: 1, 3, 1, 1>}]} {
    %c0 = arith.constant 0 : index
    %c0_0 = arith.constant 0 : index
    %c0_1 = arith.constant 0 : index
    %c0_2 = arith.constant 0 : index
    %0 = vector.load %arg1[%c0, %c0_0, %c0_1, %c0_2] : memref<1x3x64x64xf32, #tpu.memory_space<vmem>>, vector<1x1x64x64xf32>
    %1 = vector.shape_cast %0 : vector<1x1x64x64xf32> to vector<64x64xf32>
    %c0_3 = arith.constant 0 : index
    %c1 = arith.constant 1 : index
    %c0_4 = arith.constant 0 : index
    %c0_5 = arith.constant 0 : index
    %2 = vector.load %arg1[%c0_3, %c1, %c0_4, %c0_5] : memref<1x3x64x64xf32, #tpu.memory_space<vmem>>, vector<1x1x64x64xf32>
    %3 = vector.shape_cast %2 : vector<1x1x64x64xf32> to vector<64x64xf32>
    %4 = arith.addf %1, %3 : vector<64x64xf32>
    %c0_6 = arith.constant 0 : index
    %c2 = arith.constant 2 : index
    %c0_7 = arith.constant 0 : index
    %c0_8 = arith.constant 0 : index
    %5 = vector.load %arg1[%c0_6, %c2, %c0_7, %c0_8] : memref<1x3x64x64xf32, #tpu.memory_space<vmem>>, vector<1x1x64x64xf32>
    %6 = vector.shape_cast %5 : vector<1x1x64x64xf32> to vector<64x64xf32>
    %7 = arith.addf %4, %6 : vector<64x64xf32>
    %c0_9 = arith.constant 0 : index
    %c0_10 = arith.constant 0 : index
    %8 = vector.load %arg3[%c0_9, %c0_10] : memref<32x64xf32, #tpu.memory_space<vmem>>, vector<32x64xf32>
    %cst = arith.constant dense<0.000000e+00> : vector<32x64xf32>
    %9 = tpu.matmul %8, %7, %cst {dimension_numbers = #tpu.dot_dimension_numbers<[1], [0], [0], [1], [0, 0, 1, 1], [], []>, precision = #tpu.contract_precision<fp32>} : vector<32x64xf32>, vector<64x64xf32>, vector<32x64xf32> -> vector<32x64xf32>
    %c0_11 = arith.constant 0 : index
    %c0_12 = arith.constant 0 : index
    %10 = vector.load %arg2[%c0_11, %c0_12] : memref<32x64xf32, #tpu.memory_space<vmem>>, vector<32x64xf32>
    %cst_13 = arith.constant dense<0.000000e+00> : vector<32x64xf32>
    %11 = tpu.matmul %10, %7, %cst_13 {dimension_numbers = #tpu.dot_dimension_numbers<[1], [0], [0], [1], [0, 0, 1, 1], [], []>, precision = #tpu.contract_precision<fp32>} : vector<32x64xf32>, vector<64x64xf32>, vector<32x64xf32> -> vector<32x64xf32>
    %c0_14 = arith.constant 0 : index
    %c0_15 = arith.constant 0 : index
    %12 = vector.load %arg4[%c0_14, %c0_15] : memref<64x32xf32, #tpu.memory_space<vmem>>, vector<64x32xf32>
    %cst_16 = arith.constant dense<0.000000e+00> : vector<32x32xf32>
    %13 = tpu.matmul %9, %12, %cst_16 {dimension_numbers = #tpu.dot_dimension_numbers<[1], [0], [0], [1], [0, 0, 1, 1], [], []>, precision = #tpu.contract_precision<fp32>} : vector<32x64xf32>, vector<64x32xf32>, vector<32x32xf32> -> vector<32x32xf32>
    %c0_17 = arith.constant 0 : index
    %c0_18 = arith.constant 0 : index
    %14 = vector.load %arg5[%c0_17, %c0_18] : memref<64x32xf32, #tpu.memory_space<vmem>>, vector<64x32xf32>
    %cst_19 = arith.constant dense<0.000000e+00> : vector<32x32xf32>
    %15 = tpu.matmul %11, %14, %cst_19 {dimension_numbers = #tpu.dot_dimension_numbers<[1], [0], [0], [1], [0, 0, 1, 1], [], []>, precision = #tpu.contract_precision<fp32>} : vector<32x64xf32>, vector<64x32xf32>, vector<32x32xf32> -> vector<32x32xf32>
    %16 = arith.addf %13, %15 : vector<32x32xf32>
    %cst_20 = arith.constant 3.000000e+00 : f32
    %17 = vector.broadcast %cst_20 : f32 to vector<32x32xf32>
    %18 = arith.mulf %17, %16 : vector<32x32xf32>
    %c0_21 = arith.constant 0 : index
    %19 = memref.load %arg14[%c0_21] : memref<3xf32, #tpu.memory_space<smem>>
    %c1_22 = arith.constant 1 : index
    %20 = memref.load %arg14[%c1_22] : memref<3xf32, #tpu.memory_space<smem>>
    %21 = arith.addf %19, %20 : f32
    %c2_23 = arith.constant 2 : index
    %22 = memref.load %arg14[%c2_23] : memref<3xf32, #tpu.memory_space<smem>>
    %23 = arith.addf %21, %22 : f32
    %24 = vector.broadcast %23 : f32 to vector<32x32xf32>
    %25 = arith.addf %18, %24 : vector<32x32xf32>
    %c0_24 = arith.constant 0 : index
    %c0_25 = arith.constant 0 : index
    %26 = vector.load %arg7[%c0_24, %c0_25] : memref<8x32xf32, #tpu.memory_space<vmem>>, vector<8x32xf32>
    %cst_26 = arith.constant dense<0.000000e+00> : vector<8x32xf32>
    %27 = tpu.matmul %26, %25, %cst_26 {dimension_numbers = #tpu.dot_dimension_numbers<[1], [0], [0], [1], [0, 0, 1, 1], [], []>, precision = #tpu.contract_precision<fp32>} : vector<8x32xf32>, vector<32x32xf32>, vector<8x32xf32> -> vector<8x32xf32>
    %c0_27 = arith.constant 0 : index
    %c0_28 = arith.constant 0 : index
    %28 = vector.load %arg6[%c0_27, %c0_28] : memref<8x32xf32, #tpu.memory_space<vmem>>, vector<8x32xf32>
    %cst_29 = arith.constant dense<0.000000e+00> : vector<8x32xf32>
    %29 = tpu.matmul %28, %25, %cst_29 {dimension_numbers = #tpu.dot_dimension_numbers<[1], [0], [0], [1], [0, 0, 1, 1], [], []>, precision = #tpu.contract_precision<fp32>} : vector<8x32xf32>, vector<32x32xf32>, vector<8x32xf32> -> vector<8x32xf32>
    %c0_30 = arith.constant 0 : index
    %c0_31 = arith.constant 0 : index
    %30 = vector.load %arg8[%c0_30, %c0_31] : memref<32x8xf32, #tpu.memory_space<vmem>>, vector<32x8xf32>
    %cst_32 = arith.constant dense<0.000000e+00> : vector<8x8xf32>
    %31 = tpu.matmul %27, %30, %cst_32 {dimension_numbers = #tpu.dot_dimension_numbers<[1], [0], [0], [1], [0, 0, 1, 1], [], []>, precision = #tpu.contract_precision<fp32>} : vector<8x32xf32>, vector<32x8xf32>, vector<8x8xf32> -> vector<8x8xf32>
    %c0_33 = arith.constant 0 : index
    %c0_34 = arith.constant 0 : index
    %32 = vector.load %arg9[%c0_33, %c0_34] : memref<32x8xf32, #tpu.memory_space<vmem>>, vector<32x8xf32>
    %cst_35 = arith.constant dense<0.000000e+00> : vector<8x8xf32>
    %33 = tpu.matmul %29, %32, %cst_35 {dimension_numbers = #tpu.dot_dimension_numbers<[1], [0], [0], [1], [0, 0, 1, 1], [], []>, precision = #tpu.contract_precision<fp32>} : vector<8x32xf32>, vector<32x8xf32>, vector<8x8xf32> -> vector<8x8xf32>
    %34 = arith.addf %31, %33 : vector<8x8xf32>
    %cst_36 = arith.constant 3.000000e+00 : f32
    %35 = vector.broadcast %cst_36 : f32 to vector<8x8xf32>
    %36 = arith.mulf %35, %34 : vector<8x8xf32>
    %c0_37 = arith.constant 0 : index
    %37 = memref.load %arg15[%c0_37] : memref<3xf32, #tpu.memory_space<smem>>
    %c1_38 = arith.constant 1 : index
    %38 = memref.load %arg15[%c1_38] : memref<3xf32, #tpu.memory_space<smem>>
    %39 = arith.addf %37, %38 : f32
    %c2_39 = arith.constant 2 : index
    %40 = memref.load %arg15[%c2_39] : memref<3xf32, #tpu.memory_space<smem>>
    %41 = arith.addf %39, %40 : f32
    %42 = vector.broadcast %41 : f32 to vector<8x8xf32>
    %43 = arith.addf %36, %42 : vector<8x8xf32>
    %c0_40 = arith.constant 0 : index
    %c0_41 = arith.constant 0 : index
    %44 = vector.load %arg11[%c0_40, %c0_41] : memref<1x8xf32, #tpu.memory_space<vmem>>, vector<1x8xf32>
    %cst_42 = arith.constant dense<0.000000e+00> : vector<1x8xf32>
    %45 = tpu.matmul %44, %43, %cst_42 {dimension_numbers = #tpu.dot_dimension_numbers<[1], [0], [0], [1], [0, 0, 1, 1], [], []>, precision = #tpu.contract_precision<fp32>} : vector<1x8xf32>, vector<8x8xf32>, vector<1x8xf32> -> vector<1x8xf32>
    %c0_43 = arith.constant 0 : index
    %c0_44 = arith.constant 0 : index
    %46 = vector.load %arg10[%c0_43, %c0_44] : memref<1x8xf32, #tpu.memory_space<vmem>>, vector<1x8xf32>
    %cst_45 = arith.constant dense<0.000000e+00> : vector<1x8xf32>
    %47 = tpu.matmul %46, %43, %cst_45 {dimension_numbers = #tpu.dot_dimension_numbers<[1], [0], [0], [1], [0, 0, 1, 1], [], []>, precision = #tpu.contract_precision<fp32>} : vector<1x8xf32>, vector<8x8xf32>, vector<1x8xf32> -> vector<1x8xf32>
    %c0_46 = arith.constant 0 : index
    %c0_47 = arith.constant 0 : index
    %48 = vector.load %arg12[%c0_46, %c0_47] : memref<8x1xf32, #tpu.memory_space<vmem>>, vector<8x1xf32>
    %cst_48 = arith.constant dense<0.000000e+00> : vector<1x1xf32>
    %49 = tpu.matmul %45, %48, %cst_48 {dimension_numbers = #tpu.dot_dimension_numbers<[1], [0], [0], [1], [0, 0, 1, 1], [], []>, precision = #tpu.contract_precision<fp32>} : vector<1x8xf32>, vector<8x1xf32>, vector<1x1xf32> -> vector<1x1xf32>
    %c0_49 = arith.constant 0 : index
    %c0_50 = arith.constant 0 : index
    %50 = vector.load %arg13[%c0_49, %c0_50] : memref<8x1xf32, #tpu.memory_space<vmem>>, vector<8x1xf32>
    %cst_51 = arith.constant dense<0.000000e+00> : vector<1x1xf32>
    %51 = tpu.matmul %47, %50, %cst_51 {dimension_numbers = #tpu.dot_dimension_numbers<[1], [0], [0], [1], [0, 0, 1, 1], [], []>, precision = #tpu.contract_precision<fp32>} : vector<1x8xf32>, vector<8x1xf32>, vector<1x1xf32> -> vector<1x1xf32>
    %52 = arith.addf %49, %51 : vector<1x1xf32>
    %c0_52 = arith.constant 0 : index
    %53 = memref.load %arg16[%c0_52] : memref<3xf32, #tpu.memory_space<smem>>
    %54 = vector.broadcast %53 : f32 to vector<1x1xf32>
    %55 = arith.addf %52, %54 : vector<1x1xf32>
    %c0_53 = arith.constant 0 : index
    %c0_54 = arith.constant 0 : index
    %c0_55 = arith.constant 0 : index
    %c0_56 = arith.constant 0 : index
    %56 = vector.load %arg17[%c0_53, %c0_54, %c0_55, %c0_56] : memref<1x3x1x1xf32, #tpu.memory_space<vmem>>, vector<1x1x1x1xf32>
    %57 = vector.shape_cast %56 : vector<1x1x1x1xf32> to vector<1x1xf32>
    %58 = vector.shape_cast %55 : vector<1x1xf32> to vector<1x1x1x1xf32>
    tpu.vector_store %arg17[%c0_53, %c0_54, %c0_55, %c0_56], %58 {strides = array<i32>} : memref<1x3x1x1xf32, #tpu.memory_space<vmem>>, vector<1x1x1x1xf32>,
    %c1_57 = arith.constant 1 : index
    %59 = memref.load %arg16[%c1_57] : memref<3xf32, #tpu.memory_space<smem>>
    %60 = vector.broadcast %59 : f32 to vector<1x1xf32>
    %61 = arith.addf %52, %60 : vector<1x1xf32>
    %c0_58 = arith.constant 0 : index
    %c1_59 = arith.constant 1 : index
    %c0_60 = arith.constant 0 : index
    %c0_61 = arith.constant 0 : index
    %62 = vector.load %arg17[%c0_58, %c1_59, %c0_60, %c0_61] : memref<1x3x1x1xf32, #tpu.memory_space<vmem>>, vector<1x1x1x1xf32>
    %63 = vector.shape_cast %62 : vector<1x1x1x1xf32> to vector<1x1xf32>
    %64 = vector.shape_cast %61 : vector<1x1xf32> to vector<1x1x1x1xf32>
    tpu.vector_store %arg17[%c0_58, %c1_59, %c0_60, %c0_61], %64 {strides = array<i32>} : memref<1x3x1x1xf32, #tpu.memory_space<vmem>>, vector<1x1x1x1xf32>,
    %c2_62 = arith.constant 2 : index
    %65 = memref.load %arg16[%c2_62] : memref<3xf32, #tpu.memory_space<smem>>
    %66 = vector.broadcast %65 : f32 to vector<1x1xf32>
    %67 = arith.addf %52, %66 : vector<1x1xf32>
    %c0_63 = arith.constant 0 : index
    %c2_64 = arith.constant 2 : index
    %c0_65 = arith.constant 0 : index
    %c0_66 = arith.constant 0 : index
    %68 = vector.load %arg17[%c0_63, %c2_64, %c0_65, %c0_66] : memref<1x3x1x1xf32, #tpu.memory_space<vmem>>, vector<1x1x1x1xf32>
    %69 = vector.shape_cast %68 : vector<1x1x1x1xf32> to vector<1x1xf32>
    %70 = vector.shape_cast %67 : vector<1x1xf32> to vector<1x1x1x1xf32>
    tpu.vector_store %arg17[%c0_63, %c2_64, %c0_65, %c0_66], %70 {strides = array<i32>} : memref<1x3x1x1xf32, #tpu.memory_space<vmem>>, vector<1x1x1x1xf32>,
    return
  }
  func.func @transform_0(%arg0: i32) -> (i32, i32, i32, i32) {
    %c0_i32 = arith.constant 0 : i32
    %c0_i32_0 = arith.constant 0 : i32
    %c0_i32_1 = arith.constant 0 : i32
    %c0_i32_2 = arith.constant 0 : i32
    return %arg0, %c0_i32, %c0_i32_0, %c0_i32_1 : i32, i32, i32, i32
  }
  func.func @transform_1(%arg0: i32) -> (i32, i32) {
    %c0_i32 = arith.constant 0 : i32
    %c0_i32_0 = arith.constant 0 : i32
    %c0_i32_1 = arith.constant 0 : i32
    return %c0_i32, %c0_i32_0 : i32, i32
  }
  func.func @transform_2(%arg0: i32) -> (i32, i32) {
    %c0_i32 = arith.constant 0 : i32
    %c0_i32_0 = arith.constant 0 : i32
    %c0_i32_1 = arith.constant 0 : i32
    return %c0_i32, %c0_i32_0 : i32, i32
  }
  func.func @transform_3(%arg0: i32) -> (i32, i32) {
    %c0_i32 = arith.constant 0 : i32
    %c0_i32_0 = arith.constant 0 : i32
    %c0_i32_1 = arith.constant 0 : i32
    return %c0_i32, %c0_i32_0 : i32, i32
  }
  func.func @transform_4(%arg0: i32) -> (i32, i32) {
    %c0_i32 = arith.constant 0 : i32
    %c0_i32_0 = arith.constant 0 : i32
    %c0_i32_1 = arith.constant 0 : i32
    return %c0_i32, %c0_i32_0 : i32, i32
  }
  func.func @transform_5(%arg0: i32) -> (i32, i32) {
    %c0_i32 = arith.constant 0 : i32
    %c0_i32_0 = arith.constant 0 : i32
    %c0_i32_1 = arith.constant 0 : i32
    return %c0_i32, %c0_i32_0 : i32, i32
  }
  func.func @transform_6(%arg0: i32) -> (i32, i32) {
    %c0_i32 = arith.constant 0 : i32
    %c0_i32_0 = arith.constant 0 : i32
    %c0_i32_1 = arith.constant 0 : i32
    return %c0_i32, %c0_i32_0 : i32, i32
  }
  func.func @transform_7(%arg0: i32) -> (i32, i32) {
    %c0_i32 = arith.constant 0 : i32
    %c0_i32_0 = arith.constant 0 : i32
    %c0_i32_1 = arith.constant 0 : i32
    return %c0_i32, %c0_i32_0 : i32, i32
  }
  func.func @transform_8(%arg0: i32) -> (i32, i32) {
    %c0_i32 = arith.constant 0 : i32
    %c0_i32_0 = arith.constant 0 : i32
    %c0_i32_1 = arith.constant 0 : i32
    return %c0_i32, %c0_i32_0 : i32, i32
  }
  func.func @transform_9(%arg0: i32) -> (i32, i32) {
    %c0_i32 = arith.constant 0 : i32
    %c0_i32_0 = arith.constant 0 : i32
    %c0_i32_1 = arith.constant 0 : i32
    return %c0_i32, %c0_i32_0 : i32, i32
  }
  func.func @transform_10(%arg0: i32) -> (i32, i32) {
    %c0_i32 = arith.constant 0 : i32
    %c0_i32_0 = arith.constant 0 : i32
    %c0_i32_1 = arith.constant 0 : i32
    return %c0_i32, %c0_i32_0 : i32, i32
  }
  func.func @transform_11(%arg0: i32) -> (i32, i32) {
    %c0_i32 = arith.constant 0 : i32
    %c0_i32_0 = arith.constant 0 : i32
    %c0_i32_1 = arith.constant 0 : i32
    return %c0_i32, %c0_i32_0 : i32, i32
  }
  func.func @transform_12(%arg0: i32) -> (i32, i32) {
    %c0_i32 = arith.constant 0 : i32
    %c0_i32_0 = arith.constant 0 : i32
    %c0_i32_1 = arith.constant 0 : i32
    return %c0_i32, %c0_i32_0 : i32, i32
  }
  func.func @transform_13(%arg0: i32) -> i32 {
    %c0_i32 = arith.constant 0 : i32
    %c0_i32_0 = arith.constant 0 : i32
    return %c0_i32 : i32
  }
  func.func @transform_14(%arg0: i32) -> i32 {
    %c0_i32 = arith.constant 0 : i32
    %c0_i32_0 = arith.constant 0 : i32
    return %c0_i32 : i32
  }
  func.func @transform_15(%arg0: i32) -> i32 {
    %c0_i32 = arith.constant 0 : i32
    %c0_i32_0 = arith.constant 0 : i32
    return %c0_i32 : i32
  }
  func.func @transform_16(%arg0: i32) -> (i32, i32, i32, i32) {
    %c0_i32 = arith.constant 0 : i32
    %c0_i32_0 = arith.constant 0 : i32
    %c0_i32_1 = arith.constant 0 : i32
    %c0_i32_2 = arith.constant 0 : i32
    return %arg0, %c0_i32, %c0_i32_0, %c0_i32_1 : i32, i32, i32, i32
  }
}

</mosaic_0001>

<llo_original>
// kernel: tpu_custom_call.1
$region0: #{tpu_custom_call.1}
  #allocation0 [shape = 'u32[]', space=smem, size = 0x4, offset = 0x4, fixed_abs, tag = 'smem constant byte address 0x4 - core index']
  #allocation1 [shape = 'u32[72,128]{1,0:T(1,128)}', space=vmem, size = 0x9000, scoped, tag = 'internal scratch']
  %s0 = inlined_call_operand.hbm [shape: f32[2,3,64,64], index: 0, kind: input, shape index: {}]
  %s1 = inlined_call_operand.vmem [shape: f32[32,64], index: 1, kind: input, shape index: {}]
  %s2 = inlined_call_operand.vmem [shape: f32[32,64], index: 2, kind: input, shape index: {}]
  %s3 = inlined_call_operand.vmem [shape: f32[64,32], index: 3, kind: input, shape index: {}]
  %s4 = inlined_call_operand.vmem [shape: f32[64,32], index: 4, kind: input, shape index: {}]
  %s5 = inlined_call_operand.vmem [shape: f32[8,32], index: 5, kind: input, shape index: {}]
  %s6 = inlined_call_operand.vmem [shape: f32[8,32], index: 6, kind: input, shape index: {}]
  %s7 = inlined_call_operand.vmem [shape: f32[32,8], index: 7, kind: input, shape index: {}]
  %s8 = inlined_call_operand.vmem [shape: f32[32,8], index: 8, kind: input, shape index: {}]
  %s9 = inlined_call_operand.vmem [shape: f32[1,8], index: 9, kind: input, shape index: {}]
  %s10 = inlined_call_operand.vmem [shape: f32[1,8], index: 10, kind: input, shape index: {}]
  %s11 = inlined_call_operand.vmem [shape: f32[8,1], index: 11, kind: input, shape index: {}]
  %s12 = inlined_call_operand.vmem [shape: f32[8,1], index: 12, kind: input, shape index: {}]
  %s13 = inlined_call_operand.vmem [shape: f32[3], index: 13, kind: input, shape index: {}]
  %s14 = inlined_call_operand.vmem [shape: f32[3], index: 14, kind: input, shape index: {}]
  %s15 = inlined_call_operand.vmem [shape: f32[3], index: 15, kind: input, shape index: {}]
  %s16 = inlined_call_operand.vmem [shape: f32[2,3,1,1], index: 16, kind: output, shape index: {}]
  %s17 = sld [smem:[#allocation0]]
  $region113: #{tpu_custom_call.1} parent=0
    _
  %s19 = ssub.s32 1, %s17
  %s20 = scalar_select 0, %s19, %s17
  $region1: #{tpu_custom_call.1} parent=0
    #allocation2 [shape = 'u8[196608]{0}', space=vmem, size = 0x30000, scoped, tag = 'input window, operand 0']
    #allocation3 [shape = 's32[2]{0}', space=sflag, size = 0x8, scoped, tag = 'scoped memory for tpu_custom_call.1']
    #allocation4 [shape = 's32[2]{0}', space=sflag, size = 0x8, scoped, tag = 'scoped memory for tpu_custom_call.1']
    #allocation5 [shape = 'u8[512]{0}', space=smem, size = 0x200, scoped, tag = 'input window, operand 13, single buffered']
    #allocation6 [shape = 'u8[512]{0}', space=smem, size = 0x200, scoped, tag = 'input window, operand 14, single buffered']
    #allocation7 [shape = 's32[1]{0}', space=sflag, size = 0x4, scoped, tag = 'scoped memory for tpu_custom_call.1']
    #allocation8 [shape = 'u8[512]{0}', space=smem, size = 0x200, scoped, tag = 'input window, operand 15, single buffered']
    %21 = vsyncpa [#allocation3], 0
    %s22 = scalar_lea.sflag [#allocation3], 1
    %23 = vsyncpa %s22, 0
    %24 = vsyncpa [#allocation4], 0
    %25 = vsyncpa [#allocation7], 0
    loop: start=0, step=1, limit=4
    $region2: #{tpu_custom_call.1} parent=1 // loop_pre_header
      _
    $region3: #{tpu_custom_call.1} parent=1 // loop_header
      %s27 = sphi 0, %s31
      %p28 = scmp.ge.s32.totalorder %s27, 4
      %s37 = sphi 0, %s39
      %s40 = sphi 0, %s37
      %s41 = sphi 0, %s40
      %s57 = sphi 0, %s41
      %s61 = sphi 0, %s61
      %s63 = sphi 0, %s61
      %s64 = sphi 0, %s63
      %s78 = sphi 0, %s64
      %s82 = sphi 0, %s82
      %s84 = sphi 0, %s82
      %s85 = sphi 0, %s84
      %s99 = sphi 0, %s85
      %s103 = sphi 0, %s103
      %s105 = sphi 0, %s103
      %s106 = sphi 0, %s105
      %s120 = sphi 0, %s106
      %s124 = sphi 0, %s124
      %s126 = sphi 0, %s124
      %s127 = sphi 0, %s126
      %s141 = sphi 0, %s127
      %s145 = sphi 0, %s145
      %s147 = sphi 0, %s145
      %s148 = sphi 0, %s147
      %s162 = sphi 0, %s148
      %s166 = sphi 0, %s166
      %s168 = sphi 0, %s166
      %s169 = sphi 0, %s168
      %s183 = sphi 0, %s169
      %s187 = sphi 0, %s187
      %s189 = sphi 0, %s187
      %s190 = sphi 0, %s189
      %s204 = sphi 0, %s190
      %s208 = sphi 0, %s208
      %s210 = sphi 0, %s208
      %s211 = sphi 0, %s210
      %s225 = sphi 0, %s211
      %s229 = sphi 0, %s229
      %s231 = sphi 0, %s229
      %s232 = sphi 0, %s231
      %s246 = sphi 0, %s232
      %s250 = sphi 0, %s250
      %s252 = sphi 0, %s250
      %s253 = sphi 0, %s252
      %s267 = sphi 0, %s253
      %s271 = sphi 0, %s271
      %s273 = sphi 0, %s271
      %s274 = sphi 0, %s273
      %s288 = sphi 0, %s274
      %s292 = sphi 0, %s292
      %s294 = sphi 0, %s292
      %s295 = sphi 0, %s294
      %s309 = sphi 0, %s295
      %s313 = sphi 0, %s313
      %s315 = sphi 0, %s313
      %s316 = sphi 0, %s315
      %s330 = sphi 0, %s316
      %s334 = sphi 0, %s334
      %s336 = sphi 0, %s334
      %s337 = sphi 0, %s336
      %s351 = sphi 0, %s337
      %s355 = sphi 0, %s355
      %s357 = sphi 0, %s355
      %s358 = sphi 0, %s357
      %s372 = sphi 0, %s358
      %s378 = sphi 0, %s380
      %s381 = sphi 0, %s378
      %s382 = sphi 0, %s381
      %s398 = sphi 0, %s382
    $region4: #{tpu_custom_call.1} parent=1 // loop_header_branch
      %30 = sbr.rel (%p28) target = $region8
    $region5: #{tpu_custom_call.1} parent=1 // loop_body
      %s32 = ssub.s32 %s27, 1
      %s33 = ssub.s32 %s27, 2
      %s34 = sadd.s32 %s27, 1
      %s35 = ssub.s32 %s27, %s34
      %p36 = scmp.eq.s32.totalorder %s35, 0
      %s38 = sadd.s32 %s37, 1
      %s39 = scalar_select %p36, %s37, %s38
      %p42 = pneg %p36
      %p43 = scmp.eq.s32.totalorder %s27, 1
      %p44 = por %p42, %p43
      %p45 = scmp.ne.s32.totalorder %s37, %s40
      %p46 = scmp.eq.s32.totalorder %s27, 0
      %p47 = por %p45, %p46
      %p48 = scmp.ne.s32.totalorder %s37, %s40
      %p49 = scmp.eq.s32.totalorder %s32, 1
      %p50 = por %p48, %p49
      %p51 = scmp.ne.s32.totalorder %s40, %s41
      %p52 = scmp.eq.s32.totalorder %s32, 0
      %p53 = por %p51, %p52
      %p54 = scmp.ne.s32.totalorder %s40, %s41
      %p55 = scmp.eq.s32.totalorder %s33, 1
      %p56 = por %p54, %p55
      %p58 = scmp.ne.s32.totalorder %s41, %s57
      %p59 = scmp.eq.s32.totalorder %s33, 0
      %p60 = por %p58, %p59
      %s62 = sadd.s32 %s61, 1
      %p65 = scmp.eq.s32.totalorder %s27, 1
      %p66 = scmp.ne.s32.totalorder %s61, %s63
      %p67 = scmp.eq.s32.totalorder %s27, 0
      %p68 = por %p66, %p67
      %p69 = scmp.ne.s32.totalorder %s61, %s63
      %p70 = scmp.eq.s32.totalorder %s32, 1
      %p71 = por %p69, %p70
      %p72 = scmp.ne.s32.totalorder %s63, %s64
      %p73 = scmp.eq.s32.totalorder %s32, 0
      %p74 = por %p72, %p73
      %p75 = scmp.ne.s32.totalorder %s63, %s64
      %p76 = scmp.eq.s32.totalorder %s33, 1
      %p77 = por %p75, %p76
      %p79 = scmp.ne.s32.totalorder %s64, %s78
      %p80 = scmp.eq.s32.totalorder %s33, 0
      %p81 = por %p79, %p80
      %s83 = sadd.s32 %s82, 1
      %p86 = scmp.eq.s32.totalorder %s27, 1
      %p87 = scmp.ne.s32.totalorder %s82, %s84
      %p88 = scmp.eq.s32.totalorder %s27, 0
      %p89 = por %p87, %p88
      %p90 = scmp.ne.s32.totalorder %s82, %s84
      %p91 = scmp.eq.s32.totalorder %s32, 1
      %p92 = por %p90, %p91
      %p93 = scmp.ne.s32.totalorder %s84, %s85
      %p94 = scmp.eq.s32.totalorder %s32, 0
      %p95 = por %p93, %p94
      %p96 = scmp.ne.s32.totalorder %s84, %s85
      %p97 = scmp.eq.s32.totalorder %s33, 1
      %p98 = por %p96, %p97
      %p100 = scmp.ne.s32.totalorder %s85, %s99
      %p101 = scmp.eq.s32.totalorder %s33, 0
      %p102 = por %p100, %p101
      %s104 = sadd.s32 %s103, 1
      %p107 = scmp.eq.s32.totalorder %s27, 1
      %p108 = scmp.ne.s32.totalorder %s103, %s105
      %p109 = scmp.eq.s32.totalorder %s27, 0
      %p110 = por %p108, %p109
      %p111 = scmp.ne.s32.totalorder %s103, %s105
      %p112 = scmp.eq.s32.totalorder %s32, 1
      %p113 = por %p111, %p112
      %p114 = scmp.ne.s32.totalorder %s105, %s106
      %p115 = scmp.eq.s32.totalorder %s32, 0
      %p116 = por %p114, %p115
      %p117 = scmp.ne.s32.totalorder %s105, %s106
      %p118 = scmp.eq.s32.totalorder %s33, 1
      %p119 = por %p117, %p118
      %p121 = scmp.ne.s32.totalorder %s106, %s120
      %p122 = scmp.eq.s32.totalorder %s33, 0
      %p123 = por %p121, %p122
      %s125 = sadd.s32 %s124, 1
      %p128 = scmp.eq.s32.totalorder %s27, 1
      %p129 = scmp.ne.s32.totalorder %s124, %s126
      %p130 = scmp.eq.s32.totalorder %s27, 0
      %p131 = por %p129, %p130
      %p132 = scmp.ne.s32.totalorder %s124, %s126
      %p133 = scmp.eq.s32.totalorder %s32, 1
      %p134 = por %p132, %p133
      %p135 = scmp.ne.s32.totalorder %s126, %s127
      %p136 = scmp.eq.s32.totalorder %s32, 0
      %p137 = por %p135, %p136
      %p138 = scmp.ne.s32.totalorder %s126, %s127
      %p139 = scmp.eq.s32.totalorder %s33, 1
      %p140 = por %p138, %p139
      %p142 = scmp.ne.s32.totalorder %s127, %s141
      %p143 = scmp.eq.s32.totalorder %s33, 0
      %p144 = por %p142, %p143
      %s146 = sadd.s32 %s145, 1
      %p149 = scmp.eq.s32.totalorder %s27, 1
      %p150 = scmp.ne.s32.totalorder %s145, %s147
      %p151 = scmp.eq.s32.totalorder %s27, 0
      %p152 = por %p150, %p151
      %p153 = scmp.ne.s32.totalorder %s145, %s147
      %p154 = scmp.eq.s32.totalorder %s32, 1
      %p155 = por %p153, %p154
      %p156 = scmp.ne.s32.totalorder %s147, %s148
      %p157 = scmp.eq.s32.totalorder %s32, 0
      %p158 = por %p156, %p157
      %p159 = scmp.ne.s32.totalorder %s147, %s148
      %p160 = scmp.eq.s32.totalorder %s33, 1
      %p161 = por %p159, %p160
      %p163 = scmp.ne.s32.totalorder %s148, %s162
      %p164 = scmp.eq.s32.totalorder %s33, 0
      %p165 = por %p163, %p164
      %s167 = sadd.s32 %s166, 1
      %p170 = scmp.eq.s32.totalorder %s27, 1
      %p171 = scmp.ne.s32.totalorder %s166, %s168
      %p172 = scmp.eq.s32.totalorder %s27, 0
      %p173 = por %p171, %p172
      %p174 = scmp.ne.s32.totalorder %s166, %s168
      %p175 = scmp.eq.s32.totalorder %s32, 1
      %p176 = por %p174, %p175
      %p177 = scmp.ne.s32.totalorder %s168, %s169
      %p178 = scmp.eq.s32.totalorder %s32, 0
      %p179 = por %p177, %p178
      %p180 = scmp.ne.s32.totalorder %s168, %s169
      %p181 = scmp.eq.s32.totalorder %s33, 1
      %p182 = por %p180, %p181
      %p184 = scmp.ne.s32.totalorder %s169, %s183
      %p185 = scmp.eq.s32.totalorder %s33, 0
      %p186 = por %p184, %p185
      %s188 = sadd.s32 %s187, 1
      %p191 = scmp.eq.s32.totalorder %s27, 1
      %p192 = scmp.ne.s32.totalorder %s187, %s189
      %p193 = scmp.eq.s32.totalorder %s27, 0
      %p194 = por %p192, %p193
      %p195 = scmp.ne.s32.totalorder %s187, %s189
      %p196 = scmp.eq.s32.totalorder %s32, 1
      %p197 = por %p195, %p196
      %p198 = scmp.ne.s32.totalorder %s189, %s190
      %p199 = scmp.eq.s32.totalorder %s32, 0
      %p200 = por %p198, %p199
      %p201 = scmp.ne.s32.totalorder %s189, %s190
      %p202 = scmp.eq.s32.totalorder %s33, 1
      %p203 = por %p201, %p202
      %p205 = scmp.ne.s32.totalorder %s190, %s204
      %p206 = scmp.eq.s32.totalorder %s33, 0
      %p207 = por %p205, %p206
      %s209 = sadd.s32 %s208, 1
      %p212 = scmp.eq.s32.totalorder %s27, 1
      %p213 = scmp.ne.s32.totalorder %s208, %s210
      %p214 = scmp.eq.s32.totalorder %s27, 0
      %p215 = por %p213, %p214
      %p216 = scmp.ne.s32.totalorder %s208, %s210
      %p217 = scmp.eq.s32.totalorder %s32, 1
      %p218 = por %p216, %p217
      %p219 = scmp.ne.s32.totalorder %s210, %s211
      %p220 = scmp.eq.s32.totalorder %s32, 0
      %p221 = por %p219, %p220
      %p222 = scmp.ne.s32.totalorder %s210, %s211
      %p223 = scmp.eq.s32.totalorder %s33, 1
      %p224 = por %p222, %p223
      %p226 = scmp.ne.s32.totalorder %s211, %s225
      %p227 = scmp.eq.s32.totalorder %s33, 0
      %p228 = por %p226, %p227
      %s230 = sadd.s32 %s229, 1
      %p233 = scmp.eq.s32.totalorder %s27, 1
      %p234 = scmp.ne.s32.totalorder %s229, %s231
      %p235 = scmp.eq.s32.totalorder %s27, 0
      %p236 = por %p234, %p235
      %p237 = scmp.ne.s32.totalorder %s229, %s231
      %p238 = scmp.eq.s32.totalorder %s32, 1
      %p239 = por %p237, %p238
      %p240 = scmp.ne.s32.totalorder %s231, %s232
      %p241 = scmp.eq.s32.totalorder %s32, 0
      %p242 = por %p240, %p241
      %p243 = scmp.ne.s32.totalorder %s231, %s232
      %p244 = scmp.eq.s32.totalorder %s33, 1
      %p245 = por %p243, %p244
      %p247 = scmp.ne.s32.totalorder %s232, %s246
      %p248 = scmp.eq.s32.totalorder %s33, 0
      %p249 = por %p247, %p248
      %s251 = sadd.s32 %s250, 1
      %p254 = scmp.eq.s32.totalorder %s27, 1
      %p255 = scmp.ne.s32.totalorder %s250, %s252
      %p256 = scmp.eq.s32.totalorder %s27, 0
      %p257 = por %p255, %p256
      %p258 = scmp.ne.s32.totalorder %s250, %s252
      %p259 = scmp.eq.s32.totalorder %s32, 1
      %p260 = por %p258, %p259
      %p261 = scmp.ne.s32.totalorder %s252, %s253
      %p262 = scmp.eq.s32.totalorder %s32, 0
      %p263 = por %p261, %p262
      %p264 = scmp.ne.s32.totalorder %s252, %s253
      %p265 = scmp.eq.s32.totalorder %s33, 1
      %p266 = por %p264, %p265
      %p268 = scmp.ne.s32.totalorder %s253, %s267
      %p269 = scmp.eq.s32.totalorder %s33, 0
      %p270 = por %p268, %p269
      %s272 = sadd.s32 %s271, 1
      %p275 = scmp.eq.s32.totalorder %s27, 1
      %p276 = scmp.ne.s32.totalorder %s271, %s273
      %p277 = scmp.eq.s32.totalorder %s27, 0
      %p278 = por %p276, %p277
      %p279 = scmp.ne.s32.totalorder %s271, %s273
      %p280 = scmp.eq.s32.totalorder %s32, 1
      %p281 = por %p279, %p280
      %p282 = scmp.ne.s32.totalorder %s273, %s274
      %p283 = scmp.eq.s32.totalorder %s32, 0
      %p284 = por %p282, %p283
      %p285 = scmp.ne.s32.totalorder %s273, %s274
      %p286 = scmp.eq.s32.totalorder %s33, 1
      %p287 = por %p285, %p286
      %p289 = scmp.ne.s32.totalorder %s274, %s288
      %p290 = scmp.eq.s32.totalorder %s33, 0
      %p291 = por %p289, %p290
      %s293 = sadd.s32 %s292, 1
      %p296 = scmp.eq.s32.totalorder %s27, 1
      %p297 = scmp.ne.s32.totalorder %s292, %s294
      %p298 = scmp.eq.s32.totalorder %s27, 0
      %p299 = por %p297, %p298
      %p300 = scmp.ne.s32.totalorder %s292, %s294
      %p301 = scmp.eq.s32.totalorder %s32, 1
      %p302 = por %p300, %p301
      %p303 = scmp.ne.s32.totalorder %s294, %s295
      %p304 = scmp.eq.s32.totalorder %s32, 0
      %p305 = por %p303, %p304
      %p306 = scmp.ne.s32.totalorder %s294, %s295
      %p307 = scmp.eq.s32.totalorder %s33, 1
      %p308 = por %p306, %p307
      %p310 = scmp.ne.s32.totalorder %s295, %s309
      %p311 = scmp.eq.s32.totalorder %s33, 0
      %p312 = por %p310, %p311
      %s314 = sadd.s32 %s313, 1
      %p317 = scmp.eq.s32.totalorder %s27, 1
      %p318 = scmp.ne.s32.totalorder %s313, %s315
      %p319 = scmp.eq.s32.totalorder %s27, 0
      %p320 = por %p318, %p319
      %p321 = scmp.ne.s32.totalorder %s313, %s315
      %p322 = scmp.eq.s32.totalorder %s32, 1
      %p323 = por %p321, %p322
      %p324 = scmp.ne.s32.totalorder %s315, %s316
      %p325 = scmp.eq.s32.totalorder %s32, 0
      %p326 = por %p324, %p325
      %p327 = scmp.ne.s32.totalorder %s315, %s316
      %p328 = scmp.eq.s32.totalorder %s33, 1
      %p329 = por %p327, %p328
      %p331 = scmp.ne.s32.totalorder %s316, %s330
      %p332 = scmp.eq.s32.totalorder %s33, 0
      %p333 = por %p331, %p332
      %s335 = sadd.s32 %s334, 1
      %p338 = scmp.eq.s32.totalorder %s27, 1
      %p339 = scmp.ne.s32.totalorder %s334, %s336
      %p340 = scmp.eq.s32.totalorder %s27, 0
      %p341 = por %p339, %p340
      %p342 = scmp.ne.s32.totalorder %s334, %s336
      %p343 = scmp.eq.s32.totalorder %s32, 1
      %p344 = por %p342, %p343
      %p345 = scmp.ne.s32.totalorder %s336, %s337
      %p346 = scmp.eq.s32.totalorder %s32, 0
      %p347 = por %p345, %p346
      %p348 = scmp.ne.s32.totalorder %s336, %s337
      %p349 = scmp.eq.s32.totalorder %s33, 1
      %p350 = por %p348, %p349
      %p352 = scmp.ne.s32.totalorder %s337, %s351
      %p353 = scmp.eq.s32.totalorder %s33, 0
      %p354 = por %p352, %p353
      %s356 = sadd.s32 %s355, 1
      %p359 = scmp.eq.s32.totalorder %s27, 1
      %p360 = scmp.ne.s32.totalorder %s355, %s357
      %p361 = scmp.eq.s32.totalorder %s27, 0
      %p362 = por %p360, %p361
      %p363 = scmp.ne.s32.totalorder %s355, %s357
      %p364 = scmp.eq.s32.totalorder %s32, 1
      %p365 = por %p363, %p364
      %p366 = scmp.ne.s32.totalorder %s357, %s358
      %p367 = scmp.eq.s32.totalorder %s32, 0
      %p368 = por %p366, %p367
      %p369 = scmp.ne.s32.totalorder %s357, %s358
      %p370 = scmp.eq.s32.totalorder %s33, 1
      %p371 = por %p369, %p370
      %p373 = scmp.ne.s32.totalorder %s358, %s372
      %p374 = scmp.eq.s32.totalorder %s33, 0
      %p375 = por %p373, %p374
      %s376 = ssub.s32 %s27, %s34
      %p377 = scmp.eq.s32.totalorder %s376, 0
      %s379 = sadd.s32 %s378, 1
      %s380 = scalar_select %p377, %s378, %s379
      %p383 = pneg %p377
      %p384 = scmp.eq.s32.totalorder %s27, 1
      %p385 = por %p383, %p384
      %p386 = scmp.ne.s32.totalorder %s378, %s381
      %p387 = scmp.eq.s32.totalorder %s27, 0
      %p388 = por %p386, %p387
      %p389 = scmp.ne.s32.totalorder %s378, %s381
      %p390 = scmp.eq.s32.totalorder %s32, 1
      %p391 = por %p389, %p390
      %p392 = scmp.ne.s32.totalorder %s381, %s382
      %p393 = scmp.eq.s32.totalorder %s32, 0
      %p394 = por %p392, %p393
      %p395 = scmp.ne.s32.totalorder %s381, %s382
      %p396 = scmp.eq.s32.totalorder %s33, 1
      %p397 = por %p395, %p396
      %p399 = scmp.ne.s32.totalorder %s382, %s398
      %p400 = scmp.eq.s32.totalorder %s33, 0
      %p401 = por %p399, %p400
      %p402 = scmp.le.s32.totalorder 1, %s27
      %p403 = scmp.lt.s32.totalorder %s27, 3
      %p404 = pnand %p402, %p403
      %p405 = pneg %p404
      // Predicated region
      $region9: #{tpu_custom_call.1} parent=5 // pred_check
        _
      $region10: #{tpu_custom_call.1} parent=5 // pred_check_branch
        %407 = sbr.rel (%p404) target = $region12
      $region11: #{tpu_custom_call.1} parent=5 // pred_region
        %s408 = ssub.s32 %s27, 1
        // Predicated region
        $region13: #{tpu_custom_call.1} parent=11 // pred_check
          %p409 = pneg %p74
        $region14: #{tpu_custom_call.1} parent=11 // pred_check_branch
          %411 = sbr.rel (%p409) target = $region16
        $region15: #{tpu_custom_call.1} parent=11 // pred_region
          _
        $region16: #{tpu_custom_call.1} parent=11 // pred_fallthru
          _
        // Predicated region
        $region17: #{tpu_custom_call.1} parent=11 // pred_check
          %p412 = pneg %p95
        $region18: #{tpu_custom_call.1} parent=11 // pred_check_branch
          %414 = sbr.rel (%p412) target = $region20
        $region19: #{tpu_custom_call.1} parent=11 // pred_region
          _
        $region20: #{tpu_custom_call.1} parent=11 // pred_fallthru
          _
        // Predicated region
        $region21: #{tpu_custom_call.1} parent=11 // pred_check
          %p415 = pneg %p116
        $region22: #{tpu_custom_call.1} parent=11 // pred_check_branch
          %417 = sbr.rel (%p415) target = $region24
        $region23: #{tpu_custom_call.1} parent=11 // pred_region
          _
        $region24: #{tpu_custom_call.1} parent=11 // pred_fallthru
          _
        // Predicated region
        $region25: #{tpu_custom_call.1} parent=11 // pred_check
          %p418 = pneg %p137
        $region26: #{tpu_custom_call.1} parent=11 // pred_check_branch
          %420 = sbr.rel (%p418) target = $region28
        $region27: #{tpu_custom_call.1} parent=11 // pred_region
          _
        $region28: #{tpu_custom_call.1} parent=11 // pred_fallthru
          _
        // Predicated region
        $region29: #{tpu_custom_call.1} parent=11 // pred_check
          %p421 = pneg %p158
        $region30: #{tpu_custom_call.1} parent=11 // pred_check_branch
          %423 = sbr.rel (%p421) target = $region32
        $region31: #{tpu_custom_call.1} parent=11 // pred_region
          _
        $region32: #{tpu_custom_call.1} parent=11 // pred_fallthru
          _
        // Predicated region
        $region33: #{tpu_custom_call.1} parent=11 // pred_check
          %p424 = pneg %p179
        $region34: #{tpu_custom_call.1} parent=11 // pred_check_branch
          %426 = sbr.rel (%p424) target = $region36
        $region35: #{tpu_custom_call.1} parent=11 // pred_region
          _
        $region36: #{tpu_custom_call.1} parent=11 // pred_fallthru
          _
        // Predicated region
        $region37: #{tpu_custom_call.1} parent=11 // pred_check
          %p427 = pneg %p200
        $region38: #{tpu_custom_call.1} parent=11 // pred_check_branch
          %429 = sbr.rel (%p427) target = $region40
        $region39: #{tpu_custom_call.1} parent=11 // pred_region
          _
        $region40: #{tpu_custom_call.1} parent=11 // pred_fallthru
          _
        // Predicated region
        $region41: #{tpu_custom_call.1} parent=11 // pred_check
          %p430 = pneg %p221
        $region42: #{tpu_custom_call.1} parent=11 // pred_check_branch
          %432 = sbr.rel (%p430) target = $region44
        $region43: #{tpu_custom_call.1} parent=11 // pred_region
          _
        $region44: #{tpu_custom_call.1} parent=11 // pred_fallthru
          _
        // Predicated region
        $region45: #{tpu_custom_call.1} parent=11 // pred_check
          %p433 = pneg %p242
        $region46: #{tpu_custom_call.1} parent=11 // pred_check_branch
          %435 = sbr.rel (%p433) target = $region48
        $region47: #{tpu_custom_call.1} parent=11 // pred_region
          _
        $region48: #{tpu_custom_call.1} parent=11 // pred_fallthru
          _
        // Predicated region
        $region49: #{tpu_custom_call.1} parent=11 // pred_check
          %p436 = pneg %p263
        $region50: #{tpu_custom_call.1} parent=11 // pred_check_branch
          %438 = sbr.rel (%p436) target = $region52
        $region51: #{tpu_custom_call.1} parent=11 // pred_region
          _
        $region52: #{tpu_custom_call.1} parent=11 // pred_fallthru
          _
        // Predicated region
        $region53: #{tpu_custom_call.1} parent=11 // pred_check
          %p439 = pneg %p284
        $region54: #{tpu_custom_call.1} parent=11 // pred_check_branch
          %441 = sbr.rel (%p439) target = $region56
        $region55: #{tpu_custom_call.1} parent=11 // pred_region
          _
        $region56: #{tpu_custom_call.1} parent=11 // pred_fallthru
          _
        // Predicated region
        $region57: #{tpu_custom_call.1} parent=11 // pred_check
          %p442 = pneg %p305
        $region58: #{tpu_custom_call.1} parent=11 // pred_check_branch
          %444 = sbr.rel (%p442) target = $region60
        $region59: #{tpu_custom_call.1} parent=11 // pred_region
          _
        $region60: #{tpu_custom_call.1} parent=11 // pred_fallthru
          _
        // Predicated region
        $region61: #{tpu_custom_call.1} parent=11 // pred_check
          %p445 = pneg %p326
        $region62: #{tpu_custom_call.1} parent=11 // pred_check_branch
          %447 = sbr.rel (%p445) target = $region64
        $region63: #{tpu_custom_call.1} parent=11 // pred_region
          %449 = vsyncadd [#allocation4], 0
          %s451 = sshll.u32 %s13, 4
          %s452 = int_to_ptr.vmem [resolvable:$true] %s451
          %454 = dma.vmem_to_smem %s452, 16, [#allocation5], [#allocation4]
        $region64: #{tpu_custom_call.1} parent=11 // pred_fallthru
          _
        // Predicated region
        $region65: #{tpu_custom_call.1} parent=11 // pred_check
          %p455 = pneg %p347
        $region66: #{tpu_custom_call.1} parent=11 // pred_check_branch
          %457 = sbr.rel (%p455) target = $region68
        $region67: #{tpu_custom_call.1} parent=11 // pred_region
          %459 = vsyncadd [#allocation7], 0
          %s461 = sshll.u32 %s14, 4
          %s462 = int_to_ptr.vmem [resolvable:$true] %s461
          %464 = dma.vmem_to_smem %s462, 16, [#allocation6], [#allocation7]
        $region68: #{tpu_custom_call.1} parent=11 // pred_fallthru
          _
        // Predicated region
        $region69: #{tpu_custom_call.1} parent=11 // pred_check
          %p465 = pneg %p368
        $region70: #{tpu_custom_call.1} parent=11 // pred_check_branch
          %467 = sbr.rel (%p465) target = $region72
        $region71: #{tpu_custom_call.1} parent=11 // pred_region
          %469 = vsyncadd [#allocation7], 0
          %s471 = sshll.u32 %s15, 4
          %s472 = int_to_ptr.vmem [resolvable:$true] %s471
          %474 = dma.vmem_to_smem %s472, 16, [#allocation8], [#allocation7]
        $region72: #{tpu_custom_call.1} parent=11 // pred_fallthru
          _
      $region12: #{tpu_custom_call.1} parent=5 // pred_fallthru
        _
      %p475 = scmp.lt.s32.totalorder %s27, 2
      // Predicated region
      $region73: #{tpu_custom_call.1} parent=5 // pred_check
        %p476 = pneg %p475
      $region74: #{tpu_custom_call.1} parent=5 // pred_check_branch
        %478 = sbr.rel (%p476) target = $region76
      $region75: #{tpu_custom_call.1} parent=5 // pred_region
        // Predicated region
        $region77: #{tpu_custom_call.1} parent=75 // pred_check
          %p479 = pneg %p47
        $region78: #{tpu_custom_call.1} parent=75 // pred_check_branch
          %481 = sbr.rel (%p479) target = $region80
        $region79: #{tpu_custom_call.1} parent=75 // pred_region
          %s482 = sand.u32 %s37, 1
          %s483 = scalar_lea.sflag [#allocation3], %s482
          %s484 = sand.u32 %s37, 1
          %s485 = smul.addr %s484, 192
          %s486 = scalar_lea.vmem [#allocation2], %s485
          %488 = vsyncadd %s483, 0
          %s489 = smul.addr %s27, 24
          %s490 = smul.addr %s489, 8
          %s491 = scalar_lea.hbm %s0, %s490
          %s492 = sshll.u32 %s491, 4
          %s493 = int_to_ptr.hbm [resolvable:$true] %s492
          %s494 = sshll.u32 %s486, 4
          %s495 = int_to_ptr.vmem [resolvable:$true] %s494
          %500 = dma.hbm_to_vmem [thread:$0]  %s493, 3072, %s495, %s483, 128, 128, 8
        $region80: #{tpu_custom_call.1} parent=75 // pred_fallthru
          _
      $region76: #{tpu_custom_call.1} parent=5 // pred_fallthru
        _
      %p501 = scmp.le.s32.totalorder 1, %s27
      %p502 = scmp.lt.s32.totalorder %s27, 3
      %p503 = pnand %p501, %p502
      %p504 = pneg %p503
      // Predicated region
      $region81: #{tpu_custom_call.1} parent=5 // pred_check
        _
      $region82: #{tpu_custom_call.1} parent=5 // pred_check_branch
        %506 = sbr.rel (%p503) target = $region84
      $region83: #{tpu_custom_call.1} parent=5 // pred_region
        %s507 = ssub.s32 %s27, 1
        %s508 = sand.u32 %s40, 1
        %s509 = scalar_lea.sflag [#allocation3], %s508
        %s510 = sand.u32 %s40, 1
        %s511 = smul.addr %s510, 192
        %s512 = scalar_lea.vmem [#allocation2], %s511
        // Predicated region
        $region85: #{tpu_custom_call.1} parent=83 // pred_check
          %p513 = pneg %p53
        $region86: #{tpu_custom_call.1} parent=83 // pred_check_branch
          %515 = sbr.rel (%p513) target = $region88
        $region87: #{tpu_custom_call.1} parent=83 // pred_region
          %517 = dma.done %s509, 3072
        $region88: #{tpu_custom_call.1} parent=83 // pred_fallthru
          _
        // Predicated region
        $region89: #{tpu_custom_call.1} parent=83 // pred_check
          %p518 = pneg %p326
        $region90: #{tpu_custom_call.1} parent=83 // pred_check_branch
          %520 = sbr.rel (%p518) target = $region92
        $region91: #{tpu_custom_call.1} parent=83 // pred_region
          %522 = dma.done [#allocation4], 16
        $region92: #{tpu_custom_call.1} parent=83 // pred_fallthru
          _
        // Predicated region
        $region93: #{tpu_custom_call.1} parent=83 // pred_check
          %p523 = pneg %p347
        $region94: #{tpu_custom_call.1} parent=83 // pred_check_branch
          %525 = sbr.rel (%p523) target = $region96
        $region95: #{tpu_custom_call.1} parent=83 // pred_region
          %527 = dma.done [#allocation7], 16
        $region96: #{tpu_custom_call.1} parent=83 // pred_fallthru
          _
        // Predicated region
        $region97: #{tpu_custom_call.1} parent=83 // pred_check
          %p528 = pneg %p368
        $region98: #{tpu_custom_call.1} parent=83 // pred_check_branch
          %530 = sbr.rel (%p528) target = $region100
        $region99: #{tpu_custom_call.1} parent=83 // pred_region
          %532 = dma.done [#allocation7], 16
        $region100: #{tpu_custom_call.1} parent=83 // pred_fallthru
          _
        %533 = sfence
        %s534 = sand.u32 %s40, 1
        %s535 = scalar_lea.sflag [#allocation3], %s534
        %s536 = sand.u32 %s40, 1
        %s537 = smul.addr %s536, 192
        %s538 = scalar_lea.vmem [#allocation2], %s537
        %p539 = pneg %p53
        %p540 = pneg %p50
        %p541 = pneg %p74
        %p542 = pneg %p71
        %p543 = pneg %p95
        %p544 = pneg %p92
        %p545 = pneg %p116
        %p546 = pneg %p113
        %p547 = pneg %p137
        %p548 = pneg %p134
        %p549 = pneg %p158
        %p550 = pneg %p155
        %p551 = pneg %p179
        %p552 = pneg %p176
        %p553 = pneg %p200
        %p554 = pneg %p197
        %p555 = pneg %p221
        %p556 = pneg %p218
        %p557 = pneg %p242
        %p558 = pneg %p239
        %p559 = pneg %p263
        %p560 = pneg %p260
        %p561 = pneg %p284
        %p562 = pneg %p281
        %p563 = pneg %p305
        %p564 = pneg %p302
        %p565 = pneg %p326
        %p566 = pneg %p323
        %p567 = pneg %p347
        %p568 = pneg %p344
        %p569 = pneg %p368
        %p570 = pneg %p365
        %p571 = pneg %p394
        %p572 = pneg %p391
        %p573 = scmp.lt.s32.totalorder %s32, 1
        %s574 = scalar_select %p573, %s32, 1
        %s575 = smul.addr %s574, 3
        %s576 = scalar_lea.vmem %s16, %s575
        %p577 = scmp.lt.s32.totalorder %s32, 1
        %s578 = scalar_select %p577, %s32, 1
        %s579 = smul.addr %s578, 3
        %s580 = scalar_lea.vmem %s16, %s579
        %v581 = vld [vmem:[%s512] sm:$0xff]
        %v582 = vld [vmem:[%s512 + $0x8] sm:$0xff]
        %v583 = vld [vmem:[%s512 + $0x10] sm:$0xff]
        %v584 = vld [vmem:[%s512 + $0x18] sm:$0xff]
        %v585 = vld [vmem:[%s512 + $0x20] sm:$0xff]
        %v586 = vld [vmem:[%s512 + $0x28] sm:$0xff]
        %v587 = vld [vmem:[%s512 + $0x30] sm:$0xff]
        %v588 = vld [vmem:[%s512 + $0x38] sm:$0xff]
        %s589 = scalar_lea.vmem %s512, 64 [#allocation2]
        %v590 = vld [vmem:[%s589] sm:$0xff]
        %v591 = vld [vmem:[%s589 + $0x8] sm:$0xff]
        %v592 = vld [vmem:[%s589 + $0x10] sm:$0xff]
        %v593 = vld [vmem:[%s589 + $0x18] sm:$0xff]
        %v594 = vld [vmem:[%s589 + $0x20] sm:$0xff]
        %v595 = vld [vmem:[%s589 + $0x28] sm:$0xff]
        %v596 = vld [vmem:[%s589 + $0x30] sm:$0xff]
        %v597 = vld [vmem:[%s589 + $0x38] sm:$0xff]
        %v598 = vadd.f32 %v581, %v590
        %v599 = vadd.f32 %v582, %v591
        %v600 = vadd.f32 %v583, %v592
        %v601 = vadd.f32 %v584, %v593
        %v602 = vadd.f32 %v585, %v594
        %v603 = vadd.f32 %v586, %v595
        %v604 = vadd.f32 %v587, %v596
        %v605 = vadd.f32 %v588, %v597
        %s606 = scalar_lea.vmem %s512, 128 [#allocation2]
        %v607 = vld [vmem:[%s606] sm:$0xff]
        %v608 = vld [vmem:[%s606 + $0x8] sm:$0xff]
        %v609 = vld [vmem:[%s606 + $0x10] sm:$0xff]
        %v610 = vld [vmem:[%s606 + $0x18] sm:$0xff]
        %v611 = vld [vmem:[%s606 + $0x20] sm:$0xff]
        %v612 = vld [vmem:[%s606 + $0x28] sm:$0xff]
        %v613 = vld [vmem:[%s606 + $0x30] sm:$0xff]
        %v614 = vld [vmem:[%s606 + $0x38] sm:$0xff]
        %v615 = vadd.f32 %v598, %v607
        %v616 = vadd.f32 %v599, %v608
        %v617 = vadd.f32 %v600, %v609
        %v618 = vadd.f32 %v601, %v610
        %v619 = vadd.f32 %v602, %v611
        %v620 = vadd.f32 %v603, %v612
        %v621 = vadd.f32 %v604, %v613
        %v622 = vadd.f32 %v605, %v614
        %v623 = vld [vmem:[%s2] sm:$0xff]
        %v624 = vld [vmem:[%s2 + $0x8] sm:$0xff]
        %v625 = vld [vmem:[%s2 + $0x10] sm:$0xff]
        %v626 = vld [vmem:[%s2 + $0x18] sm:$0xff]
        %vm627 = vcmask 523264
        %v629 = vsel %vm627, %v623, 0
        %v632 = vsel %vm627, %v624, 0
        %v635 = vsel %vm627, %v625, 0
        %v638 = vsel %vm627, %v626, 0
        %640 = vmatpush.msra.mxu0 0.0
        %641 = vmatpush.msra.mxu0 0.0
        %642 = vmatpush.msra.mxu0 0.0
        %643 = vmatpush.msra.mxu0 0.0
        %644 = vmatpush.msra.mxu0 0.0
        %645 = vmatpush.msra.mxu0 0.0
        %646 = vmatpush.msra.mxu0 0.0
        %647 = vmatpush.msra.mxu0 0.0
        %v648 = vand.u32 %v622, 4294901760
        %649 = vmatpush.msra.mxu0 %v648
        %v650 = vand.u32 %v621, 4294901760
        %651 = vmatpush.msra.mxu0 %v650
        %v652 = vand.u32 %v620, 4294901760
        %653 = vmatpush.msra.mxu0 %v652
        %v654 = vand.u32 %v619, 4294901760
        %655 = vmatpush.msra.mxu0 %v654
        %v656 = vand.u32 %v618, 4294901760
        %657 = vmatpush.msra.mxu0 %v656
        %v658 = vand.u32 %v617, 4294901760
        %659 = vmatpush.msra.mxu0 %v658
        %v660 = vand.u32 %v616, 4294901760
        %661 = vmatpush.msra.mxu0 %v660
        %v662 = vand.u32 %v615, 4294901760
        %663 = vmatpush.msra.mxu0 %v662
        %v664 = vand.u32 %v629, 4294901760
        %v665 = vsub.f32 %v629, %v664
        %v666 = vand.u32 %v665, 4294901760
        %v667 = vsub.f32 %v665, %v666
        %v668 = vand.u32 %v667, 4294901760
        %669 = vmatmul.f32.gmra.mxu0 %v668
        %v670 = vpop.f32.mrf.mxu0
        %v671 = vadd.f32 0.0, %v670
        %v672 = vand.u32 %v632, 4294901760
        %v673 = vsub.f32 %v632, %v672
        %v674 = vand.u32 %v673, 4294901760
        %v675 = vsub.f32 %v673, %v674
        %v676 = vand.u32 %v675, 4294901760
        %677 = vmatmul.f32.gmra.mxu0 %v676
        %v678 = vpop.f32.mrf.mxu0
        %v679 = vadd.f32 0.0, %v678
        %v680 = vand.u32 %v635, 4294901760
        %v681 = vsub.f32 %v635, %v680
        %v682 = vand.u32 %v681, 4294901760
        %v683 = vsub.f32 %v681, %v682
        %v684 = vand.u32 %v683, 4294901760
        %685 = vmatmul.f32.gmra.mxu0 %v684
        %v686 = vpop.f32.mrf.mxu0
        %v687 = vadd.f32 0.0, %v686
        %v688 = vand.u32 %v638, 4294901760
        %v689 = vsub.f32 %v638, %v688
        %v690 = vand.u32 %v689, 4294901760
        %v691 = vsub.f32 %v689, %v690
        %v692 = vand.u32 %v691, 4294901760
        %693 = vmatmul.f32.gmra.mxu0 %v692
        %v694 = vpop.f32.mrf.mxu0
        %v695 = vadd.f32 0.0, %v694
        %696 = vdwg.mxu0
        %697 = vmatpush.msra.mxu0 0.0
        %698 = vmatpush.msra.mxu0 0.0
        %699 = vmatpush.msra.mxu0 0.0
        %700 = vmatpush.msra.mxu0 0.0
        %701 = vmatpush.msra.mxu0 0.0
        %702 = vmatpush.msra.mxu0 0.0
        %703 = vmatpush.msra.mxu0 0.0
        %704 = vmatpush.msra.mxu0 0.0
        %v705 = vand.u32 %v622, 4294901760
        %v706 = vsub.f32 %v622, %v705
        %v707 = vand.u32 %v706, 4294901760
        %v708 = vsub.f32 %v706, %v707
        %v709 = vand.u32 %v708, 4294901760
        %710 = vmatpush.msra.mxu0 %v709
        %v711 = vand.u32 %v621, 4294901760
        %v712 = vsub.f32 %v621, %v711
        %v713 = vand.u32 %v712, 4294901760
        %v714 = vsub.f32 %v712, %v713
        %v715 = vand.u32 %v714, 4294901760
        %716 = vmatpush.msra.mxu0 %v715
        %v717 = vand.u32 %v620, 4294901760
        %v718 = vsub.f32 %v620, %v717
        %v719 = vand.u32 %v718, 4294901760
        %v720 = vsub.f32 %v718, %v719
        %v721 = vand.u32 %v720, 4294901760
        %722 = vmatpush.msra.mxu0 %v721
        %v723 = vand.u32 %v619, 4294901760
        %v724 = vsub.f32 %v619, %v723
        %v725 = vand.u32 %v724, 4294901760
        %v726 = vsub.f32 %v724, %v725
        %v727 = vand.u32 %v726, 4294901760
        %728 = vmatpush.msra.mxu0 %v727
        %v729 = vand.u32 %v618, 4294901760
        %v730 = vsub.f32 %v618, %v729
        %v731 = vand.u32 %v730, 4294901760
        %v732 = vsub.f32 %v730, %v731
        %v733 = vand.u32 %v732, 4294901760
        %734 = vmatpush.msra.mxu0 %v733
        %v735 = vand.u32 %v617, 4294901760
        %v736 = vsub.f32 %v617, %v735
        %v737 = vand.u32 %v736, 4294901760
        %v738 = vsub.f32 %v736, %v737
        %v739 = vand.u32 %v738, 4294901760
        %740 = vmatpush.msra.mxu0 %v739
        %v741 = vand.u32 %v616, 4294901760
        %v742 = vsub.f32 %v616, %v741
        %v743 = vand.u32 %v742, 4294901760
        %v744 = vsub.f32 %v742, %v743
        %v745 = vand.u32 %v744, 4294901760
        %746 = vmatpush.msra.mxu0 %v745
        %v747 = vand.u32 %v615, 4294901760
        %v748 = vsub.f32 %v615, %v747
        %v749 = vand.u32 %v748, 4294901760
        %v750 = vsub.f32 %v748, %v749
        %v751 = vand.u32 %v750, 4294901760
        %752 = vmatpush.msra.mxu0 %v751
        %v753 = vand.u32 %v629, 4294901760
        %754 = vmatmul.f32.gmra.mxu0 %v753
        %v755 = vpop.f32.mrf.mxu0
        %v756 = vadd.f32 %v671, %v755
        %v757 = vand.u32 %v632, 4294901760
        %758 = vmatmul.f32.gmra.mxu0 %v757
        %v759 = vpop.f32.mrf.mxu0
        %v760 = vadd.f32 %v679, %v759
        %v761 = vand.u32 %v635, 4294901760
        %762 = vmatmul.f32.gmra.mxu0 %v761
        %v763 = vpop.f32.mrf.mxu0
        %v764 = vadd.f32 %v687, %v763
        %v765 = vand.u32 %v638, 4294901760
        %766 = vmatmul.f32.gmra.mxu0 %v765
        %v767 = vpop.f32.mrf.mxu0
        %v768 = vadd.f32 %v695, %v767
        %769 = vdwg.mxu0
        %770 = vmatpush.msra.mxu0 0.0
        %771 = vmatpush.msra.mxu0 0.0
        %772 = vmatpush.msra.mxu0 0.0
        %773 = vmatpush.msra.mxu0 0.0
        %774 = vmatpush.msra.mxu0 0.0
        %775 = vmatpush.msra.mxu0 0.0
        %776 = vmatpush.msra.mxu0 0.0
        %777 = vmatpush.msra.mxu0 0.0
        %v778 = vand.u32 %v622, 4294901760
        %v779 = vsub.f32 %v622, %v778
        %780 = vmatpush.msra.mxu0 %v779
        %v781 = vand.u32 %v621, 4294901760
        %v782 = vsub.f32 %v621, %v781
        %783 = vmatpush.msra.mxu0 %v782
        %v784 = vand.u32 %v620, 4294901760
        %v785 = vsub.f32 %v620, %v784
        %786 = vmatpush.msra.mxu0 %v785
        %v787 = vand.u32 %v619, 4294901760
        %v788 = vsub.f32 %v619, %v787
        %789 = vmatpush.msra.mxu0 %v788
        %v790 = vand.u32 %v618, 4294901760
        %v791 = vsub.f32 %v618, %v790
        %792 = vmatpush.msra.mxu0 %v791
        %v793 = vand.u32 %v617, 4294901760
        %v794 = vsub.f32 %v617, %v793
        %795 = vmatpush.msra.mxu0 %v794
        %v796 = vand.u32 %v616, 4294901760
        %v797 = vsub.f32 %v616, %v796
        %798 = vmatpush.msra.mxu0 %v797
        %v799 = vand.u32 %v615, 4294901760
        %v800 = vsub.f32 %v615, %v799
        %801 = vmatpush.msra.mxu0 %v800
        %v802 = vand.u32 %v629, 4294901760
        %v803 = vsub.f32 %v629, %v802
        %804 = vmatmul.f32.gmra.mxu0 %v803
        %v805 = vpop.f32.mrf.mxu0
        %v806 = vadd.f32 %v756, %v805
        %v807 = vand.u32 %v632, 4294901760
        %v808 = vsub.f32 %v632, %v807
        %809 = vmatmul.f32.gmra.mxu0 %v808
        %v810 = vpop.f32.mrf.mxu0
        %v811 = vadd.f32 %v760, %v810
        %v812 = vand.u32 %v635, 4294901760
        %v813 = vsub.f32 %v635, %v812
        %814 = vmatmul.f32.gmra.mxu0 %v813
        %v815 = vpop.f32.mrf.mxu0
        %v816 = vadd.f32 %v764, %v815
        %v817 = vand.u32 %v638, 4294901760
        %v818 = vsub.f32 %v638, %v817
        %819 = vmatmul.f32.gmra.mxu0 %v818
        %v820 = vpop.f32.mrf.mxu0
        %v821 = vadd.f32 %v768, %v820
        %822 = vdwg.mxu0
        %823 = vmatpush.msra.mxu0 0.0
        %824 = vmatpush.msra.mxu0 0.0
        %825 = vmatpush.msra.mxu0 0.0
        %826 = vmatpush.msra.mxu0 0.0
        %827 = vmatpush.msra.mxu0 0.0
        %828 = vmatpush.msra.mxu0 0.0
        %829 = vmatpush.msra.mxu0 0.0
        %830 = vmatpush.msra.mxu0 0.0
        %v831 = vand.u32 %v622, 4294901760
        %832 = vmatpush.msra.mxu0 %v831
        %v833 = vand.u32 %v621, 4294901760
        %834 = vmatpush.msra.mxu0 %v833
        %v835 = vand.u32 %v620, 4294901760
        %836 = vmatpush.msra.mxu0 %v835
        %v837 = vand.u32 %v619, 4294901760
        %838 = vmatpush.msra.mxu0 %v837
        %v839 = vand.u32 %v618, 4294901760
        %840 = vmatpush.msra.mxu0 %v839
        %v841 = vand.u32 %v617, 4294901760
        %842 = vmatpush.msra.mxu0 %v841
        %v843 = vand.u32 %v616, 4294901760
        %844 = vmatpush.msra.mxu0 %v843
        %v845 = vand.u32 %v615, 4294901760
        %846 = vmatpush.msra.mxu0 %v845
        %v847 = vand.u32 %v629, 4294901760
        %v848 = vsub.f32 %v629, %v847
        %v849 = vand.u32 %v848, 4294901760
        %850 = vmatmul.f32.gmra.mxu0 %v849
        %v851 = vpop.f32.mrf.mxu0
        %v852 = vadd.f32 %v806, %v851
        %v853 = vand.u32 %v632, 4294901760
        %v854 = vsub.f32 %v632, %v853
        %v855 = vand.u32 %v854, 4294901760
        %856 = vmatmul.f32.gmra.mxu0 %v855
        %v857 = vpop.f32.mrf.mxu0
        %v858 = vadd.f32 %v811, %v857
        %v859 = vand.u32 %v635, 4294901760
        %v860 = vsub.f32 %v635, %v859
        %v861 = vand.u32 %v860, 4294901760
        %862 = vmatmul.f32.gmra.mxu0 %v861
        %v863 = vpop.f32.mrf.mxu0
        %v864 = vadd.f32 %v816, %v863
        %v865 = vand.u32 %v638, 4294901760
        %v866 = vsub.f32 %v638, %v865
        %v867 = vand.u32 %v866, 4294901760
        %868 = vmatmul.f32.gmra.mxu0 %v867
        %v869 = vpop.f32.mrf.mxu0
        %v870 = vadd.f32 %v821, %v869
        %871 = vdwg.mxu0
        %872 = vmatpush.msra.mxu0 0.0
        %873 = vmatpush.msra.mxu0 0.0
        %874 = vmatpush.msra.mxu0 0.0
        %875 = vmatpush.msra.mxu0 0.0
        %876 = vmatpush.msra.mxu0 0.0
        %877 = vmatpush.msra.mxu0 0.0
        %878 = vmatpush.msra.mxu0 0.0
        %879 = vmatpush.msra.mxu0 0.0
        %v880 = vand.u32 %v622, 4294901760
        %v881 = vsub.f32 %v622, %v880
        %v882 = vand.u32 %v881, 4294901760
        %883 = vmatpush.msra.mxu0 %v882
        %v884 = vand.u32 %v621, 4294901760
        %v885 = vsub.f32 %v621, %v884
        %v886 = vand.u32 %v885, 4294901760
        %887 = vmatpush.msra.mxu0 %v886
        %v888 = vand.u32 %v620, 4294901760
        %v889 = vsub.f32 %v620, %v888
        %v890 = vand.u32 %v889, 4294901760
        %891 = vmatpush.msra.mxu0 %v890
        %v892 = vand.u32 %v619, 4294901760
        %v893 = vsub.f32 %v619, %v892
        %v894 = vand.u32 %v893, 4294901760
        %895 = vmatpush.msra.mxu0 %v894
        %v896 = vand.u32 %v618, 4294901760
        %v897 = vsub.f32 %v618, %v896
        %v898 = vand.u32 %v897, 4294901760
        %899 = vmatpush.msra.mxu0 %v898
        %v900 = vand.u32 %v617, 4294901760
        %v901 = vsub.f32 %v617, %v900
        %v902 = vand.u32 %v901, 4294901760
        %903 = vmatpush.msra.mxu0 %v902
        %v904 = vand.u32 %v616, 4294901760
        %v905 = vsub.f32 %v616, %v904
        %v906 = vand.u32 %v905, 4294901760
        %907 = vmatpush.msra.mxu0 %v906
        %v908 = vand.u32 %v615, 4294901760
        %v909 = vsub.f32 %v615, %v908
        %v910 = vand.u32 %v909, 4294901760
        %911 = vmatpush.msra.mxu0 %v910
        %v912 = vand.u32 %v629, 4294901760
        %913 = vmatmul.f32.gmra.mxu0 %v912
        %v914 = vpop.f32.mrf.mxu0
        %v915 = vadd.f32 %v852, %v914
        %v916 = vand.u32 %v632, 4294901760
        %917 = vmatmul.f32.gmra.mxu0 %v916
        %v918 = vpop.f32.mrf.mxu0
        %v919 = vadd.f32 %v858, %v918
        %v920 = vand.u32 %v635, 4294901760
        %921 = vmatmul.f32.gmra.mxu0 %v920
        %v922 = vpop.f32.mrf.mxu0
        %v923 = vadd.f32 %v864, %v922
        %v924 = vand.u32 %v638, 4294901760
        %925 = vmatmul.f32.gmra.mxu0 %v924
        %v926 = vpop.f32.mrf.mxu0
        %v927 = vadd.f32 %v870, %v926
        %928 = vdwg.mxu0
        %929 = vmatpush.msra.mxu0 0.0
        %930 = vmatpush.msra.mxu0 0.0
        %931 = vmatpush.msra.mxu0 0.0
        %932 = vmatpush.msra.mxu0 0.0
        %933 = vmatpush.msra.mxu0 0.0
        %934 = vmatpush.msra.mxu0 0.0
        %935 = vmatpush.msra.mxu0 0.0
        %936 = vmatpush.msra.mxu0 0.0
        %v937 = vand.u32 %v622, 4294901760
        %938 = vmatpush.msra.mxu0 %v937
        %v939 = vand.u32 %v621, 4294901760
        %940 = vmatpush.msra.mxu0 %v939
        %v941 = vand.u32 %v620, 4294901760
        %942 = vmatpush.msra.mxu0 %v941
        %v943 = vand.u32 %v619, 4294901760
        %944 = vmatpush.msra.mxu0 %v943
        %v945 = vand.u32 %v618, 4294901760
        %946 = vmatpush.msra.mxu0 %v945
        %v947 = vand.u32 %v617, 4294901760
        %948 = vmatpush.msra.mxu0 %v947
        %v949 = vand.u32 %v616, 4294901760
        %950 = vmatpush.msra.mxu0 %v949
        %v951 = vand.u32 %v615, 4294901760
        %952 = vmatpush.msra.mxu0 %v951
        %v953 = vand.u32 %v629, 4294901760
        %954 = vmatmul.f32.gmra.mxu0 %v953
        %v955 = vpop.f32.mrf.mxu0
        %v956 = vadd.f32 %v915, %v955
        %v957 = vand.u32 %v632, 4294901760
        %958 = vmatmul.f32.gmra.mxu0 %v957
        %v959 = vpop.f32.mrf.mxu0
        %v960 = vadd.f32 %v919, %v959
        %v961 = vand.u32 %v635, 4294901760
        %962 = vmatmul.f32.gmra.mxu0 %v961
        %v963 = vpop.f32.mrf.mxu0
        %v964 = vadd.f32 %v923, %v963
        %v965 = vand.u32 %v638, 4294901760
        %966 = vmatmul.f32.gmra.mxu0 %v965
        %v967 = vpop.f32.mrf.mxu0
        %v968 = vadd.f32 %v927, %v967
        %969 = vdwg.mxu0
        %v970 = vld [vmem:[%s1] sm:$0xff]
        %v971 = vld [vmem:[%s1 + $0x8] sm:$0xff]
        %v972 = vld [vmem:[%s1 + $0x10] sm:$0xff]
        %v973 = vld [vmem:[%s1 + $0x18] sm:$0xff]
        %v975 = vsel %vm627, %v970, 0
        %v978 = vsel %vm627, %v971, 0
        %v981 = vsel %vm627, %v972, 0
        %v984 = vsel %vm627, %v973, 0
        %986 = vmatpush.msra.mxu0 0.0
        %987 = vmatpush.msra.mxu0 0.0
        %988 = vmatpush.msra.mxu0 0.0
        %989 = vmatpush.msra.mxu0 0.0
        %990 = vmatpush.msra.mxu0 0.0
        %991 = vmatpush.msra.mxu0 0.0
        %992 = vmatpush.msra.mxu0 0.0
        %993 = vmatpush.msra.mxu0 0.0
        %v994 = vand.u32 %v622, 4294901760
        %995 = vmatpush.msra.mxu0 %v994
        %v996 = vand.u32 %v621, 4294901760
        %997 = vmatpush.msra.mxu0 %v996
        %v998 = vand.u32 %v620, 4294901760
        %999 = vmatpush.msra.mxu0 %v998
        %v1000 = vand.u32 %v619, 4294901760
        %1001 = vmatpush.msra.mxu0 %v1000
        %v1002 = vand.u32 %v618, 4294901760
        %1003 = vmatpush.msra.mxu0 %v1002
        %v1004 = vand.u32 %v617, 4294901760
        %1005 = vmatpush.msra.mxu0 %v1004
        %v1006 = vand.u32 %v616, 4294901760
        %1007 = vmatpush.msra.mxu0 %v1006
        %v1008 = vand.u32 %v615, 4294901760
        %1009 = vmatpush.msra.mxu0 %v1008
        %v1010 = vand.u32 %v975, 4294901760
        %v1011 = vsub.f32 %v975, %v1010
        %v1012 = vand.u32 %v1011, 4294901760
        %v1013 = vsub.f32 %v1011, %v1012
        %v1014 = vand.u32 %v1013, 4294901760
        %1015 = vmatmul.f32.gmra.mxu0 %v1014
        %v1016 = vpop.f32.mrf.mxu0
        %v1017 = vadd.f32 0.0, %v1016
        %v1018 = vand.u32 %v978, 4294901760
        %v1019 = vsub.f32 %v978, %v1018
        %v1020 = vand.u32 %v1019, 4294901760
        %v1021 = vsub.f32 %v1019, %v1020
        %v1022 = vand.u32 %v1021, 4294901760
        %1023 = vmatmul.f32.gmra.mxu0 %v1022
        %v1024 = vpop.f32.mrf.mxu0
        %v1025 = vadd.f32 0.0, %v1024
        %v1026 = vand.u32 %v981, 4294901760
        %v1027 = vsub.f32 %v981, %v1026
        %v1028 = vand.u32 %v1027, 4294901760
        %v1029 = vsub.f32 %v1027, %v1028
        %v1030 = vand.u32 %v1029, 4294901760
        %1031 = vmatmul.f32.gmra.mxu0 %v1030
        %v1032 = vpop.f32.mrf.mxu0
        %v1033 = vadd.f32 0.0, %v1032
        %v1034 = vand.u32 %v984, 4294901760
        %v1035 = vsub.f32 %v984, %v1034
        %v1036 = vand.u32 %v1035, 4294901760
        %v1037 = vsub.f32 %v1035, %v1036
        %v1038 = vand.u32 %v1037, 4294901760
        %1039 = vmatmul.f32.gmra.mxu0 %v1038
        %v1040 = vpop.f32.mrf.mxu0
        %v1041 = vadd.f32 0.0, %v1040
        %1042 = vdwg.mxu0
        %1043 = vmatpush.msra.mxu0 0.0
        %1044 = vmatpush.msra.mxu0 0.0
        %1045 = vmatpush.msra.mxu0 0.0
        %1046 = vmatpush.msra.mxu0 0.0
        %1047 = vmatpush.msra.mxu0 0.0
        %1048 = vmatpush.msra.mxu0 0.0
        %1049 = vmatpush.msra.mxu0 0.0
        %1050 = vmatpush.msra.mxu0 0.0
        %v1051 = vand.u32 %v622, 4294901760
        %v1052 = vsub.f32 %v622, %v1051
        %v1053 = vand.u32 %v1052, 4294901760
        %v1054 = vsub.f32 %v1052, %v1053
        %v1055 = vand.u32 %v1054, 4294901760
        %1056 = vmatpush.msra.mxu0 %v1055
        %v1057 = vand.u32 %v621, 4294901760
        %v1058 = vsub.f32 %v621, %v1057
        %v1059 = vand.u32 %v1058, 4294901760
        %v1060 = vsub.f32 %v1058, %v1059
        %v1061 = vand.u32 %v1060, 4294901760
        %1062 = vmatpush.msra.mxu0 %v1061
        %v1063 = vand.u32 %v620, 4294901760
        %v1064 = vsub.f32 %v620, %v1063
        %v1065 = vand.u32 %v1064, 4294901760
        %v1066 = vsub.f32 %v1064, %v1065
        %v1067 = vand.u32 %v1066, 4294901760
        %1068 = vmatpush.msra.mxu0 %v1067
        %v1069 = vand.u32 %v619, 4294901760
        %v1070 = vsub.f32 %v619, %v1069
        %v1071 = vand.u32 %v1070, 4294901760
        %v1072 = vsub.f32 %v1070, %v1071
        %v1073 = vand.u32 %v1072, 4294901760
        %1074 = vmatpush.msra.mxu0 %v1073
        %v1075 = vand.u32 %v618, 4294901760
        %v1076 = vsub.f32 %v618, %v1075
        %v1077 = vand.u32 %v1076, 4294901760
        %v1078 = vsub.f32 %v1076, %v1077
        %v1079 = vand.u32 %v1078, 4294901760
        %1080 = vmatpush.msra.mxu0 %v1079
        %v1081 = vand.u32 %v617, 4294901760
        %v1082 = vsub.f32 %v617, %v1081
        %v1083 = vand.u32 %v1082, 4294901760
        %v1084 = vsub.f32 %v1082, %v1083
        %v1085 = vand.u32 %v1084, 4294901760
        %1086 = vmatpush.msra.mxu0 %v1085
        %v1087 = vand.u32 %v616, 4294901760
        %v1088 = vsub.f32 %v616, %v1087
        %v1089 = vand.u32 %v1088, 4294901760
        %v1090 = vsub.f32 %v1088, %v1089
        %v1091 = vand.u32 %v1090, 4294901760
        %1092 = vmatpush.msra.mxu0 %v1091
        %v1093 = vand.u32 %v615, 4294901760
        %v1094 = vsub.f32 %v615, %v1093
        %v1095 = vand.u32 %v1094, 4294901760
        %v1096 = vsub.f32 %v1094, %v1095
        %v1097 = vand.u32 %v1096, 4294901760
        %1098 = vmatpush.msra.mxu0 %v1097
        %v1099 = vand.u32 %v975, 4294901760
        %1100 = vmatmul.f32.gmra.mxu0 %v1099
        %v1101 = vpop.f32.mrf.mxu0
        %v1102 = vadd.f32 %v1017, %v1101
        %v1103 = vand.u32 %v978, 4294901760
        %1104 = vmatmul.f32.gmra.mxu0 %v1103
        %v1105 = vpop.f32.mrf.mxu0
        %v1106 = vadd.f32 %v1025, %v1105
        %v1107 = vand.u32 %v981, 4294901760
        %1108 = vmatmul.f32.gmra.mxu0 %v1107
        %v1109 = vpop.f32.mrf.mxu0
        %v1110 = vadd.f32 %v1033, %v1109
        %v1111 = vand.u32 %v984, 4294901760
        %1112 = vmatmul.f32.gmra.mxu0 %v1111
        %v1113 = vpop.f32.mrf.mxu0
        %v1114 = vadd.f32 %v1041, %v1113
        %1115 = vdwg.mxu0
        %1116 = vmatpush.msra.mxu0 0.0
        %1117 = vmatpush.msra.mxu0 0.0
        %1118 = vmatpush.msra.mxu0 0.0
        %1119 = vmatpush.msra.mxu0 0.0
        %1120 = vmatpush.msra.mxu0 0.0
        %1121 = vmatpush.msra.mxu0 0.0
        %1122 = vmatpush.msra.mxu0 0.0
        %1123 = vmatpush.msra.mxu0 0.0
        %v1124 = vand.u32 %v622, 4294901760
        %v1125 = vsub.f32 %v622, %v1124
        %1126 = vmatpush.msra.mxu0 %v1125
        %v1127 = vand.u32 %v621, 4294901760
        %v1128 = vsub.f32 %v621, %v1127
        %1129 = vmatpush.msra.mxu0 %v1128
        %v1130 = vand.u32 %v620, 4294901760
        %v1131 = vsub.f32 %v620, %v1130
        %1132 = vmatpush.msra.mxu0 %v1131
        %v1133 = vand.u32 %v619, 4294901760
        %v1134 = vsub.f32 %v619, %v1133
        %1135 = vmatpush.msra.mxu0 %v1134
        %v1136 = vand.u32 %v618, 4294901760
        %v1137 = vsub.f32 %v618, %v1136
        %1138 = vmatpush.msra.mxu0 %v1137
        %v1139 = vand.u32 %v617, 4294901760
        %v1140 = vsub.f32 %v617, %v1139
        %1141 = vmatpush.msra.mxu0 %v1140
        %v1142 = vand.u32 %v616, 4294901760
        %v1143 = vsub.f32 %v616, %v1142
        %1144 = vmatpush.msra.mxu0 %v1143
        %v1145 = vand.u32 %v615, 4294901760
        %v1146 = vsub.f32 %v615, %v1145
        %1147 = vmatpush.msra.mxu0 %v1146
        %v1148 = vand.u32 %v975, 4294901760
        %v1149 = vsub.f32 %v975, %v1148
        %1150 = vmatmul.f32.gmra.mxu0 %v1149
        %v1151 = vpop.f32.mrf.mxu0
        %v1152 = vadd.f32 %v1102, %v1151
        %v1153 = vand.u32 %v978, 4294901760
        %v1154 = vsub.f32 %v978, %v1153
        %1155 = vmatmul.f32.gmra.mxu0 %v1154
        %v1156 = vpop.f32.mrf.mxu0
        %v1157 = vadd.f32 %v1106, %v1156
        %v1158 = vand.u32 %v981, 4294901760
        %v1159 = vsub.f32 %v981, %v1158
        %1160 = vmatmul.f32.gmra.mxu0 %v1159
        %v1161 = vpop.f32.mrf.mxu0
        %v1162 = vadd.f32 %v1110, %v1161
        %v1163 = vand.u32 %v984, 4294901760
        %v1164 = vsub.f32 %v984, %v1163
        %1165 = vmatmul.f32.gmra.mxu0 %v1164
        %v1166 = vpop.f32.mrf.mxu0
        %v1167 = vadd.f32 %v1114, %v1166
        %1168 = vdwg.mxu0
        %1169 = vmatpush.msra.mxu0 0.0
        %1170 = vmatpush.msra.mxu0 0.0
        %1171 = vmatpush.msra.mxu0 0.0
        %1172 = vmatpush.msra.mxu0 0.0
        %1173 = vmatpush.msra.mxu0 0.0
        %1174 = vmatpush.msra.mxu0 0.0
        %1175 = vmatpush.msra.mxu0 0.0
        %1176 = vmatpush.msra.mxu0 0.0
        %v1177 = vand.u32 %v622, 4294901760
        %1178 = vmatpush.msra.mxu0 %v1177
        %v1179 = vand.u32 %v621, 4294901760
        %1180 = vmatpush.msra.mxu0 %v1179
        %v1181 = vand.u32 %v620, 4294901760
        %1182 = vmatpush.msra.mxu0 %v1181
        %v1183 = vand.u32 %v619, 4294901760
        %1184 = vmatpush.msra.mxu0 %v1183
        %v1185 = vand.u32 %v618, 4294901760
        %1186 = vmatpush.msra.mxu0 %v1185
        %v1187 = vand.u32 %v617, 4294901760
        %1188 = vmatpush.msra.mxu0 %v1187
        %v1189 = vand.u32 %v616, 4294901760
        %1190 = vmatpush.msra.mxu0 %v1189
        %v1191 = vand.u32 %v615, 4294901760
        %1192 = vmatpush.msra.mxu0 %v1191
        %v1193 = vand.u32 %v975, 4294901760
        %v1194 = vsub.f32 %v975, %v1193
        %v1195 = vand.u32 %v1194, 4294901760
        %1196 = vmatmul.f32.gmra.mxu0 %v1195
        %v1197 = vpop.f32.mrf.mxu0
        %v1198 = vadd.f32 %v1152, %v1197
        %v1199 = vand.u32 %v978, 4294901760
        %v1200 = vsub.f32 %v978, %v1199
        %v1201 = vand.u32 %v1200, 4294901760
        %1202 = vmatmul.f32.gmra.mxu0 %v1201
        %v1203 = vpop.f32.mrf.mxu0
        %v1204 = vadd.f32 %v1157, %v1203
        %v1205 = vand.u32 %v981, 4294901760
        %v1206 = vsub.f32 %v981, %v1205
        %v1207 = vand.u32 %v1206, 4294901760
        %1208 = vmatmul.f32.gmra.mxu0 %v1207
        %v1209 = vpop.f32.mrf.mxu0
        %v1210 = vadd.f32 %v1162, %v1209
        %v1211 = vand.u32 %v984, 4294901760
        %v1212 = vsub.f32 %v984, %v1211
        %v1213 = vand.u32 %v1212, 4294901760
        %1214 = vmatmul.f32.gmra.mxu0 %v1213
        %v1215 = vpop.f32.mrf.mxu0
        %v1216 = vadd.f32 %v1167, %v1215
        %1217 = vdwg.mxu0
        %1218 = vmatpush.msra.mxu0 0.0
        %1219 = vmatpush.msra.mxu0 0.0
        %1220 = vmatpush.msra.mxu0 0.0
        %1221 = vmatpush.msra.mxu0 0.0
        %1222 = vmatpush.msra.mxu0 0.0
        %1223 = vmatpush.msra.mxu0 0.0
        %1224 = vmatpush.msra.mxu0 0.0
        %1225 = vmatpush.msra.mxu0 0.0
        %v1226 = vand.u32 %v622, 4294901760
        %v1227 = vsub.f32 %v622, %v1226
        %v1228 = vand.u32 %v1227, 4294901760
        %1229 = vmatpush.msra.mxu0 %v1228
        %v1230 = vand.u32 %v621, 4294901760
        %v1231 = vsub.f32 %v621, %v1230
        %v1232 = vand.u32 %v1231, 4294901760
        %1233 = vmatpush.msra.mxu0 %v1232
        %v1234 = vand.u32 %v620, 4294901760
        %v1235 = vsub.f32 %v620, %v1234
        %v1236 = vand.u32 %v1235, 4294901760
        %1237 = vmatpush.msra.mxu0 %v1236
        %v1238 = vand.u32 %v619, 4294901760
        %v1239 = vsub.f32 %v619, %v1238
        %v1240 = vand.u32 %v1239, 4294901760
        %1241 = vmatpush.msra.mxu0 %v1240
        %v1242 = vand.u32 %v618, 4294901760
        %v1243 = vsub.f32 %v618, %v1242
        %v1244 = vand.u32 %v1243, 4294901760
        %1245 = vmatpush.msra.mxu0 %v1244
        %v1246 = vand.u32 %v617, 4294901760
        %v1247 = vsub.f32 %v617, %v1246
        %v1248 = vand.u32 %v1247, 4294901760
        %1249 = vmatpush.msra.mxu0 %v1248
        %v1250 = vand.u32 %v616, 4294901760
        %v1251 = vsub.f32 %v616, %v1250
        %v1252 = vand.u32 %v1251, 4294901760
        %1253 = vmatpush.msra.mxu0 %v1252
        %v1254 = vand.u32 %v615, 4294901760
        %v1255 = vsub.f32 %v615, %v1254
        %v1256 = vand.u32 %v1255, 4294901760
        %1257 = vmatpush.msra.mxu0 %v1256
        %v1258 = vand.u32 %v975, 4294901760
        %1259 = vmatmul.f32.gmra.mxu0 %v1258
        %v1260 = vpop.f32.mrf.mxu0
        %v1261 = vadd.f32 %v1198, %v1260
        %v1262 = vand.u32 %v978, 4294901760
        %1263 = vmatmul.f32.gmra.mxu0 %v1262
        %v1264 = vpop.f32.mrf.mxu0
        %v1265 = vadd.f32 %v1204, %v1264
        %v1266 = vand.u32 %v981, 4294901760
        %1267 = vmatmul.f32.gmra.mxu0 %v1266
        %v1268 = vpop.f32.mrf.mxu0
        %v1269 = vadd.f32 %v1210, %v1268
        %v1270 = vand.u32 %v984, 4294901760
        %1271 = vmatmul.f32.gmra.mxu0 %v1270
        %v1272 = vpop.f32.mrf.mxu0
        %v1273 = vadd.f32 %v1216, %v1272
        %1274 = vdwg.mxu0
        %1275 = vmatpush.msra.mxu0 0.0
        %1276 = vmatpush.msra.mxu0 0.0
        %1277 = vmatpush.msra.mxu0 0.0
        %1278 = vmatpush.msra.mxu0 0.0
        %1279 = vmatpush.msra.mxu0 0.0
        %1280 = vmatpush.msra.mxu0 0.0
        %1281 = vmatpush.msra.mxu0 0.0
        %1282 = vmatpush.msra.mxu0 0.0
        %v1283 = vand.u32 %v622, 4294901760
        %1284 = vmatpush.msra.mxu0 %v1283
        %v1285 = vand.u32 %v621, 4294901760
        %1286 = vmatpush.msra.mxu0 %v1285
        %v1287 = vand.u32 %v620, 4294901760
        %1288 = vmatpush.msra.mxu0 %v1287
        %v1289 = vand.u32 %v619, 4294901760
        %1290 = vmatpush.msra.mxu0 %v1289
        %v1291 = vand.u32 %v618, 4294901760
        %1292 = vmatpush.msra.mxu0 %v1291
        %v1293 = vand.u32 %v617, 4294901760
        %1294 = vmatpush.msra.mxu0 %v1293
        %v1295 = vand.u32 %v616, 4294901760
        %1296 = vmatpush.msra.mxu0 %v1295
        %v1297 = vand.u32 %v615, 4294901760
        %1298 = vmatpush.msra.mxu0 %v1297
        %v1299 = vand.u32 %v975, 4294901760
        %1300 = vmatmul.f32.gmra.mxu0 %v1299
        %v1301 = vpop.f32.mrf.mxu0
        %v1302 = vadd.f32 %v1261, %v1301
        %v1303 = vand.u32 %v978, 4294901760
        %1304 = vmatmul.f32.gmra.mxu0 %v1303
        %v1305 = vpop.f32.mrf.mxu0
        %v1306 = vadd.f32 %v1265, %v1305
        %v1307 = vand.u32 %v981, 4294901760
        %1308 = vmatmul.f32.gmra.mxu0 %v1307
        %v1309 = vpop.f32.mrf.mxu0
        %v1310 = vadd.f32 %v1269, %v1309
        %v1311 = vand.u32 %v984, 4294901760
        %1312 = vmatmul.f32.gmra.mxu0 %v1311
        %v1313 = vpop.f32.mrf.mxu0
        %v1314 = vadd.f32 %v1273, %v1313
        %1315 = vdwg.mxu0
        %v1316 = vld [vmem:[%s3] sm:$0xff]
        %v1317 = vld [vmem:[%s3 + $0x8] sm:$0xff]
        %v1318 = vld [vmem:[%s3 + $0x10] sm:$0xff]
        %v1319 = vld [vmem:[%s3 + $0x18] sm:$0xff]
        %v1320 = vld [vmem:[%s3 + $0x20] sm:$0xff]
        %v1321 = vld [vmem:[%s3 + $0x28] sm:$0xff]
        %v1322 = vld [vmem:[%s3 + $0x30] sm:$0xff]
        %v1323 = vld [vmem:[%s3 + $0x38] sm:$0xff]
        %v1324 = vld [vmem:[%s4] sm:$0xff]
        %v1325 = vld [vmem:[%s4 + $0x8] sm:$0xff]
        %v1326 = vld [vmem:[%s4 + $0x10] sm:$0xff]
        %v1327 = vld [vmem:[%s4 + $0x18] sm:$0xff]
        %v1328 = vld [vmem:[%s4 + $0x20] sm:$0xff]
        %v1329 = vld [vmem:[%s4 + $0x28] sm:$0xff]
        %v1330 = vld [vmem:[%s4 + $0x30] sm:$0xff]
        %v1331 = vld [vmem:[%s4 + $0x38] sm:$0xff]
        %v1333 = vsel %vm627, %v1302, 0
        %v1336 = vsel %vm627, %v1306, 0
        %v1339 = vsel %vm627, %v1310, 0
        %v1342 = vsel %vm627, %v1314, 0
        %1344 = vmatpush.msra.mxu0 0.0
        %1345 = vmatpush.msra.mxu0 0.0
        %1346 = vmatpush.msra.mxu0 0.0
        %1347 = vmatpush.msra.mxu0 0.0
        %1348 = vmatpush.msra.mxu0 0.0
        %1349 = vmatpush.msra.mxu0 0.0
        %1350 = vmatpush.msra.mxu0 0.0
        %1351 = vmatpush.msra.mxu0 0.0
        %v1352 = vand.u32 %v1331, 4294901760
        %1353 = vmatpush.msra.mxu0 %v1352
        %v1354 = vand.u32 %v1330, 4294901760
        %1355 = vmatpush.msra.mxu0 %v1354
        %v1356 = vand.u32 %v1329, 4294901760
        %1357 = vmatpush.msra.mxu0 %v1356
        %v1358 = vand.u32 %v1328, 4294901760
        %1359 = vmatpush.msra.mxu0 %v1358
        %v1360 = vand.u32 %v1327, 4294901760
        %1361 = vmatpush.msra.mxu0 %v1360
        %v1362 = vand.u32 %v1326, 4294901760
        %1363 = vmatpush.msra.mxu0 %v1362
        %v1364 = vand.u32 %v1325, 4294901760
        %1365 = vmatpush.msra.mxu0 %v1364
        %v1366 = vand.u32 %v1324, 4294901760
        %1367 = vmatpush.msra.mxu0 %v1366
        %v1368 = vand.u32 %v1333, 4294901760
        %v1369 = vsub.f32 %v1333, %v1368
        %v1370 = vand.u32 %v1369, 4294901760
        %v1371 = vsub.f32 %v1369, %v1370
        %v1372 = vand.u32 %v1371, 4294901760
        %1373 = vmatmul.f32.gmra.mxu0 %v1372
        %v1374 = vpop.f32.mrf.mxu0
        %v1375 = vadd.f32 0.0, %v1374
        %v1376 = vand.u32 %v1336, 4294901760
        %v1377 = vsub.f32 %v1336, %v1376
        %v1378 = vand.u32 %v1377, 4294901760
        %v1379 = vsub.f32 %v1377, %v1378
        %v1380 = vand.u32 %v1379, 4294901760
        %1381 = vmatmul.f32.gmra.mxu0 %v1380
        %v1382 = vpop.f32.mrf.mxu0
        %v1383 = vadd.f32 0.0, %v1382
        %v1384 = vand.u32 %v1339, 4294901760
        %v1385 = vsub.f32 %v1339, %v1384
        %v1386 = vand.u32 %v1385, 4294901760
        %v1387 = vsub.f32 %v1385, %v1386
        %v1388 = vand.u32 %v1387, 4294901760
        %1389 = vmatmul.f32.gmra.mxu0 %v1388
        %v1390 = vpop.f32.mrf.mxu0
        %v1391 = vadd.f32 0.0, %v1390
        %v1392 = vand.u32 %v1342, 4294901760
        %v1393 = vsub.f32 %v1342, %v1392
        %v1394 = vand.u32 %v1393, 4294901760
        %v1395 = vsub.f32 %v1393, %v1394
        %v1396 = vand.u32 %v1395, 4294901760
        %1397 = vmatmul.f32.gmra.mxu0 %v1396
        %v1398 = vpop.f32.mrf.mxu0
        %v1399 = vadd.f32 0.0, %v1398
        %1400 = vdwg.mxu0
        %1401 = vmatpush.msra.mxu0 0.0
        %1402 = vmatpush.msra.mxu0 0.0
        %1403 = vmatpush.msra.mxu0 0.0
        %1404 = vmatpush.msra.mxu0 0.0
        %1405 = vmatpush.msra.mxu0 0.0
        %1406 = vmatpush.msra.mxu0 0.0
        %1407 = vmatpush.msra.mxu0 0.0
        %1408 = vmatpush.msra.mxu0 0.0
        %v1409 = vand.u32 %v1331, 4294901760
        %v1410 = vsub.f32 %v1331, %v1409
        %v1411 = vand.u32 %v1410, 4294901760
        %v1412 = vsub.f32 %v1410, %v1411
        %v1413 = vand.u32 %v1412, 4294901760
        %1414 = vmatpush.msra.mxu0 %v1413
        %v1415 = vand.u32 %v1330, 4294901760
        %v1416 = vsub.f32 %v1330, %v1415
        %v1417 = vand.u32 %v1416, 4294901760
        %v1418 = vsub.f32 %v1416, %v1417
        %v1419 = vand.u32 %v1418, 4294901760
        %1420 = vmatpush.msra.mxu0 %v1419
        %v1421 = vand.u32 %v1329, 4294901760
        %v1422 = vsub.f32 %v1329, %v1421
        %v1423 = vand.u32 %v1422, 4294901760
        %v1424 = vsub.f32 %v1422, %v1423
        %v1425 = vand.u32 %v1424, 4294901760
        %1426 = vmatpush.msra.mxu0 %v1425
        %v1427 = vand.u32 %v1328, 4294901760
        %v1428 = vsub.f32 %v1328, %v1427
        %v1429 = vand.u32 %v1428, 4294901760
        %v1430 = vsub.f32 %v1428, %v1429
        %v1431 = vand.u32 %v1430, 4294901760
        %1432 = vmatpush.msra.mxu0 %v1431
        %v1433 = vand.u32 %v1327, 4294901760
        %v1434 = vsub.f32 %v1327, %v1433
        %v1435 = vand.u32 %v1434, 4294901760
        %v1436 = vsub.f32 %v1434, %v1435
        %v1437 = vand.u32 %v1436, 4294901760
        %1438 = vmatpush.msra.mxu0 %v1437
        %v1439 = vand.u32 %v1326, 4294901760
        %v1440 = vsub.f32 %v1326, %v1439
        %v1441 = vand.u32 %v1440, 4294901760
        %v1442 = vsub.f32 %v1440, %v1441
        %v1443 = vand.u32 %v1442, 4294901760
        %1444 = vmatpush.msra.mxu0 %v1443
        %v1445 = vand.u32 %v1325, 4294901760
        %v1446 = vsub.f32 %v1325, %v1445
        %v1447 = vand.u32 %v1446, 4294901760
        %v1448 = vsub.f32 %v1446, %v1447
        %v1449 = vand.u32 %v1448, 4294901760
        %1450 = vmatpush.msra.mxu0 %v1449
        %v1451 = vand.u32 %v1324, 4294901760
        %v1452 = vsub.f32 %v1324, %v1451
        %v1453 = vand.u32 %v1452, 4294901760
        %v1454 = vsub.f32 %v1452, %v1453
        %v1455 = vand.u32 %v1454, 4294901760
        %1456 = vmatpush.msra.mxu0 %v1455
        %v1457 = vand.u32 %v1333, 4294901760
        %1458 = vmatmul.f32.gmra.mxu0 %v1457
        %v1459 = vpop.f32.mrf.mxu0
        %v1460 = vadd.f32 %v1375, %v1459
        %v1461 = vand.u32 %v1336, 4294901760
        %1462 = vmatmul.f32.gmra.mxu0 %v1461
        %v1463 = vpop.f32.mrf.mxu0
        %v1464 = vadd.f32 %v1383, %v1463
        %v1465 = vand.u32 %v1339, 4294901760
        %1466 = vmatmul.f32.gmra.mxu0 %v1465
        %v1467 = vpop.f32.mrf.mxu0
        %v1468 = vadd.f32 %v1391, %v1467
        %v1469 = vand.u32 %v1342, 4294901760
        %1470 = vmatmul.f32.gmra.mxu0 %v1469
        %v1471 = vpop.f32.mrf.mxu0
        %v1472 = vadd.f32 %v1399, %v1471
        %1473 = vdwg.mxu0
        %1474 = vmatpush.msra.mxu0 0.0
        %1475 = vmatpush.msra.mxu0 0.0
        %1476 = vmatpush.msra.mxu0 0.0
        %1477 = vmatpush.msra.mxu0 0.0
        %1478 = vmatpush.msra.mxu0 0.0
        %1479 = vmatpush.msra.mxu0 0.0
        %1480 = vmatpush.msra.mxu0 0.0
        %1481 = vmatpush.msra.mxu0 0.0
        %v1482 = vand.u32 %v1331, 4294901760
        %v1483 = vsub.f32 %v1331, %v1482
        %1484 = vmatpush.msra.mxu0 %v1483
        %v1485 = vand.u32 %v1330, 4294901760
        %v1486 = vsub.f32 %v1330, %v1485
        %1487 = vmatpush.msra.mxu0 %v1486
        %v1488 = vand.u32 %v1329, 4294901760
        %v1489 = vsub.f32 %v1329, %v1488
        %1490 = vmatpush.msra.mxu0 %v1489
        %v1491 = vand.u32 %v1328, 4294901760
        %v1492 = vsub.f32 %v1328, %v1491
        %1493 = vmatpush.msra.mxu0 %v1492
        %v1494 = vand.u32 %v1327, 4294901760
        %v1495 = vsub.f32 %v1327, %v1494
        %1496 = vmatpush.msra.mxu0 %v1495
        %v1497 = vand.u32 %v1326, 4294901760
        %v1498 = vsub.f32 %v1326, %v1497
        %1499 = vmatpush.msra.mxu0 %v1498
        %v1500 = vand.u32 %v1325, 4294901760
        %v1501 = vsub.f32 %v1325, %v1500
        %1502 = vmatpush.msra.mxu0 %v1501
        %v1503 = vand.u32 %v1324, 4294901760
        %v1504 = vsub.f32 %v1324, %v1503
        %1505 = vmatpush.msra.mxu0 %v1504
        %v1506 = vand.u32 %v1333, 4294901760
        %v1507 = vsub.f32 %v1333, %v1506
        %1508 = vmatmul.f32.gmra.mxu0 %v1507
        %v1509 = vpop.f32.mrf.mxu0
        %v1510 = vadd.f32 %v1460, %v1509
        %v1511 = vand.u32 %v1336, 4294901760
        %v1512 = vsub.f32 %v1336, %v1511
        %1513 = vmatmul.f32.gmra.mxu0 %v1512
        %v1514 = vpop.f32.mrf.mxu0
        %v1515 = vadd.f32 %v1464, %v1514
        %v1516 = vand.u32 %v1339, 4294901760
        %v1517 = vsub.f32 %v1339, %v1516
        %1518 = vmatmul.f32.gmra.mxu0 %v1517
        %v1519 = vpop.f32.mrf.mxu0
        %v1520 = vadd.f32 %v1468, %v1519
        %v1521 = vand.u32 %v1342, 4294901760
        %v1522 = vsub.f32 %v1342, %v1521
        %1523 = vmatmul.f32.gmra.mxu0 %v1522
        %v1524 = vpop.f32.mrf.mxu0
        %v1525 = vadd.f32 %v1472, %v1524
        %1526 = vdwg.mxu0
        %1527 = vmatpush.msra.mxu0 0.0
        %1528 = vmatpush.msra.mxu0 0.0
        %1529 = vmatpush.msra.mxu0 0.0
        %1530 = vmatpush.msra.mxu0 0.0
        %1531 = vmatpush.msra.mxu0 0.0
        %1532 = vmatpush.msra.mxu0 0.0
        %1533 = vmatpush.msra.mxu0 0.0
        %1534 = vmatpush.msra.mxu0 0.0
        %v1535 = vand.u32 %v1331, 4294901760
        %1536 = vmatpush.msra.mxu0 %v1535
        %v1537 = vand.u32 %v1330, 4294901760
        %1538 = vmatpush.msra.mxu0 %v1537
        %v1539 = vand.u32 %v1329, 4294901760
        %1540 = vmatpush.msra.mxu0 %v1539
        %v1541 = vand.u32 %v1328, 4294901760
        %1542 = vmatpush.msra.mxu0 %v1541
        %v1543 = vand.u32 %v1327, 4294901760
        %1544 = vmatpush.msra.mxu0 %v1543
        %v1545 = vand.u32 %v1326, 4294901760
        %1546 = vmatpush.msra.mxu0 %v1545
        %v1547 = vand.u32 %v1325, 4294901760
        %1548 = vmatpush.msra.mxu0 %v1547
        %v1549 = vand.u32 %v1324, 4294901760
        %1550 = vmatpush.msra.mxu0 %v1549
        %v1551 = vand.u32 %v1333, 4294901760
        %v1552 = vsub.f32 %v1333, %v1551
        %v1553 = vand.u32 %v1552, 4294901760
        %1554 = vmatmul.f32.gmra.mxu0 %v1553
        %v1555 = vpop.f32.mrf.mxu0
        %v1556 = vadd.f32 %v1510, %v1555
        %v1557 = vand.u32 %v1336, 4294901760
        %v1558 = vsub.f32 %v1336, %v1557
        %v1559 = vand.u32 %v1558, 4294901760
        %1560 = vmatmul.f32.gmra.mxu0 %v1559
        %v1561 = vpop.f32.mrf.mxu0
        %v1562 = vadd.f32 %v1515, %v1561
        %v1563 = vand.u32 %v1339, 4294901760
        %v1564 = vsub.f32 %v1339, %v1563
        %v1565 = vand.u32 %v1564, 4294901760
        %1566 = vmatmul.f32.gmra.mxu0 %v1565
        %v1567 = vpop.f32.mrf.mxu0
        %v1568 = vadd.f32 %v1520, %v1567
        %v1569 = vand.u32 %v1342, 4294901760
        %v1570 = vsub.f32 %v1342, %v1569
        %v1571 = vand.u32 %v1570, 4294901760
        %1572 = vmatmul.f32.gmra.mxu0 %v1571
        %v1573 = vpop.f32.mrf.mxu0
        %v1574 = vadd.f32 %v1525, %v1573
        %1575 = vdwg.mxu0
        %1576 = vmatpush.msra.mxu0 0.0
        %1577 = vmatpush.msra.mxu0 0.0
        %1578 = vmatpush.msra.mxu0 0.0
        %1579 = vmatpush.msra.mxu0 0.0
        %1580 = vmatpush.msra.mxu0 0.0
        %1581 = vmatpush.msra.mxu0 0.0
        %1582 = vmatpush.msra.mxu0 0.0
        %1583 = vmatpush.msra.mxu0 0.0
        %v1584 = vand.u32 %v1331, 4294901760
        %v1585 = vsub.f32 %v1331, %v1584
        %v1586 = vand.u32 %v1585, 4294901760
        %1587 = vmatpush.msra.mxu0 %v1586
        %v1588 = vand.u32 %v1330, 4294901760
        %v1589 = vsub.f32 %v1330, %v1588
        %v1590 = vand.u32 %v1589, 4294901760
        %1591 = vmatpush.msra.mxu0 %v1590
        %v1592 = vand.u32 %v1329, 4294901760
        %v1593 = vsub.f32 %v1329, %v1592
        %v1594 = vand.u32 %v1593, 4294901760
        %1595 = vmatpush.msra.mxu0 %v1594
        %v1596 = vand.u32 %v1328, 4294901760
        %v1597 = vsub.f32 %v1328, %v1596
        %v1598 = vand.u32 %v1597, 4294901760
        %1599 = vmatpush.msra.mxu0 %v1598
        %v1600 = vand.u32 %v1327, 4294901760
        %v1601 = vsub.f32 %v1327, %v1600
        %v1602 = vand.u32 %v1601, 4294901760
        %1603 = vmatpush.msra.mxu0 %v1602
        %v1604 = vand.u32 %v1326, 4294901760
        %v1605 = vsub.f32 %v1326, %v1604
        %v1606 = vand.u32 %v1605, 4294901760
        %1607 = vmatpush.msra.mxu0 %v1606
        %v1608 = vand.u32 %v1325, 4294901760
        %v1609 = vsub.f32 %v1325, %v1608
        %v1610 = vand.u32 %v1609, 4294901760
        %1611 = vmatpush.msra.mxu0 %v1610
        %v1612 = vand.u32 %v1324, 4294901760
        %v1613 = vsub.f32 %v1324, %v1612
        %v1614 = vand.u32 %v1613, 4294901760
        %1615 = vmatpush.msra.mxu0 %v1614
        %v1616 = vand.u32 %v1333, 4294901760
        %1617 = vmatmul.f32.gmra.mxu0 %v1616
        %v1618 = vpop.f32.mrf.mxu0
        %v1619 = vadd.f32 %v1556, %v1618
        %v1620 = vand.u32 %v1336, 4294901760
        %1621 = vmatmul.f32.gmra.mxu0 %v1620
        %v1622 = vpop.f32.mrf.mxu0
        %v1623 = vadd.f32 %v1562, %v1622
        %v1624 = vand.u32 %v1339, 4294901760
        %1625 = vmatmul.f32.gmra.mxu0 %v1624
        %v1626 = vpop.f32.mrf.mxu0
        %v1627 = vadd.f32 %v1568, %v1626
        %v1628 = vand.u32 %v1342, 4294901760
        %1629 = vmatmul.f32.gmra.mxu0 %v1628
        %v1630 = vpop.f32.mrf.mxu0
        %v1631 = vadd.f32 %v1574, %v1630
        %1632 = vdwg.mxu0
        %1633 = vmatpush.msra.mxu0 0.0
        %1634 = vmatpush.msra.mxu0 0.0
        %1635 = vmatpush.msra.mxu0 0.0
        %1636 = vmatpush.msra.mxu0 0.0
        %1637 = vmatpush.msra.mxu0 0.0
        %1638 = vmatpush.msra.mxu0 0.0
        %1639 = vmatpush.msra.mxu0 0.0
        %1640 = vmatpush.msra.mxu0 0.0
        %v1641 = vand.u32 %v1331, 4294901760
        %1642 = vmatpush.msra.mxu0 %v1641
        %v1643 = vand.u32 %v1330, 4294901760
        %1644 = vmatpush.msra.mxu0 %v1643
        %v1645 = vand.u32 %v1329, 4294901760
        %1646 = vmatpush.msra.mxu0 %v1645
        %v1647 = vand.u32 %v1328, 4294901760
        %1648 = vmatpush.msra.mxu0 %v1647
        %v1649 = vand.u32 %v1327, 4294901760
        %1650 = vmatpush.msra.mxu0 %v1649
        %v1651 = vand.u32 %v1326, 4294901760
        %1652 = vmatpush.msra.mxu0 %v1651
        %v1653 = vand.u32 %v1325, 4294901760
        %1654 = vmatpush.msra.mxu0 %v1653
        %v1655 = vand.u32 %v1324, 4294901760
        %1656 = vmatpush.msra.mxu0 %v1655
        %v1657 = vand.u32 %v1333, 4294901760
        %1658 = vmatmul.f32.gmra.mxu0 %v1657
        %v1659 = vpop.f32.mrf.mxu0
        %v1660 = vadd.f32 %v1619, %v1659
        %v1661 = vand.u32 %v1336, 4294901760
        %1662 = vmatmul.f32.gmra.mxu0 %v1661
        %v1663 = vpop.f32.mrf.mxu0
        %v1664 = vadd.f32 %v1623, %v1663
        %v1665 = vand.u32 %v1339, 4294901760
        %1666 = vmatmul.f32.gmra.mxu0 %v1665
        %v1667 = vpop.f32.mrf.mxu0
        %v1668 = vadd.f32 %v1627, %v1667
        %v1669 = vand.u32 %v1342, 4294901760
        %1670 = vmatmul.f32.gmra.mxu0 %v1669
        %v1671 = vpop.f32.mrf.mxu0
        %v1672 = vadd.f32 %v1631, %v1671
        %1673 = vdwg.mxu0
        %v1675 = vsel %vm627, %v956, 0
        %v1678 = vsel %vm627, %v960, 0
        %v1681 = vsel %vm627, %v964, 0
        %v1684 = vsel %vm627, %v968, 0
        %1686 = vmatpush.msra.mxu0 0.0
        %1687 = vmatpush.msra.mxu0 0.0
        %1688 = vmatpush.msra.mxu0 0.0
        %1689 = vmatpush.msra.mxu0 0.0
        %1690 = vmatpush.msra.mxu0 0.0
        %1691 = vmatpush.msra.mxu0 0.0
        %1692 = vmatpush.msra.mxu0 0.0
        %1693 = vmatpush.msra.mxu0 0.0
        %v1694 = vand.u32 %v1323, 4294901760
        %1695 = vmatpush.msra.mxu0 %v1694
        %v1696 = vand.u32 %v1322, 4294901760
        %1697 = vmatpush.msra.mxu0 %v1696
        %v1698 = vand.u32 %v1321, 4294901760
        %1699 = vmatpush.msra.mxu0 %v1698
        %v1700 = vand.u32 %v1320, 4294901760
        %1701 = vmatpush.msra.mxu0 %v1700
        %v1702 = vand.u32 %v1319, 4294901760
        %1703 = vmatpush.msra.mxu0 %v1702
        %v1704 = vand.u32 %v1318, 4294901760
        %1705 = vmatpush.msra.mxu0 %v1704
        %v1706 = vand.u32 %v1317, 4294901760
        %1707 = vmatpush.msra.mxu0 %v1706
        %v1708 = vand.u32 %v1316, 4294901760
        %1709 = vmatpush.msra.mxu0 %v1708
        %v1710 = vand.u32 %v1675, 4294901760
        %v1711 = vsub.f32 %v1675, %v1710
        %v1712 = vand.u32 %v1711, 4294901760
        %v1713 = vsub.f32 %v1711, %v1712
        %v1714 = vand.u32 %v1713, 4294901760
        %1715 = vmatmul.f32.gmra.mxu0 %v1714
        %v1716 = vpop.f32.mrf.mxu0
        %v1717 = vadd.f32 %v1660, %v1716
        %v1718 = vand.u32 %v1678, 4294901760
        %v1719 = vsub.f32 %v1678, %v1718
        %v1720 = vand.u32 %v1719, 4294901760
        %v1721 = vsub.f32 %v1719, %v1720
        %v1722 = vand.u32 %v1721, 4294901760
        %1723 = vmatmul.f32.gmra.mxu0 %v1722
        %v1724 = vpop.f32.mrf.mxu0
        %v1725 = vadd.f32 %v1664, %v1724
        %v1726 = vand.u32 %v1681, 4294901760
        %v1727 = vsub.f32 %v1681, %v1726
        %v1728 = vand.u32 %v1727, 4294901760
        %v1729 = vsub.f32 %v1727, %v1728
        %v1730 = vand.u32 %v1729, 4294901760
        %1731 = vmatmul.f32.gmra.mxu0 %v1730
        %v1732 = vpop.f32.mrf.mxu0
        %v1733 = vadd.f32 %v1668, %v1732
        %v1734 = vand.u32 %v1684, 4294901760
        %v1735 = vsub.f32 %v1684, %v1734
        %v1736 = vand.u32 %v1735, 4294901760
        %v1737 = vsub.f32 %v1735, %v1736
        %v1738 = vand.u32 %v1737, 4294901760
        %1739 = vmatmul.f32.gmra.mxu0 %v1738
        %v1740 = vpop.f32.mrf.mxu0
        %v1741 = vadd.f32 %v1672, %v1740
        %1742 = vdwg.mxu0
        %1743 = vmatpush.msra.mxu0 0.0
        %1744 = vmatpush.msra.mxu0 0.0
        %1745 = vmatpush.msra.mxu0 0.0
        %1746 = vmatpush.msra.mxu0 0.0
        %1747 = vmatpush.msra.mxu0 0.0
        %1748 = vmatpush.msra.mxu0 0.0
        %1749 = vmatpush.msra.mxu0 0.0
        %1750 = vmatpush.msra.mxu0 0.0
        %v1751 = vand.u32 %v1323, 4294901760
        %v1752 = vsub.f32 %v1323, %v1751
        %v1753 = vand.u32 %v1752, 4294901760
        %v1754 = vsub.f32 %v1752, %v1753
        %v1755 = vand.u32 %v1754, 4294901760
        %1756 = vmatpush.msra.mxu0 %v1755
        %v1757 = vand.u32 %v1322, 4294901760
        %v1758 = vsub.f32 %v1322, %v1757
        %v1759 = vand.u32 %v1758, 4294901760
        %v1760 = vsub.f32 %v1758, %v1759
        %v1761 = vand.u32 %v1760, 4294901760
        %1762 = vmatpush.msra.mxu0 %v1761
        %v1763 = vand.u32 %v1321, 4294901760
        %v1764 = vsub.f32 %v1321, %v1763
        %v1765 = vand.u32 %v1764, 4294901760
        %v1766 = vsub.f32 %v1764, %v1765
        %v1767 = vand.u32 %v1766, 4294901760
        %1768 = vmatpush.msra.mxu0 %v1767
        %v1769 = vand.u32 %v1320, 4294901760
        %v1770 = vsub.f32 %v1320, %v1769
        %v1771 = vand.u32 %v1770, 4294901760
        %v1772 = vsub.f32 %v1770, %v1771
        %v1773 = vand.u32 %v1772, 4294901760
        %1774 = vmatpush.msra.mxu0 %v1773
        %v1775 = vand.u32 %v1319, 4294901760
        %v1776 = vsub.f32 %v1319, %v1775
        %v1777 = vand.u32 %v1776, 4294901760
        %v1778 = vsub.f32 %v1776, %v1777
        %v1779 = vand.u32 %v1778, 4294901760
        %1780 = vmatpush.msra.mxu0 %v1779
        %v1781 = vand.u32 %v1318, 4294901760
        %v1782 = vsub.f32 %v1318, %v1781
        %v1783 = vand.u32 %v1782, 4294901760
        %v1784 = vsub.f32 %v1782, %v1783
        %v1785 = vand.u32 %v1784, 4294901760
        %1786 = vmatpush.msra.mxu0 %v1785
        %v1787 = vand.u32 %v1317, 4294901760
        %v1788 = vsub.f32 %v1317, %v1787
        %v1789 = vand.u32 %v1788, 4294901760
        %v1790 = vsub.f32 %v1788, %v1789
        %v1791 = vand.u32 %v1790, 4294901760
        %1792 = vmatpush.msra.mxu0 %v1791
        %v1793 = vand.u32 %v1316, 4294901760
        %v1794 = vsub.f32 %v1316, %v1793
        %v1795 = vand.u32 %v1794, 4294901760
        %v1796 = vsub.f32 %v1794, %v1795
        %v1797 = vand.u32 %v1796, 4294901760
        %1798 = vmatpush.msra.mxu0 %v1797
        %v1799 = vand.u32 %v1675, 4294901760
        %1800 = vmatmul.f32.gmra.mxu0 %v1799
        %v1801 = vpop.f32.mrf.mxu0
        %v1802 = vadd.f32 %v1717, %v1801
        %v1803 = vand.u32 %v1678, 4294901760
        %1804 = vmatmul.f32.gmra.mxu0 %v1803
        %v1805 = vpop.f32.mrf.mxu0
        %v1806 = vadd.f32 %v1725, %v1805
        %v1807 = vand.u32 %v1681, 4294901760
        %1808 = vmatmul.f32.gmra.mxu0 %v1807
        %v1809 = vpop.f32.mrf.mxu0
        %v1810 = vadd.f32 %v1733, %v1809
        %v1811 = vand.u32 %v1684, 4294901760
        %1812 = vmatmul.f32.gmra.mxu0 %v1811
        %v1813 = vpop.f32.mrf.mxu0
        %v1814 = vadd.f32 %v1741, %v1813
        %1815 = vdwg.mxu0
        %1816 = vmatpush.msra.mxu0 0.0
        %1817 = vmatpush.msra.mxu0 0.0
        %1818 = vmatpush.msra.mxu0 0.0
        %1819 = vmatpush.msra.mxu0 0.0
        %1820 = vmatpush.msra.mxu0 0.0
        %1821 = vmatpush.msra.mxu0 0.0
        %1822 = vmatpush.msra.mxu0 0.0
        %1823 = vmatpush.msra.mxu0 0.0
        %v1824 = vand.u32 %v1323, 4294901760
        %v1825 = vsub.f32 %v1323, %v1824
        %1826 = vmatpush.msra.mxu0 %v1825
        %v1827 = vand.u32 %v1322, 4294901760
        %v1828 = vsub.f32 %v1322, %v1827
        %1829 = vmatpush.msra.mxu0 %v1828
        %v1830 = vand.u32 %v1321, 4294901760
        %v1831 = vsub.f32 %v1321, %v1830
        %1832 = vmatpush.msra.mxu0 %v1831
        %v1833 = vand.u32 %v1320, 4294901760
        %v1834 = vsub.f32 %v1320, %v1833
        %1835 = vmatpush.msra.mxu0 %v1834
        %v1836 = vand.u32 %v1319, 4294901760
        %v1837 = vsub.f32 %v1319, %v1836
        %1838 = vmatpush.msra.mxu0 %v1837
        %v1839 = vand.u32 %v1318, 4294901760
        %v1840 = vsub.f32 %v1318, %v1839
        %1841 = vmatpush.msra.mxu0 %v1840
        %v1842 = vand.u32 %v1317, 4294901760
        %v1843 = vsub.f32 %v1317, %v1842
        %1844 = vmatpush.msra.mxu0 %v1843
        %v1845 = vand.u32 %v1316, 4294901760
        %v1846 = vsub.f32 %v1316, %v1845
        %1847 = vmatpush.msra.mxu0 %v1846
        %v1848 = vand.u32 %v1675, 4294901760
        %v1849 = vsub.f32 %v1675, %v1848
        %1850 = vmatmul.f32.gmra.mxu0 %v1849
        %v1851 = vpop.f32.mrf.mxu0
        %v1852 = vadd.f32 %v1802, %v1851
        %v1853 = vand.u32 %v1678, 4294901760
        %v1854 = vsub.f32 %v1678, %v1853
        %1855 = vmatmul.f32.gmra.mxu0 %v1854
        %v1856 = vpop.f32.mrf.mxu0
        %v1857 = vadd.f32 %v1806, %v1856
        %v1858 = vand.u32 %v1681, 4294901760
        %v1859 = vsub.f32 %v1681, %v1858
        %1860 = vmatmul.f32.gmra.mxu0 %v1859
        %v1861 = vpop.f32.mrf.mxu0
        %v1862 = vadd.f32 %v1810, %v1861
        %v1863 = vand.u32 %v1684, 4294901760
        %v1864 = vsub.f32 %v1684, %v1863
        %1865 = vmatmul.f32.gmra.mxu0 %v1864
        %v1866 = vpop.f32.mrf.mxu0
        %v1867 = vadd.f32 %v1814, %v1866
        %1868 = vdwg.mxu0
        %1869 = vmatpush.msra.mxu0 0.0
        %1870 = vmatpush.msra.mxu0 0.0
        %1871 = vmatpush.msra.mxu0 0.0
        %1872 = vmatpush.msra.mxu0 0.0
        %1873 = vmatpush.msra.mxu0 0.0
        %1874 = vmatpush.msra.mxu0 0.0
        %1875 = vmatpush.msra.mxu0 0.0
        %1876 = vmatpush.msra.mxu0 0.0
        %v1877 = vand.u32 %v1323, 4294901760
        %1878 = vmatpush.msra.mxu0 %v1877
        %v1879 = vand.u32 %v1322, 4294901760
        %1880 = vmatpush.msra.mxu0 %v1879
        %v1881 = vand.u32 %v1321, 4294901760
        %1882 = vmatpush.msra.mxu0 %v1881
        %v1883 = vand.u32 %v1320, 4294901760
        %1884 = vmatpush.msra.mxu0 %v1883
        %v1885 = vand.u32 %v1319, 4294901760
        %1886 = vmatpush.msra.mxu0 %v1885
        %v1887 = vand.u32 %v1318, 4294901760
        %1888 = vmatpush.msra.mxu0 %v1887
        %v1889 = vand.u32 %v1317, 4294901760
        %1890 = vmatpush.msra.mxu0 %v1889
        %v1891 = vand.u32 %v1316, 4294901760
        %1892 = vmatpush.msra.mxu0 %v1891
        %v1893 = vand.u32 %v1675, 4294901760
        %v1894 = vsub.f32 %v1675, %v1893
        %v1895 = vand.u32 %v1894, 4294901760
        %1896 = vmatmul.f32.gmra.mxu0 %v1895
        %v1897 = vpop.f32.mrf.mxu0
        %v1898 = vadd.f32 %v1852, %v1897
        %v1899 = vand.u32 %v1678, 4294901760
        %v1900 = vsub.f32 %v1678, %v1899
        %v1901 = vand.u32 %v1900, 4294901760
        %1902 = vmatmul.f32.gmra.mxu0 %v1901
        %v1903 = vpop.f32.mrf.mxu0
        %v1904 = vadd.f32 %v1857, %v1903
        %v1905 = vand.u32 %v1681, 4294901760
        %v1906 = vsub.f32 %v1681, %v1905
        %v1907 = vand.u32 %v1906, 4294901760
        %1908 = vmatmul.f32.gmra.mxu0 %v1907
        %v1909 = vpop.f32.mrf.mxu0
        %v1910 = vadd.f32 %v1862, %v1909
        %v1911 = vand.u32 %v1684, 4294901760
        %v1912 = vsub.f32 %v1684, %v1911
        %v1913 = vand.u32 %v1912, 4294901760
        %1914 = vmatmul.f32.gmra.mxu0 %v1913
        %v1915 = vpop.f32.mrf.mxu0
        %v1916 = vadd.f32 %v1867, %v1915
        %1917 = vdwg.mxu0
        %1918 = vmatpush.msra.mxu0 0.0
        %1919 = vmatpush.msra.mxu0 0.0
        %1920 = vmatpush.msra.mxu0 0.0
        %1921 = vmatpush.msra.mxu0 0.0
        %1922 = vmatpush.msra.mxu0 0.0
        %1923 = vmatpush.msra.mxu0 0.0
        %1924 = vmatpush.msra.mxu0 0.0
        %1925 = vmatpush.msra.mxu0 0.0
        %v1926 = vand.u32 %v1323, 4294901760
        %v1927 = vsub.f32 %v1323, %v1926
        %v1928 = vand.u32 %v1927, 4294901760
        %1929 = vmatpush.msra.mxu0 %v1928
        %v1930 = vand.u32 %v1322, 4294901760
        %v1931 = vsub.f32 %v1322, %v1930
        %v1932 = vand.u32 %v1931, 4294901760
        %1933 = vmatpush.msra.mxu0 %v1932
        %v1934 = vand.u32 %v1321, 4294901760
        %v1935 = vsub.f32 %v1321, %v1934
        %v1936 = vand.u32 %v1935, 4294901760
        %1937 = vmatpush.msra.mxu0 %v1936
        %v1938 = vand.u32 %v1320, 4294901760
        %v1939 = vsub.f32 %v1320, %v1938
        %v1940 = vand.u32 %v1939, 4294901760
        %1941 = vmatpush.msra.mxu0 %v1940
        %v1942 = vand.u32 %v1319, 4294901760
        %v1943 = vsub.f32 %v1319, %v1942
        %v1944 = vand.u32 %v1943, 4294901760
        %1945 = vmatpush.msra.mxu0 %v1944
        %v1946 = vand.u32 %v1318, 4294901760
        %v1947 = vsub.f32 %v1318, %v1946
        %v1948 = vand.u32 %v1947, 4294901760
        %1949 = vmatpush.msra.mxu0 %v1948
        %v1950 = vand.u32 %v1317, 4294901760
        %v1951 = vsub.f32 %v1317, %v1950
        %v1952 = vand.u32 %v1951, 4294901760
        %1953 = vmatpush.msra.mxu0 %v1952
        %v1954 = vand.u32 %v1316, 4294901760
        %v1955 = vsub.f32 %v1316, %v1954
        %v1956 = vand.u32 %v1955, 4294901760
        %1957 = vmatpush.msra.mxu0 %v1956
        %v1958 = vand.u32 %v1675, 4294901760
        %1959 = vmatmul.f32.gmra.mxu0 %v1958
        %v1960 = vpop.f32.mrf.mxu0
        %v1961 = vadd.f32 %v1898, %v1960
        %v1962 = vand.u32 %v1678, 4294901760
        %1963 = vmatmul.f32.gmra.mxu0 %v1962
        %v1964 = vpop.f32.mrf.mxu0
        %v1965 = vadd.f32 %v1904, %v1964
        %v1966 = vand.u32 %v1681, 4294901760
        %1967 = vmatmul.f32.gmra.mxu0 %v1966
        %v1968 = vpop.f32.mrf.mxu0
        %v1969 = vadd.f32 %v1910, %v1968
        %v1970 = vand.u32 %v1684, 4294901760
        %1971 = vmatmul.f32.gmra.mxu0 %v1970
        %v1972 = vpop.f32.mrf.mxu0
        %v1973 = vadd.f32 %v1916, %v1972
        %1974 = vdwg.mxu0
        %1975 = vmatpush.msra.mxu0 0.0
        %1976 = vmatpush.msra.mxu0 0.0
        %1977 = vmatpush.msra.mxu0 0.0
        %1978 = vmatpush.msra.mxu0 0.0
        %1979 = vmatpush.msra.mxu0 0.0
        %1980 = vmatpush.msra.mxu0 0.0
        %1981 = vmatpush.msra.mxu0 0.0
        %1982 = vmatpush.msra.mxu0 0.0
        %v1983 = vand.u32 %v1323, 4294901760
        %1984 = vmatpush.msra.mxu0 %v1983
        %v1985 = vand.u32 %v1322, 4294901760
        %1986 = vmatpush.msra.mxu0 %v1985
        %v1987 = vand.u32 %v1321, 4294901760
        %1988 = vmatpush.msra.mxu0 %v1987
        %v1989 = vand.u32 %v1320, 4294901760
        %1990 = vmatpush.msra.mxu0 %v1989
        %v1991 = vand.u32 %v1319, 4294901760
        %1992 = vmatpush.msra.mxu0 %v1991
        %v1993 = vand.u32 %v1318, 4294901760
        %1994 = vmatpush.msra.mxu0 %v1993
        %v1995 = vand.u32 %v1317, 4294901760
        %1996 = vmatpush.msra.mxu0 %v1995
        %v1997 = vand.u32 %v1316, 4294901760
        %1998 = vmatpush.msra.mxu0 %v1997
        %v1999 = vand.u32 %v1675, 4294901760
        %2000 = vmatmul.f32.gmra.mxu0 %v1999
        %v2001 = vpop.f32.mrf.mxu0
        %v2002 = vadd.f32 %v1961, %v2001
        %v2003 = vand.u32 %v1678, 4294901760
        %2004 = vmatmul.f32.gmra.mxu0 %v2003
        %v2005 = vpop.f32.mrf.mxu0
        %v2006 = vadd.f32 %v1965, %v2005
        %v2007 = vand.u32 %v1681, 4294901760
        %2008 = vmatmul.f32.gmra.mxu0 %v2007
        %v2009 = vpop.f32.mrf.mxu0
        %v2010 = vadd.f32 %v1969, %v2009
        %v2011 = vand.u32 %v1684, 4294901760
        %2012 = vmatmul.f32.gmra.mxu0 %v2011
        %v2013 = vpop.f32.mrf.mxu0
        %v2014 = vadd.f32 %v1973, %v2013
        %2015 = vdwg.mxu0
        %v2016 = vmul.f32 %v2002, 3.0
        %v2017 = vmul.f32 %v2006, 3.0
        %v2018 = vmul.f32 %v2010, 3.0
        %v2019 = vmul.f32 %v2014, 3.0
        %s2020 = sld [smem:[#allocation5]]
        %s2021 = sld [smem:[#allocation5 + $0x1]]
        %s2022 = sadd.f32 %s2020, %s2021
        %s2023 = sld [smem:[#allocation5 + $0x2]]
        %s2024 = sadd.f32 %s2022, %s2023
        %v2025 = vstv %s2024
        %v2026 = vadd.f32 %v2016, %v2025
        %v2027 = vadd.f32 %v2017, %v2025
        %v2028 = vadd.f32 %v2018, %v2025
        %v2029 = vadd.f32 %v2019, %v2025
        %v2030 = vld [vmem:[%s6] sm:$0xff]
        %vm2031 = vcmask 261120
        %v2033 = vsel %vm2031, %v2030, 0
        %2035 = vmatpush.msra.mxu0 0.0
        %2036 = vmatpush.msra.mxu0 0.0
        %2037 = vmatpush.msra.mxu0 0.0
        %2038 = vmatpush.msra.mxu0 0.0
        %2039 = vmatpush.msra.mxu0 0.0
        %2040 = vmatpush.msra.mxu0 0.0
        %2041 = vmatpush.msra.mxu0 0.0
        %2042 = vmatpush.msra.mxu0 0.0
        %2043 = vmatpush.msra.mxu0 0.0
        %2044 = vmatpush.msra.mxu0 0.0
        %2045 = vmatpush.msra.mxu0 0.0
        %2046 = vmatpush.msra.mxu0 0.0
        %v2047 = vand.u32 %v2029, 4294901760
        %2048 = vmatpush.msra.mxu0 %v2047
        %v2049 = vand.u32 %v2028, 4294901760
        %2050 = vmatpush.msra.mxu0 %v2049
        %v2051 = vand.u32 %v2027, 4294901760
        %2052 = vmatpush.msra.mxu0 %v2051
        %v2053 = vand.u32 %v2026, 4294901760
        %2054 = vmatpush.msra.mxu0 %v2053
        %v2055 = vand.u32 %v2033, 4294901760
        %v2056 = vsub.f32 %v2033, %v2055
        %v2057 = vand.u32 %v2056, 4294901760
        %v2058 = vsub.f32 %v2056, %v2057
        %v2059 = vand.u32 %v2058, 4294901760
        %2060 = vmatmul.f32.gmra.mxu0 %v2059
        %v2061 = vpop.f32.mrf.mxu0
        %v2062 = vadd.f32 0.0, %v2061
        %2063 = vdwg.mxu0
        %2064 = vmatpush.msra.mxu0 0.0
        %2065 = vmatpush.msra.mxu0 0.0
        %2066 = vmatpush.msra.mxu0 0.0
        %2067 = vmatpush.msra.mxu0 0.0
        %2068 = vmatpush.msra.mxu0 0.0
        %2069 = vmatpush.msra.mxu0 0.0
        %2070 = vmatpush.msra.mxu0 0.0
        %2071 = vmatpush.msra.mxu0 0.0
        %2072 = vmatpush.msra.mxu0 0.0
        %2073 = vmatpush.msra.mxu0 0.0
        %2074 = vmatpush.msra.mxu0 0.0
        %2075 = vmatpush.msra.mxu0 0.0
        %v2076 = vand.u32 %v2029, 4294901760
        %v2077 = vsub.f32 %v2029, %v2076
        %v2078 = vand.u32 %v2077, 4294901760
        %v2079 = vsub.f32 %v2077, %v2078
        %v2080 = vand.u32 %v2079, 4294901760
        %2081 = vmatpush.msra.mxu0 %v2080
        %v2082 = vand.u32 %v2028, 4294901760
        %v2083 = vsub.f32 %v2028, %v2082
        %v2084 = vand.u32 %v2083, 4294901760
        %v2085 = vsub.f32 %v2083, %v2084
        %v2086 = vand.u32 %v2085, 4294901760
        %2087 = vmatpush.msra.mxu0 %v2086
        %v2088 = vand.u32 %v2027, 4294901760
        %v2089 = vsub.f32 %v2027, %v2088
        %v2090 = vand.u32 %v2089, 4294901760
        %v2091 = vsub.f32 %v2089, %v2090
        %v2092 = vand.u32 %v2091, 4294901760
        %2093 = vmatpush.msra.mxu0 %v2092
        %v2094 = vand.u32 %v2026, 4294901760
        %v2095 = vsub.f32 %v2026, %v2094
        %v2096 = vand.u32 %v2095, 4294901760
        %v2097 = vsub.f32 %v2095, %v2096
        %v2098 = vand.u32 %v2097, 4294901760
        %2099 = vmatpush.msra.mxu0 %v2098
        %v2100 = vand.u32 %v2033, 4294901760
        %2101 = vmatmul.f32.gmra.mxu0 %v2100
        %v2102 = vpop.f32.mrf.mxu0
        %v2103 = vadd.f32 %v2062, %v2102
        %2104 = vdwg.mxu0
        %2105 = vmatpush.msra.mxu0 0.0
        %2106 = vmatpush.msra.mxu0 0.0
        %2107 = vmatpush.msra.mxu0 0.0
        %2108 = vmatpush.msra.mxu0 0.0
        %2109 = vmatpush.msra.mxu0 0.0
        %2110 = vmatpush.msra.mxu0 0.0
        %2111 = vmatpush.msra.mxu0 0.0
        %2112 = vmatpush.msra.mxu0 0.0
        %2113 = vmatpush.msra.mxu0 0.0
        %2114 = vmatpush.msra.mxu0 0.0
        %2115 = vmatpush.msra.mxu0 0.0
        %2116 = vmatpush.msra.mxu0 0.0
        %v2117 = vand.u32 %v2029, 4294901760
        %v2118 = vsub.f32 %v2029, %v2117
        %2119 = vmatpush.msra.mxu0 %v2118
        %v2120 = vand.u32 %v2028, 4294901760
        %v2121 = vsub.f32 %v2028, %v2120
        %2122 = vmatpush.msra.mxu0 %v2121
        %v2123 = vand.u32 %v2027, 4294901760
        %v2124 = vsub.f32 %v2027, %v2123
        %2125 = vmatpush.msra.mxu0 %v2124
        %v2126 = vand.u32 %v2026, 4294901760
        %v2127 = vsub.f32 %v2026, %v2126
        %2128 = vmatpush.msra.mxu0 %v2127
        %v2129 = vand.u32 %v2033, 4294901760
        %v2130 = vsub.f32 %v2033, %v2129
        %2131 = vmatmul.f32.gmra.mxu0 %v2130
        %v2132 = vpop.f32.mrf.mxu0
        %v2133 = vadd.f32 %v2103, %v2132
        %2134 = vdwg.mxu0
        %2135 = vmatpush.msra.mxu0 0.0
        %2136 = vmatpush.msra.mxu0 0.0
        %2137 = vmatpush.msra.mxu0 0.0
        %2138 = vmatpush.msra.mxu0 0.0
        %2139 = vmatpush.msra.mxu0 0.0
        %2140 = vmatpush.msra.mxu0 0.0
        %2141 = vmatpush.msra.mxu0 0.0
        %2142 = vmatpush.msra.mxu0 0.0
        %2143 = vmatpush.msra.mxu0 0.0
        %2144 = vmatpush.msra.mxu0 0.0
        %2145 = vmatpush.msra.mxu0 0.0
        %2146 = vmatpush.msra.mxu0 0.0
        %v2147 = vand.u32 %v2029, 4294901760
        %2148 = vmatpush.msra.mxu0 %v2147
        %v2149 = vand.u32 %v2028, 4294901760
        %2150 = vmatpush.msra.mxu0 %v2149
        %v2151 = vand.u32 %v2027, 4294901760
        %2152 = vmatpush.msra.mxu0 %v2151
        %v2153 = vand.u32 %v2026, 4294901760
        %2154 = vmatpush.msra.mxu0 %v2153
        %v2155 = vand.u32 %v2033, 4294901760
        %v2156 = vsub.f32 %v2033, %v2155
        %v2157 = vand.u32 %v2156, 4294901760
        %2158 = vmatmul.f32.gmra.mxu0 %v2157
        %v2159 = vpop.f32.mrf.mxu0
        %v2160 = vadd.f32 %v2133, %v2159
        %2161 = vdwg.mxu0
        %2162 = vmatpush.msra.mxu0 0.0
        %2163 = vmatpush.msra.mxu0 0.0
        %2164 = vmatpush.msra.mxu0 0.0
        %2165 = vmatpush.msra.mxu0 0.0
        %2166 = vmatpush.msra.mxu0 0.0
        %2167 = vmatpush.msra.mxu0 0.0
        %2168 = vmatpush.msra.mxu0 0.0
        %2169 = vmatpush.msra.mxu0 0.0
        %2170 = vmatpush.msra.mxu0 0.0
        %2171 = vmatpush.msra.mxu0 0.0
        %2172 = vmatpush.msra.mxu0 0.0
        %2173 = vmatpush.msra.mxu0 0.0
        %v2174 = vand.u32 %v2029, 4294901760
        %v2175 = vsub.f32 %v2029, %v2174
        %v2176 = vand.u32 %v2175, 4294901760
        %2177 = vmatpush.msra.mxu0 %v2176
        %v2178 = vand.u32 %v2028, 4294901760
        %v2179 = vsub.f32 %v2028, %v2178
        %v2180 = vand.u32 %v2179, 4294901760
        %2181 = vmatpush.msra.mxu0 %v2180
        %v2182 = vand.u32 %v2027, 4294901760
        %v2183 = vsub.f32 %v2027, %v2182
        %v2184 = vand.u32 %v2183, 4294901760
        %2185 = vmatpush.msra.mxu0 %v2184
        %v2186 = vand.u32 %v2026, 4294901760
        %v2187 = vsub.f32 %v2026, %v2186
        %v2188 = vand.u32 %v2187, 4294901760
        %2189 = vmatpush.msra.mxu0 %v2188
        %v2190 = vand.u32 %v2033, 4294901760
        %2191 = vmatmul.f32.gmra.mxu0 %v2190
        %v2192 = vpop.f32.mrf.mxu0
        %v2193 = vadd.f32 %v2160, %v2192
        %2194 = vdwg.mxu0
        %2195 = vmatpush.msra.mxu0 0.0
        %2196 = vmatpush.msra.mxu0 0.0
        %2197 = vmatpush.msra.mxu0 0.0
        %2198 = vmatpush.msra.mxu0 0.0
        %2199 = vmatpush.msra.mxu0 0.0
        %2200 = vmatpush.msra.mxu0 0.0
        %2201 = vmatpush.msra.mxu0 0.0
        %2202 = vmatpush.msra.mxu0 0.0
        %2203 = vmatpush.msra.mxu0 0.0
        %2204 = vmatpush.msra.mxu0 0.0
        %2205 = vmatpush.msra.mxu0 0.0
        %2206 = vmatpush.msra.mxu0 0.0
        %v2207 = vand.u32 %v2029, 4294901760
        %2208 = vmatpush.msra.mxu0 %v2207
        %v2209 = vand.u32 %v2028, 4294901760
        %2210 = vmatpush.msra.mxu0 %v2209
        %v2211 = vand.u32 %v2027, 4294901760
        %2212 = vmatpush.msra.mxu0 %v2211
        %v2213 = vand.u32 %v2026, 4294901760
        %2214 = vmatpush.msra.mxu0 %v2213
        %v2215 = vand.u32 %v2033, 4294901760
        %2216 = vmatmul.f32.gmra.mxu0 %v2215
        %v2217 = vpop.f32.mrf.mxu0
        %v2218 = vadd.f32 %v2193, %v2217
        %2219 = vdwg.mxu0
        %v2220 = vld [vmem:[%s5] sm:$0xff]
        %v2222 = vsel %vm2031, %v2220, 0
        %2224 = vmatpush.msra.mxu0 0.0
        %2225 = vmatpush.msra.mxu0 0.0
        %2226 = vmatpush.msra.mxu0 0.0
        %2227 = vmatpush.msra.mxu0 0.0
        %2228 = vmatpush.msra.mxu0 0.0
        %2229 = vmatpush.msra.mxu0 0.0
        %2230 = vmatpush.msra.mxu0 0.0
        %2231 = vmatpush.msra.mxu0 0.0
        %2232 = vmatpush.msra.mxu0 0.0
        %2233 = vmatpush.msra.mxu0 0.0
        %2234 = vmatpush.msra.mxu0 0.0
        %2235 = vmatpush.msra.mxu0 0.0
        %v2236 = vand.u32 %v2029, 4294901760
        %2237 = vmatpush.msra.mxu0 %v2236
        %v2238 = vand.u32 %v2028, 4294901760
        %2239 = vmatpush.msra.mxu0 %v2238
        %v2240 = vand.u32 %v2027, 4294901760
        %2241 = vmatpush.msra.mxu0 %v2240
        %v2242 = vand.u32 %v2026, 4294901760
        %2243 = vmatpush.msra.mxu0 %v2242
        %v2244 = vand.u32 %v2222, 4294901760
        %v2245 = vsub.f32 %v2222, %v2244
        %v2246 = vand.u32 %v2245, 4294901760
        %v2247 = vsub.f32 %v2245, %v2246
        %v2248 = vand.u32 %v2247, 4294901760
        %2249 = vmatmul.f32.gmra.mxu0 %v2248
        %v2250 = vpop.f32.mrf.mxu0
        %v2251 = vadd.f32 0.0, %v2250
        %2252 = vdwg.mxu0
        %2253 = vmatpush.msra.mxu0 0.0
        %2254 = vmatpush.msra.mxu0 0.0
        %2255 = vmatpush.msra.mxu0 0.0
        %2256 = vmatpush.msra.mxu0 0.0
        %2257 = vmatpush.msra.mxu0 0.0
        %2258 = vmatpush.msra.mxu0 0.0
        %2259 = vmatpush.msra.mxu0 0.0
        %2260 = vmatpush.msra.mxu0 0.0
        %2261 = vmatpush.msra.mxu0 0.0
        %2262 = vmatpush.msra.mxu0 0.0
        %2263 = vmatpush.msra.mxu0 0.0
        %2264 = vmatpush.msra.mxu0 0.0
        %v2265 = vand.u32 %v2029, 4294901760
        %v2266 = vsub.f32 %v2029, %v2265
        %v2267 = vand.u32 %v2266, 4294901760
        %v2268 = vsub.f32 %v2266, %v2267
        %v2269 = vand.u32 %v2268, 4294901760
        %2270 = vmatpush.msra.mxu0 %v2269
        %v2271 = vand.u32 %v2028, 4294901760
        %v2272 = vsub.f32 %v2028, %v2271
        %v2273 = vand.u32 %v2272, 4294901760
        %v2274 = vsub.f32 %v2272, %v2273
        %v2275 = vand.u32 %v2274, 4294901760
        %2276 = vmatpush.msra.mxu0 %v2275
        %v2277 = vand.u32 %v2027, 4294901760
        %v2278 = vsub.f32 %v2027, %v2277
        %v2279 = vand.u32 %v2278, 4294901760
        %v2280 = vsub.f32 %v2278, %v2279
        %v2281 = vand.u32 %v2280, 4294901760
        %2282 = vmatpush.msra.mxu0 %v2281
        %v2283 = vand.u32 %v2026, 4294901760
        %v2284 = vsub.f32 %v2026, %v2283
        %v2285 = vand.u32 %v2284, 4294901760
        %v2286 = vsub.f32 %v2284, %v2285
        %v2287 = vand.u32 %v2286, 4294901760
        %2288 = vmatpush.msra.mxu0 %v2287
        %v2289 = vand.u32 %v2222, 4294901760
        %2290 = vmatmul.f32.gmra.mxu0 %v2289
        %v2291 = vpop.f32.mrf.mxu0
        %v2292 = vadd.f32 %v2251, %v2291
        %2293 = vdwg.mxu0
        %2294 = vmatpush.msra.mxu0 0.0
        %2295 = vmatpush.msra.mxu0 0.0
        %2296 = vmatpush.msra.mxu0 0.0
        %2297 = vmatpush.msra.mxu0 0.0
        %2298 = vmatpush.msra.mxu0 0.0
        %2299 = vmatpush.msra.mxu0 0.0
        %2300 = vmatpush.msra.mxu0 0.0
        %2301 = vmatpush.msra.mxu0 0.0
        %2302 = vmatpush.msra.mxu0 0.0
        %2303 = vmatpush.msra.mxu0 0.0
        %2304 = vmatpush.msra.mxu0 0.0
        %2305 = vmatpush.msra.mxu0 0.0
        %v2306 = vand.u32 %v2029, 4294901760
        %v2307 = vsub.f32 %v2029, %v2306
        %2308 = vmatpush.msra.mxu0 %v2307
        %v2309 = vand.u32 %v2028, 4294901760
        %v2310 = vsub.f32 %v2028, %v2309
        %2311 = vmatpush.msra.mxu0 %v2310
        %v2312 = vand.u32 %v2027, 4294901760
        %v2313 = vsub.f32 %v2027, %v2312
        %2314 = vmatpush.msra.mxu0 %v2313
        %v2315 = vand.u32 %v2026, 4294901760
        %v2316 = vsub.f32 %v2026, %v2315
        %2317 = vmatpush.msra.mxu0 %v2316
        %v2318 = vand.u32 %v2222, 4294901760
        %v2319 = vsub.f32 %v2222, %v2318
        %2320 = vmatmul.f32.gmra.mxu0 %v2319
        %v2321 = vpop.f32.mrf.mxu0
        %v2322 = vadd.f32 %v2292, %v2321
        %2323 = vdwg.mxu0
        %2324 = vmatpush.msra.mxu0 0.0
        %2325 = vmatpush.msra.mxu0 0.0
        %2326 = vmatpush.msra.mxu0 0.0
        %2327 = vmatpush.msra.mxu0 0.0
        %2328 = vmatpush.msra.mxu0 0.0
        %2329 = vmatpush.msra.mxu0 0.0
        %2330 = vmatpush.msra.mxu0 0.0
        %2331 = vmatpush.msra.mxu0 0.0
        %2332 = vmatpush.msra.mxu0 0.0
        %2333 = vmatpush.msra.mxu0 0.0
        %2334 = vmatpush.msra.mxu0 0.0
        %2335 = vmatpush.msra.mxu0 0.0
        %v2336 = vand.u32 %v2029, 4294901760
        %2337 = vmatpush.msra.mxu0 %v2336
        %v2338 = vand.u32 %v2028, 4294901760
        %2339 = vmatpush.msra.mxu0 %v2338
        %v2340 = vand.u32 %v2027, 4294901760
        %2341 = vmatpush.msra.mxu0 %v2340
        %v2342 = vand.u32 %v2026, 4294901760
        %2343 = vmatpush.msra.mxu0 %v2342
        %v2344 = vand.u32 %v2222, 4294901760
        %v2345 = vsub.f32 %v2222, %v2344
        %v2346 = vand.u32 %v2345, 4294901760
        %2347 = vmatmul.f32.gmra.mxu0 %v2346
        %v2348 = vpop.f32.mrf.mxu0
        %v2349 = vadd.f32 %v2322, %v2348
        %2350 = vdwg.mxu0
        %2351 = vmatpush.msra.mxu0 0.0
        %2352 = vmatpush.msra.mxu0 0.0
        %2353 = vmatpush.msra.mxu0 0.0
        %2354 = vmatpush.msra.mxu0 0.0
        %2355 = vmatpush.msra.mxu0 0.0
        %2356 = vmatpush.msra.mxu0 0.0
        %2357 = vmatpush.msra.mxu0 0.0
        %2358 = vmatpush.msra.mxu0 0.0
        %2359 = vmatpush.msra.mxu0 0.0
        %2360 = vmatpush.msra.mxu0 0.0
        %2361 = vmatpush.msra.mxu0 0.0
        %2362 = vmatpush.msra.mxu0 0.0
        %v2363 = vand.u32 %v2029, 4294901760
        %v2364 = vsub.f32 %v2029, %v2363
        %v2365 = vand.u32 %v2364, 4294901760
        %2366 = vmatpush.msra.mxu0 %v2365
        %v2367 = vand.u32 %v2028, 4294901760
        %v2368 = vsub.f32 %v2028, %v2367
        %v2369 = vand.u32 %v2368, 4294901760
        %2370 = vmatpush.msra.mxu0 %v2369
        %v2371 = vand.u32 %v2027, 4294901760
        %v2372 = vsub.f32 %v2027, %v2371
        %v2373 = vand.u32 %v2372, 4294901760
        %2374 = vmatpush.msra.mxu0 %v2373
        %v2375 = vand.u32 %v2026, 4294901760
        %v2376 = vsub.f32 %v2026, %v2375
        %v2377 = vand.u32 %v2376, 4294901760
        %2378 = vmatpush.msra.mxu0 %v2377
        %v2379 = vand.u32 %v2222, 4294901760
        %2380 = vmatmul.f32.gmra.mxu0 %v2379
        %v2381 = vpop.f32.mrf.mxu0
        %v2382 = vadd.f32 %v2349, %v2381
        %2383 = vdwg.mxu0
        %2384 = vmatpush.msra.mxu0 0.0
        %2385 = vmatpush.msra.mxu0 0.0
        %2386 = vmatpush.msra.mxu0 0.0
        %2387 = vmatpush.msra.mxu0 0.0
        %2388 = vmatpush.msra.mxu0 0.0
        %2389 = vmatpush.msra.mxu0 0.0
        %2390 = vmatpush.msra.mxu0 0.0
        %2391 = vmatpush.msra.mxu0 0.0
        %2392 = vmatpush.msra.mxu0 0.0
        %2393 = vmatpush.msra.mxu0 0.0
        %2394 = vmatpush.msra.mxu0 0.0
        %2395 = vmatpush.msra.mxu0 0.0
        %v2396 = vand.u32 %v2029, 4294901760
        %2397 = vmatpush.msra.mxu0 %v2396
        %v2398 = vand.u32 %v2028, 4294901760
        %2399 = vmatpush.msra.mxu0 %v2398
        %v2400 = vand.u32 %v2027, 4294901760
        %2401 = vmatpush.msra.mxu0 %v2400
        %v2402 = vand.u32 %v2026, 4294901760
        %2403 = vmatpush.msra.mxu0 %v2402
        %v2404 = vand.u32 %v2222, 4294901760
        %2405 = vmatmul.f32.gmra.mxu0 %v2404
        %v2406 = vpop.f32.mrf.mxu0
        %v2407 = vadd.f32 %v2382, %v2406
        %2408 = vdwg.mxu0
        %v2409 = vld [vmem:[%s7] sm:$0xff]
        %v2410 = vld [vmem:[%s7 + $0x8] sm:$0xff]
        %v2411 = vld [vmem:[%s7 + $0x10] sm:$0xff]
        %v2412 = vld [vmem:[%s7 + $0x18] sm:$0xff]
        %v2413 = vld [vmem:[%s8] sm:$0xff]
        %v2414 = vld [vmem:[%s8 + $0x8] sm:$0xff]
        %v2415 = vld [vmem:[%s8 + $0x10] sm:$0xff]
        %v2416 = vld [vmem:[%s8 + $0x18] sm:$0xff]
        %v2418 = vsel %vm2031, %v2407, 0
        %2420 = vmatpush.msra.mxu0 0.0
        %2421 = vmatpush.msra.mxu0 0.0
        %2422 = vmatpush.msra.mxu0 0.0
        %2423 = vmatpush.msra.mxu0 0.0
        %2424 = vmatpush.msra.mxu0 0.0
        %2425 = vmatpush.msra.mxu0 0.0
        %2426 = vmatpush.msra.mxu0 0.0
        %2427 = vmatpush.msra.mxu0 0.0
        %2428 = vmatpush.msra.mxu0 0.0
        %2429 = vmatpush.msra.mxu0 0.0
        %2430 = vmatpush.msra.mxu0 0.0
        %2431 = vmatpush.msra.mxu0 0.0
        %v2432 = vand.u32 %v2416, 4294901760
        %2433 = vmatpush.msra.mxu0 %v2432
        %v2434 = vand.u32 %v2415, 4294901760
        %2435 = vmatpush.msra.mxu0 %v2434
        %v2436 = vand.u32 %v2414, 4294901760
        %2437 = vmatpush.msra.mxu0 %v2436
        %v2438 = vand.u32 %v2413, 4294901760
        %2439 = vmatpush.msra.mxu0 %v2438
        %v2440 = vand.u32 %v2418, 4294901760
        %v2441 = vsub.f32 %v2418, %v2440
        %v2442 = vand.u32 %v2441, 4294901760
        %v2443 = vsub.f32 %v2441, %v2442
        %v2444 = vand.u32 %v2443, 4294901760
        %2445 = vmatmul.f32.gmra.mxu0 %v2444
        %v2446 = vpop.f32.mrf.mxu0
        %v2447 = vadd.f32 0.0, %v2446
        %2448 = vdwg.mxu0
        %2449 = vmatpush.msra.mxu0 0.0
        %2450 = vmatpush.msra.mxu0 0.0
        %2451 = vmatpush.msra.mxu0 0.0
        %2452 = vmatpush.msra.mxu0 0.0
        %2453 = vmatpush.msra.mxu0 0.0
        %2454 = vmatpush.msra.mxu0 0.0
        %2455 = vmatpush.msra.mxu0 0.0
        %2456 = vmatpush.msra.mxu0 0.0
        %2457 = vmatpush.msra.mxu0 0.0
        %2458 = vmatpush.msra.mxu0 0.0
        %2459 = vmatpush.msra.mxu0 0.0
        %2460 = vmatpush.msra.mxu0 0.0
        %v2461 = vand.u32 %v2416, 4294901760
        %v2462 = vsub.f32 %v2416, %v2461
        %v2463 = vand.u32 %v2462, 4294901760
        %v2464 = vsub.f32 %v2462, %v2463
        %v2465 = vand.u32 %v2464, 4294901760
        %2466 = vmatpush.msra.mxu0 %v2465
        %v2467 = vand.u32 %v2415, 4294901760
        %v2468 = vsub.f32 %v2415, %v2467
        %v2469 = vand.u32 %v2468, 4294901760
        %v2470 = vsub.f32 %v2468, %v2469
        %v2471 = vand.u32 %v2470, 4294901760
        %2472 = vmatpush.msra.mxu0 %v2471
        %v2473 = vand.u32 %v2414, 4294901760
        %v2474 = vsub.f32 %v2414, %v2473
        %v2475 = vand.u32 %v2474, 4294901760
        %v2476 = vsub.f32 %v2474, %v2475
        %v2477 = vand.u32 %v2476, 4294901760
        %2478 = vmatpush.msra.mxu0 %v2477
        %v2479 = vand.u32 %v2413, 4294901760
        %v2480 = vsub.f32 %v2413, %v2479
        %v2481 = vand.u32 %v2480, 4294901760
        %v2482 = vsub.f32 %v2480, %v2481
        %v2483 = vand.u32 %v2482, 4294901760
        %2484 = vmatpush.msra.mxu0 %v2483
        %v2485 = vand.u32 %v2418, 4294901760
        %2486 = vmatmul.f32.gmra.mxu0 %v2485
        %v2487 = vpop.f32.mrf.mxu0
        %v2488 = vadd.f32 %v2447, %v2487
        %2489 = vdwg.mxu0
        %2490 = vmatpush.msra.mxu0 0.0
        %2491 = vmatpush.msra.mxu0 0.0
        %2492 = vmatpush.msra.mxu0 0.0
        %2493 = vmatpush.msra.mxu0 0.0
        %2494 = vmatpush.msra.mxu0 0.0
        %2495 = vmatpush.msra.mxu0 0.0
        %2496 = vmatpush.msra.mxu0 0.0
        %2497 = vmatpush.msra.mxu0 0.0
        %2498 = vmatpush.msra.mxu0 0.0
        %2499 = vmatpush.msra.mxu0 0.0
        %2500 = vmatpush.msra.mxu0 0.0
        %2501 = vmatpush.msra.mxu0 0.0
        %v2502 = vand.u32 %v2416, 4294901760
        %v2503 = vsub.f32 %v2416, %v2502
        %2504 = vmatpush.msra.mxu0 %v2503
        %v2505 = vand.u32 %v2415, 4294901760
        %v2506 = vsub.f32 %v2415, %v2505
        %2507 = vmatpush.msra.mxu0 %v2506
        %v2508 = vand.u32 %v2414, 4294901760
        %v2509 = vsub.f32 %v2414, %v2508
        %2510 = vmatpush.msra.mxu0 %v2509
        %v2511 = vand.u32 %v2413, 4294901760
        %v2512 = vsub.f32 %v2413, %v2511
        %2513 = vmatpush.msra.mxu0 %v2512
        %v2514 = vand.u32 %v2418, 4294901760
        %v2515 = vsub.f32 %v2418, %v2514
        %2516 = vmatmul.f32.gmra.mxu0 %v2515
        %v2517 = vpop.f32.mrf.mxu0
        %v2518 = vadd.f32 %v2488, %v2517
        %2519 = vdwg.mxu0
        %2520 = vmatpush.msra.mxu0 0.0
        %2521 = vmatpush.msra.mxu0 0.0
        %2522 = vmatpush.msra.mxu0 0.0
        %2523 = vmatpush.msra.mxu0 0.0
        %2524 = vmatpush.msra.mxu0 0.0
        %2525 = vmatpush.msra.mxu0 0.0
        %2526 = vmatpush.msra.mxu0 0.0
        %2527 = vmatpush.msra.mxu0 0.0
        %2528 = vmatpush.msra.mxu0 0.0
        %2529 = vmatpush.msra.mxu0 0.0
        %2530 = vmatpush.msra.mxu0 0.0
        %2531 = vmatpush.msra.mxu0 0.0
        %v2532 = vand.u32 %v2416, 4294901760
        %2533 = vmatpush.msra.mxu0 %v2532
        %v2534 = vand.u32 %v2415, 4294901760
        %2535 = vmatpush.msra.mxu0 %v2534
        %v2536 = vand.u32 %v2414, 4294901760
        %2537 = vmatpush.msra.mxu0 %v2536
        %v2538 = vand.u32 %v2413, 4294901760
        %2539 = vmatpush.msra.mxu0 %v2538
        %v2540 = vand.u32 %v2418, 4294901760
        %v2541 = vsub.f32 %v2418, %v2540
        %v2542 = vand.u32 %v2541, 4294901760
        %2543 = vmatmul.f32.gmra.mxu0 %v2542
        %v2544 = vpop.f32.mrf.mxu0
        %v2545 = vadd.f32 %v2518, %v2544
        %2546 = vdwg.mxu0
        %2547 = vmatpush.msra.mxu0 0.0
        %2548 = vmatpush.msra.mxu0 0.0
        %2549 = vmatpush.msra.mxu0 0.0
        %2550 = vmatpush.msra.mxu0 0.0
        %2551 = vmatpush.msra.mxu0 0.0
        %2552 = vmatpush.msra.mxu0 0.0
        %2553 = vmatpush.msra.mxu0 0.0
        %2554 = vmatpush.msra.mxu0 0.0
        %2555 = vmatpush.msra.mxu0 0.0
        %2556 = vmatpush.msra.mxu0 0.0
        %2557 = vmatpush.msra.mxu0 0.0
        %2558 = vmatpush.msra.mxu0 0.0
        %v2559 = vand.u32 %v2416, 4294901760
        %v2560 = vsub.f32 %v2416, %v2559
        %v2561 = vand.u32 %v2560, 4294901760
        %2562 = vmatpush.msra.mxu0 %v2561
        %v2563 = vand.u32 %v2415, 4294901760
        %v2564 = vsub.f32 %v2415, %v2563
        %v2565 = vand.u32 %v2564, 4294901760
        %2566 = vmatpush.msra.mxu0 %v2565
        %v2567 = vand.u32 %v2414, 4294901760
        %v2568 = vsub.f32 %v2414, %v2567
        %v2569 = vand.u32 %v2568, 4294901760
        %2570 = vmatpush.msra.mxu0 %v2569
        %v2571 = vand.u32 %v2413, 4294901760
        %v2572 = vsub.f32 %v2413, %v2571
        %v2573 = vand.u32 %v2572, 4294901760
        %2574 = vmatpush.msra.mxu0 %v2573
        %v2575 = vand.u32 %v2418, 4294901760
        %2576 = vmatmul.f32.gmra.mxu0 %v2575
        %v2577 = vpop.f32.mrf.mxu0
        %v2578 = vadd.f32 %v2545, %v2577
        %2579 = vdwg.mxu0
        %2580 = vmatpush.msra.mxu0 0.0
        %2581 = vmatpush.msra.mxu0 0.0
        %2582 = vmatpush.msra.mxu0 0.0
        %2583 = vmatpush.msra.mxu0 0.0
        %2584 = vmatpush.msra.mxu0 0.0
        %2585 = vmatpush.msra.mxu0 0.0
        %2586 = vmatpush.msra.mxu0 0.0
        %2587 = vmatpush.msra.mxu0 0.0
        %2588 = vmatpush.msra.mxu0 0.0
        %2589 = vmatpush.msra.mxu0 0.0
        %2590 = vmatpush.msra.mxu0 0.0
        %2591 = vmatpush.msra.mxu0 0.0
        %v2592 = vand.u32 %v2416, 4294901760
        %2593 = vmatpush.msra.mxu0 %v2592
        %v2594 = vand.u32 %v2415, 4294901760
        %2595 = vmatpush.msra.mxu0 %v2594
        %v2596 = vand.u32 %v2414, 4294901760
        %2597 = vmatpush.msra.mxu0 %v2596
        %v2598 = vand.u32 %v2413, 4294901760
        %2599 = vmatpush.msra.mxu0 %v2598
        %v2600 = vand.u32 %v2418, 4294901760
        %2601 = vmatmul.f32.gmra.mxu0 %v2600
        %v2602 = vpop.f32.mrf.mxu0
        %v2603 = vadd.f32 %v2578, %v2602
        %2604 = vdwg.mxu0
        %v2606 = vsel %vm2031, %v2218, 0
        %2608 = vmatpush.msra.mxu0 0.0
        %2609 = vmatpush.msra.mxu0 0.0
        %2610 = vmatpush.msra.mxu0 0.0
        %2611 = vmatpush.msra.mxu0 0.0
        %2612 = vmatpush.msra.mxu0 0.0
        %2613 = vmatpush.msra.mxu0 0.0
        %2614 = vmatpush.msra.mxu0 0.0
        %2615 = vmatpush.msra.mxu0 0.0
        %2616 = vmatpush.msra.mxu0 0.0
        %2617 = vmatpush.msra.mxu0 0.0
        %2618 = vmatpush.msra.mxu0 0.0
        %2619 = vmatpush.msra.mxu0 0.0
        %v2620 = vand.u32 %v2412, 4294901760
        %2621 = vmatpush.msra.mxu0 %v2620
        %v2622 = vand.u32 %v2411, 4294901760
        %2623 = vmatpush.msra.mxu0 %v2622
        %v2624 = vand.u32 %v2410, 4294901760
        %2625 = vmatpush.msra.mxu0 %v2624
        %v2626 = vand.u32 %v2409, 4294901760
        %2627 = vmatpush.msra.mxu0 %v2626
        %v2628 = vand.u32 %v2606, 4294901760
        %v2629 = vsub.f32 %v2606, %v2628
        %v2630 = vand.u32 %v2629, 4294901760
        %v2631 = vsub.f32 %v2629, %v2630
        %v2632 = vand.u32 %v2631, 4294901760
        %2633 = vmatmul.f32.gmra.mxu0 %v2632
        %v2634 = vpop.f32.mrf.mxu0
        %v2635 = vadd.f32 %v2603, %v2634
        %2636 = vdwg.mxu0
        %2637 = vmatpush.msra.mxu0 0.0
        %2638 = vmatpush.msra.mxu0 0.0
        %2639 = vmatpush.msra.mxu0 0.0
        %2640 = vmatpush.msra.mxu0 0.0
        %2641 = vmatpush.msra.mxu0 0.0
        %2642 = vmatpush.msra.mxu0 0.0
        %2643 = vmatpush.msra.mxu0 0.0
        %2644 = vmatpush.msra.mxu0 0.0
        %2645 = vmatpush.msra.mxu0 0.0
        %2646 = vmatpush.msra.mxu0 0.0
        %2647 = vmatpush.msra.mxu0 0.0
        %2648 = vmatpush.msra.mxu0 0.0
        %v2649 = vand.u32 %v2412, 4294901760
        %v2650 = vsub.f32 %v2412, %v2649
        %v2651 = vand.u32 %v2650, 4294901760
        %v2652 = vsub.f32 %v2650, %v2651
        %v2653 = vand.u32 %v2652, 4294901760
        %2654 = vmatpush.msra.mxu0 %v2653
        %v2655 = vand.u32 %v2411, 4294901760
        %v2656 = vsub.f32 %v2411, %v2655
        %v2657 = vand.u32 %v2656, 4294901760
        %v2658 = vsub.f32 %v2656, %v2657
        %v2659 = vand.u32 %v2658, 4294901760
        %2660 = vmatpush.msra.mxu0 %v2659
        %v2661 = vand.u32 %v2410, 4294901760
        %v2662 = vsub.f32 %v2410, %v2661
        %v2663 = vand.u32 %v2662, 4294901760
        %v2664 = vsub.f32 %v2662, %v2663
        %v2665 = vand.u32 %v2664, 4294901760
        %2666 = vmatpush.msra.mxu0 %v2665
        %v2667 = vand.u32 %v2409, 4294901760
        %v2668 = vsub.f32 %v2409, %v2667
        %v2669 = vand.u32 %v2668, 4294901760
        %v2670 = vsub.f32 %v2668, %v2669
        %v2671 = vand.u32 %v2670, 4294901760
        %2672 = vmatpush.msra.mxu0 %v2671
        %v2673 = vand.u32 %v2606, 4294901760
        %2674 = vmatmul.f32.gmra.mxu0 %v2673
        %v2675 = vpop.f32.mrf.mxu0
        %v2676 = vadd.f32 %v2635, %v2675
        %2677 = vdwg.mxu0
        %2678 = vmatpush.msra.mxu0 0.0
        %2679 = vmatpush.msra.mxu0 0.0
        %2680 = vmatpush.msra.mxu0 0.0
        %2681 = vmatpush.msra.mxu0 0.0
        %2682 = vmatpush.msra.mxu0 0.0
        %2683 = vmatpush.msra.mxu0 0.0
        %2684 = vmatpush.msra.mxu0 0.0
        %2685 = vmatpush.msra.mxu0 0.0
        %2686 = vmatpush.msra.mxu0 0.0
        %2687 = vmatpush.msra.mxu0 0.0
        %2688 = vmatpush.msra.mxu0 0.0
        %2689 = vmatpush.msra.mxu0 0.0
        %v2690 = vand.u32 %v2412, 4294901760
        %v2691 = vsub.f32 %v2412, %v2690
        %2692 = vmatpush.msra.mxu0 %v2691
        %v2693 = vand.u32 %v2411, 4294901760
        %v2694 = vsub.f32 %v2411, %v2693
        %2695 = vmatpush.msra.mxu0 %v2694
        %v2696 = vand.u32 %v2410, 4294901760
        %v2697 = vsub.f32 %v2410, %v2696
        %2698 = vmatpush.msra.mxu0 %v2697
        %v2699 = vand.u32 %v2409, 4294901760
        %v2700 = vsub.f32 %v2409, %v2699
        %2701 = vmatpush.msra.mxu0 %v2700
        %v2702 = vand.u32 %v2606, 4294901760
        %v2703 = vsub.f32 %v2606, %v2702
        %2704 = vmatmul.f32.gmra.mxu0 %v2703
        %v2705 = vpop.f32.mrf.mxu0
        %v2706 = vadd.f32 %v2676, %v2705
        %2707 = vdwg.mxu0
        %2708 = vmatpush.msra.mxu0 0.0
        %2709 = vmatpush.msra.mxu0 0.0
        %2710 = vmatpush.msra.mxu0 0.0
        %2711 = vmatpush.msra.mxu0 0.0
        %2712 = vmatpush.msra.mxu0 0.0
        %2713 = vmatpush.msra.mxu0 0.0
        %2714 = vmatpush.msra.mxu0 0.0
        %2715 = vmatpush.msra.mxu0 0.0
        %2716 = vmatpush.msra.mxu0 0.0
        %2717 = vmatpush.msra.mxu0 0.0
        %2718 = vmatpush.msra.mxu0 0.0
        %2719 = vmatpush.msra.mxu0 0.0
        %v2720 = vand.u32 %v2412, 4294901760
        %2721 = vmatpush.msra.mxu0 %v2720
        %v2722 = vand.u32 %v2411, 4294901760
        %2723 = vmatpush.msra.mxu0 %v2722
        %v2724 = vand.u32 %v2410, 4294901760
        %2725 = vmatpush.msra.mxu0 %v2724
        %v2726 = vand.u32 %v2409, 4294901760
        %2727 = vmatpush.msra.mxu0 %v2726
        %v2728 = vand.u32 %v2606, 4294901760
        %v2729 = vsub.f32 %v2606, %v2728
        %v2730 = vand.u32 %v2729, 4294901760
        %2731 = vmatmul.f32.gmra.mxu0 %v2730
        %v2732 = vpop.f32.mrf.mxu0
        %v2733 = vadd.f32 %v2706, %v2732
        %2734 = vdwg.mxu0
        %2735 = vmatpush.msra.mxu0 0.0
        %2736 = vmatpush.msra.mxu0 0.0
        %2737 = vmatpush.msra.mxu0 0.0
        %2738 = vmatpush.msra.mxu0 0.0
        %2739 = vmatpush.msra.mxu0 0.0
        %2740 = vmatpush.msra.mxu0 0.0
        %2741 = vmatpush.msra.mxu0 0.0
        %2742 = vmatpush.msra.mxu0 0.0
        %2743 = vmatpush.msra.mxu0 0.0
        %2744 = vmatpush.msra.mxu0 0.0
        %2745 = vmatpush.msra.mxu0 0.0
        %2746 = vmatpush.msra.mxu0 0.0
        %v2747 = vand.u32 %v2412, 4294901760
        %v2748 = vsub.f32 %v2412, %v2747
        %v2749 = vand.u32 %v2748, 4294901760
        %2750 = vmatpush.msra.mxu0 %v2749
        %v2751 = vand.u32 %v2411, 4294901760
        %v2752 = vsub.f32 %v2411, %v2751
        %v2753 = vand.u32 %v2752, 4294901760
        %2754 = vmatpush.msra.mxu0 %v2753
        %v2755 = vand.u32 %v2410, 4294901760
        %v2756 = vsub.f32 %v2410, %v2755
        %v2757 = vand.u32 %v2756, 4294901760
        %2758 = vmatpush.msra.mxu0 %v2757
        %v2759 = vand.u32 %v2409, 4294901760
        %v2760 = vsub.f32 %v2409, %v2759
        %v2761 = vand.u32 %v2760, 4294901760
        %2762 = vmatpush.msra.mxu0 %v2761
        %v2763 = vand.u32 %v2606, 4294901760
        %2764 = vmatmul.f32.gmra.mxu0 %v2763
        %v2765 = vpop.f32.mrf.mxu0
        %v2766 = vadd.f32 %v2733, %v2765
        %2767 = vdwg.mxu0
        %2768 = vmatpush.msra.mxu0 0.0
        %2769 = vmatpush.msra.mxu0 0.0
        %2770 = vmatpush.msra.mxu0 0.0
        %2771 = vmatpush.msra.mxu0 0.0
        %2772 = vmatpush.msra.mxu0 0.0
        %2773 = vmatpush.msra.mxu0 0.0
        %2774 = vmatpush.msra.mxu0 0.0
        %2775 = vmatpush.msra.mxu0 0.0
        %2776 = vmatpush.msra.mxu0 0.0
        %2777 = vmatpush.msra.mxu0 0.0
        %2778 = vmatpush.msra.mxu0 0.0
        %2779 = vmatpush.msra.mxu0 0.0
        %v2780 = vand.u32 %v2412, 4294901760
        %2781 = vmatpush.msra.mxu0 %v2780
        %v2782 = vand.u32 %v2411, 4294901760
        %2783 = vmatpush.msra.mxu0 %v2782
        %v2784 = vand.u32 %v2410, 4294901760
        %2785 = vmatpush.msra.mxu0 %v2784
        %v2786 = vand.u32 %v2409, 4294901760
        %2787 = vmatpush.msra.mxu0 %v2786
        %v2788 = vand.u32 %v2606, 4294901760
        %2789 = vmatmul.f32.gmra.mxu0 %v2788
        %v2790 = vpop.f32.mrf.mxu0
        %v2791 = vadd.f32 %v2766, %v2790
        %2792 = vdwg.mxu0
        %v2793 = vmul.f32 %v2791, 3.0
        %s2794 = sld [smem:[#allocation6]]
        %s2795 = sld [smem:[#allocation6 + $0x1]]
        %s2796 = sadd.f32 %s2794, %s2795
        %s2797 = sld [smem:[#allocation6 + $0x2]]
        %s2798 = sadd.f32 %s2796, %s2797
        %v2799 = vstv %s2798
        %v2800 = vadd.f32 %v2793, %v2799
        %v2801 = vld [vmem:[%s10] sm:$0x1]
        %vm2802 = vcmask 64512
        %v2804 = vsel %vm2802, %v2801, 0
        %2806 = vmatpush.msra.mxu0 0.0
        %2807 = vmatpush.msra.mxu0 0.0
        %2808 = vmatpush.msra.mxu0 0.0
        %2809 = vmatpush.msra.mxu0 0.0
        %2810 = vmatpush.msra.mxu0 0.0
        %2811 = vmatpush.msra.mxu0 0.0
        %2812 = vmatpush.msra.mxu0 0.0
        %2813 = vmatpush.msra.mxu0 0.0
        %2814 = vmatpush.msra.mxu0 0.0
        %2815 = vmatpush.msra.mxu0 0.0
        %2816 = vmatpush.msra.mxu0 0.0
        %2817 = vmatpush.msra.mxu0 0.0
        %2818 = vmatpush.msra.mxu0 0.0
        %2819 = vmatpush.msra.mxu0 0.0
        %2820 = vmatpush.msra.mxu0 0.0
        %v2821 = vand.u32 %v2800, 4294901760
        %2822 = vmatpush.msra.mxu0 %v2821
        %v2823 = vand.u32 %v2804, 4294901760
        %v2824 = vsub.f32 %v2804, %v2823
        %v2825 = vand.u32 %v2824, 4294901760
        %v2826 = vsub.f32 %v2824, %v2825
        %v2827 = vand.u32 %v2826, 4294901760
        %2828 = vmatmul.f32.gmra.mxu0 %v2827
        %v2829 = vpop.f32.mrf.mxu0
        %v2830 = vadd.f32 0.0, %v2829
        %2831 = vdwg.mxu0
        %2832 = vmatpush.msra.mxu0 0.0
        %2833 = vmatpush.msra.mxu0 0.0
        %2834 = vmatpush.msra.mxu0 0.0
        %2835 = vmatpush.msra.mxu0 0.0
        %2836 = vmatpush.msra.mxu0 0.0
        %2837 = vmatpush.msra.mxu0 0.0
        %2838 = vmatpush.msra.mxu0 0.0
        %2839 = vmatpush.msra.mxu0 0.0
        %2840 = vmatpush.msra.mxu0 0.0
        %2841 = vmatpush.msra.mxu0 0.0
        %2842 = vmatpush.msra.mxu0 0.0
        %2843 = vmatpush.msra.mxu0 0.0
        %2844 = vmatpush.msra.mxu0 0.0
        %2845 = vmatpush.msra.mxu0 0.0
        %2846 = vmatpush.msra.mxu0 0.0
        %v2847 = vand.u32 %v2800, 4294901760
        %v2848 = vsub.f32 %v2800, %v2847
        %v2849 = vand.u32 %v2848, 4294901760
        %v2850 = vsub.f32 %v2848, %v2849
        %v2851 = vand.u32 %v2850, 4294901760
        %2852 = vmatpush.msra.mxu0 %v2851
        %v2853 = vand.u32 %v2804, 4294901760
        %2854 = vmatmul.f32.gmra.mxu0 %v2853
        %v2855 = vpop.f32.mrf.mxu0
        %v2856 = vadd.f32 %v2830, %v2855
        %2857 = vdwg.mxu0
        %2858 = vmatpush.msra.mxu0 0.0
        %2859 = vmatpush.msra.mxu0 0.0
        %2860 = vmatpush.msra.mxu0 0.0
        %2861 = vmatpush.msra.mxu0 0.0
        %2862 = vmatpush.msra.mxu0 0.0
        %2863 = vmatpush.msra.mxu0 0.0
        %2864 = vmatpush.msra.mxu0 0.0
        %2865 = vmatpush.msra.mxu0 0.0
        %2866 = vmatpush.msra.mxu0 0.0
        %2867 = vmatpush.msra.mxu0 0.0
        %2868 = vmatpush.msra.mxu0 0.0
        %2869 = vmatpush.msra.mxu0 0.0
        %2870 = vmatpush.msra.mxu0 0.0
        %2871 = vmatpush.msra.mxu0 0.0
        %2872 = vmatpush.msra.mxu0 0.0
        %v2873 = vand.u32 %v2800, 4294901760
        %v2874 = vsub.f32 %v2800, %v2873
        %2875 = vmatpush.msra.mxu0 %v2874
        %v2876 = vand.u32 %v2804, 4294901760
        %v2877 = vsub.f32 %v2804, %v2876
        %2878 = vmatmul.f32.gmra.mxu0 %v2877
        %v2879 = vpop.f32.mrf.mxu0
        %v2880 = vadd.f32 %v2856, %v2879
        %2881 = vdwg.mxu0
        %2882 = vmatpush.msra.mxu0 0.0
        %2883 = vmatpush.msra.mxu0 0.0
        %2884 = vmatpush.msra.mxu0 0.0
        %2885 = vmatpush.msra.mxu0 0.0
        %2886 = vmatpush.msra.mxu0 0.0
        %2887 = vmatpush.msra.mxu0 0.0
        %2888 = vmatpush.msra.mxu0 0.0
        %2889 = vmatpush.msra.mxu0 0.0
        %2890 = vmatpush.msra.mxu0 0.0
        %2891 = vmatpush.msra.mxu0 0.0
        %2892 = vmatpush.msra.mxu0 0.0
        %2893 = vmatpush.msra.mxu0 0.0
        %2894 = vmatpush.msra.mxu0 0.0
        %2895 = vmatpush.msra.mxu0 0.0
        %2896 = vmatpush.msra.mxu0 0.0
        %v2897 = vand.u32 %v2800, 4294901760
        %2898 = vmatpush.msra.mxu0 %v2897
        %v2899 = vand.u32 %v2804, 4294901760
        %v2900 = vsub.f32 %v2804, %v2899
        %v2901 = vand.u32 %v2900, 4294901760
        %2902 = vmatmul.f32.gmra.mxu0 %v2901
        %v2903 = vpop.f32.mrf.mxu0
        %v2904 = vadd.f32 %v2880, %v2903
        %2905 = vdwg.mxu0
        %2906 = vmatpush.msra.mxu0 0.0
        %2907 = vmatpush.msra.mxu0 0.0
        %2908 = vmatpush.msra.mxu0 0.0
        %2909 = vmatpush.msra.mxu0 0.0
        %2910 = vmatpush.msra.mxu0 0.0
        %2911 = vmatpush.msra.mxu0 0.0
        %2912 = vmatpush.msra.mxu0 0.0
        %2913 = vmatpush.msra.mxu0 0.0
        %2914 = vmatpush.msra.mxu0 0.0
        %2915 = vmatpush.msra.mxu0 0.0
        %2916 = vmatpush.msra.mxu0 0.0
        %2917 = vmatpush.msra.mxu0 0.0
        %2918 = vmatpush.msra.mxu0 0.0
        %2919 = vmatpush.msra.mxu0 0.0
        %2920 = vmatpush.msra.mxu0 0.0
        %v2921 = vand.u32 %v2800, 4294901760
        %v2922 = vsub.f32 %v2800, %v2921
        %v2923 = vand.u32 %v2922, 4294901760
        %2924 = vmatpush.msra.mxu0 %v2923
        %v2925 = vand.u32 %v2804, 4294901760
        %2926 = vmatmul.f32.gmra.mxu0 %v2925
        %v2927 = vpop.f32.mrf.mxu0
        %v2928 = vadd.f32 %v2904, %v2927
        %2929 = vdwg.mxu0
        %2930 = vmatpush.msra.mxu0 0.0
        %2931 = vmatpush.msra.mxu0 0.0
        %2932 = vmatpush.msra.mxu0 0.0
        %2933 = vmatpush.msra.mxu0 0.0
        %2934 = vmatpush.msra.mxu0 0.0
        %2935 = vmatpush.msra.mxu0 0.0
        %2936 = vmatpush.msra.mxu0 0.0
        %2937 = vmatpush.msra.mxu0 0.0
        %2938 = vmatpush.msra.mxu0 0.0
        %2939 = vmatpush.msra.mxu0 0.0
        %2940 = vmatpush.msra.mxu0 0.0
        %2941 = vmatpush.msra.mxu0 0.0
        %2942 = vmatpush.msra.mxu0 0.0
        %2943 = vmatpush.msra.mxu0 0.0
        %2944 = vmatpush.msra.mxu0 0.0
        %v2945 = vand.u32 %v2800, 4294901760
        %2946 = vmatpush.msra.mxu0 %v2945
        %v2947 = vand.u32 %v2804, 4294901760
        %2948 = vmatmul.f32.gmra.mxu0 %v2947
        %v2949 = vpop.f32.mrf.mxu0
        %v2950 = vadd.f32 %v2928, %v2949
        %2951 = vdwg.mxu0
        %v2952 = vld [vmem:[%s9] sm:$0x1]
        %v2954 = vsel %vm2802, %v2952, 0
        %2956 = vmatpush.msra.mxu0 0.0
        %2957 = vmatpush.msra.mxu0 0.0
        %2958 = vmatpush.msra.mxu0 0.0
        %2959 = vmatpush.msra.mxu0 0.0
        %2960 = vmatpush.msra.mxu0 0.0
        %2961 = vmatpush.msra.mxu0 0.0
        %2962 = vmatpush.msra.mxu0 0.0
        %2963 = vmatpush.msra.mxu0 0.0
        %2964 = vmatpush.msra.mxu0 0.0
        %2965 = vmatpush.msra.mxu0 0.0
        %2966 = vmatpush.msra.mxu0 0.0
        %2967 = vmatpush.msra.mxu0 0.0
        %2968 = vmatpush.msra.mxu0 0.0
        %2969 = vmatpush.msra.mxu0 0.0
        %2970 = vmatpush.msra.mxu0 0.0
        %v2971 = vand.u32 %v2800, 4294901760
        %2972 = vmatpush.msra.mxu0 %v2971
        %v2973 = vand.u32 %v2954, 4294901760
        %v2974 = vsub.f32 %v2954, %v2973
        %v2975 = vand.u32 %v2974, 4294901760
        %v2976 = vsub.f32 %v2974, %v2975
        %v2977 = vand.u32 %v2976, 4294901760
        %2978 = vmatmul.f32.gmra.mxu0 %v2977
        %v2979 = vpop.f32.mrf.mxu0
        %v2980 = vadd.f32 0.0, %v2979
        %2981 = vdwg.mxu0
        %2982 = vmatpush.msra.mxu0 0.0
        %2983 = vmatpush.msra.mxu0 0.0
        %2984 = vmatpush.msra.mxu0 0.0
        %2985 = vmatpush.msra.mxu0 0.0
        %2986 = vmatpush.msra.mxu0 0.0
        %2987 = vmatpush.msra.mxu0 0.0
        %2988 = vmatpush.msra.mxu0 0.0
        %2989 = vmatpush.msra.mxu0 0.0
        %2990 = vmatpush.msra.mxu0 0.0
        %2991 = vmatpush.msra.mxu0 0.0
        %2992 = vmatpush.msra.mxu0 0.0
        %2993 = vmatpush.msra.mxu0 0.0
        %2994 = vmatpush.msra.mxu0 0.0
        %2995 = vmatpush.msra.mxu0 0.0
        %2996 = vmatpush.msra.mxu0 0.0
        %v2997 = vand.u32 %v2800, 4294901760
        %v2998 = vsub.f32 %v2800, %v2997
        %v2999 = vand.u32 %v2998, 4294901760
        %v3000 = vsub.f32 %v2998, %v2999
        %v3001 = vand.u32 %v3000, 4294901760
        %3002 = vmatpush.msra.mxu0 %v3001
        %v3003 = vand.u32 %v2954, 4294901760
        %3004 = vmatmul.f32.gmra.mxu0 %v3003
        %v3005 = vpop.f32.mrf.mxu0
        %v3006 = vadd.f32 %v2980, %v3005
        %3007 = vdwg.mxu0
        %3008 = vmatpush.msra.mxu0 0.0
        %3009 = vmatpush.msra.mxu0 0.0
        %3010 = vmatpush.msra.mxu0 0.0
        %3011 = vmatpush.msra.mxu0 0.0
        %3012 = vmatpush.msra.mxu0 0.0
        %3013 = vmatpush.msra.mxu0 0.0
        %3014 = vmatpush.msra.mxu0 0.0
        %3015 = vmatpush.msra.mxu0 0.0
        %3016 = vmatpush.msra.mxu0 0.0
        %3017 = vmatpush.msra.mxu0 0.0
        %3018 = vmatpush.msra.mxu0 0.0
        %3019 = vmatpush.msra.mxu0 0.0
        %3020 = vmatpush.msra.mxu0 0.0
        %3021 = vmatpush.msra.mxu0 0.0
        %3022 = vmatpush.msra.mxu0 0.0
        %v3023 = vand.u32 %v2800, 4294901760
        %v3024 = vsub.f32 %v2800, %v3023
        %3025 = vmatpush.msra.mxu0 %v3024
        %v3026 = vand.u32 %v2954, 4294901760
        %v3027 = vsub.f32 %v2954, %v3026
        %3028 = vmatmul.f32.gmra.mxu0 %v3027
        %v3029 = vpop.f32.mrf.mxu0
        %v3030 = vadd.f32 %v3006, %v3029
        %3031 = vdwg.mxu0
        %3032 = vmatpush.msra.mxu0 0.0
        %3033 = vmatpush.msra.mxu0 0.0
        %3034 = vmatpush.msra.mxu0 0.0
        %3035 = vmatpush.msra.mxu0 0.0
        %3036 = vmatpush.msra.mxu0 0.0
        %3037 = vmatpush.msra.mxu0 0.0
        %3038 = vmatpush.msra.mxu0 0.0
        %3039 = vmatpush.msra.mxu0 0.0
        %3040 = vmatpush.msra.mxu0 0.0
        %3041 = vmatpush.msra.mxu0 0.0
        %3042 = vmatpush.msra.mxu0 0.0
        %3043 = vmatpush.msra.mxu0 0.0
        %3044 = vmatpush.msra.mxu0 0.0
        %3045 = vmatpush.msra.mxu0 0.0
        %3046 = vmatpush.msra.mxu0 0.0
        %v3047 = vand.u32 %v2800, 4294901760
        %3048 = vmatpush.msra.mxu0 %v3047
        %v3049 = vand.u32 %v2954, 4294901760
        %v3050 = vsub.f32 %v2954, %v3049
        %v3051 = vand.u32 %v3050, 4294901760
        %3052 = vmatmul.f32.gmra.mxu0 %v3051
        %v3053 = vpop.f32.mrf.mxu0
        %v3054 = vadd.f32 %v3030, %v3053
        %3055 = vdwg.mxu0
        %3056 = vmatpush.msra.mxu0 0.0
        %3057 = vmatpush.msra.mxu0 0.0
        %3058 = vmatpush.msra.mxu0 0.0
        %3059 = vmatpush.msra.mxu0 0.0
        %3060 = vmatpush.msra.mxu0 0.0
        %3061 = vmatpush.msra.mxu0 0.0
        %3062 = vmatpush.msra.mxu0 0.0
        %3063 = vmatpush.msra.mxu0 0.0
        %3064 = vmatpush.msra.mxu0 0.0
        %3065 = vmatpush.msra.mxu0 0.0
        %3066 = vmatpush.msra.mxu0 0.0
        %3067 = vmatpush.msra.mxu0 0.0
        %3068 = vmatpush.msra.mxu0 0.0
        %3069 = vmatpush.msra.mxu0 0.0
        %3070 = vmatpush.msra.mxu0 0.0
        %v3071 = vand.u32 %v2800, 4294901760
        %v3072 = vsub.f32 %v2800, %v3071
        %v3073 = vand.u32 %v3072, 4294901760
        %3074 = vmatpush.msra.mxu0 %v3073
        %v3075 = vand.u32 %v2954, 4294901760
        %3076 = vmatmul.f32.gmra.mxu0 %v3075
        %v3077 = vpop.f32.mrf.mxu0
        %v3078 = vadd.f32 %v3054, %v3077
        %3079 = vdwg.mxu0
        %3080 = vmatpush.msra.mxu0 0.0
        %3081 = vmatpush.msra.mxu0 0.0
        %3082 = vmatpush.msra.mxu0 0.0
        %3083 = vmatpush.msra.mxu0 0.0
        %3084 = vmatpush.msra.mxu0 0.0
        %3085 = vmatpush.msra.mxu0 0.0
        %3086 = vmatpush.msra.mxu0 0.0
        %3087 = vmatpush.msra.mxu0 0.0
        %3088 = vmatpush.msra.mxu0 0.0
        %3089 = vmatpush.msra.mxu0 0.0
        %3090 = vmatpush.msra.mxu0 0.0
        %3091 = vmatpush.msra.mxu0 0.0
        %3092 = vmatpush.msra.mxu0 0.0
        %3093 = vmatpush.msra.mxu0 0.0
        %3094 = vmatpush.msra.mxu0 0.0
        %v3095 = vand.u32 %v2800, 4294901760
        %3096 = vmatpush.msra.mxu0 %v3095
        %v3097 = vand.u32 %v2954, 4294901760
        %3098 = vmatmul.f32.gmra.mxu0 %v3097
        %v3099 = vpop.f32.mrf.mxu0
        %v3100 = vadd.f32 %v3078, %v3099
        %3101 = vdwg.mxu0
        %v3102 = vld [vmem:[%s11] sm:$0xff]
        %v3103 = vld [vmem:[%s12] sm:$0xff]
        %v3105 = vsel %vm2802, %v3100, 0
        %3107 = vmatpush.msra.mxu0 0.0
        %3108 = vmatpush.msra.mxu0 0.0
        %3109 = vmatpush.msra.mxu0 0.0
        %3110 = vmatpush.msra.mxu0 0.0
        %3111 = vmatpush.msra.mxu0 0.0
        %3112 = vmatpush.msra.mxu0 0.0
        %3113 = vmatpush.msra.mxu0 0.0
        %3114 = vmatpush.msra.mxu0 0.0
        %3115 = vmatpush.msra.mxu0 0.0
        %3116 = vmatpush.msra.mxu0 0.0
        %3117 = vmatpush.msra.mxu0 0.0
        %3118 = vmatpush.msra.mxu0 0.0
        %3119 = vmatpush.msra.mxu0 0.0
        %3120 = vmatpush.msra.mxu0 0.0
        %3121 = vmatpush.msra.mxu0 0.0
        %v3122 = vand.u32 %v3103, 4294901760
        %3123 = vmatpush.msra.mxu0 %v3122
        %v3124 = vand.u32 %v3105, 4294901760
        %v3125 = vsub.f32 %v3105, %v3124
        %v3126 = vand.u32 %v3125, 4294901760
        %v3127 = vsub.f32 %v3125, %v3126
        %v3128 = vand.u32 %v3127, 4294901760
        %3129 = vmatmul.f32.gmra.mxu0 %v3128
        %v3130 = vpop.f32.mrf.mxu0
        %v3131 = vadd.f32 0.0, %v3130
        %3132 = vdwg.mxu0
        %3133 = vmatpush.msra.mxu0 0.0
        %3134 = vmatpush.msra.mxu0 0.0
        %3135 = vmatpush.msra.mxu0 0.0
        %3136 = vmatpush.msra.mxu0 0.0
        %3137 = vmatpush.msra.mxu0 0.0
        %3138 = vmatpush.msra.mxu0 0.0
        %3139 = vmatpush.msra.mxu0 0.0
        %3140 = vmatpush.msra.mxu0 0.0
        %3141 = vmatpush.msra.mxu0 0.0
        %3142 = vmatpush.msra.mxu0 0.0
        %3143 = vmatpush.msra.mxu0 0.0
        %3144 = vmatpush.msra.mxu0 0.0
        %3145 = vmatpush.msra.mxu0 0.0
        %3146 = vmatpush.msra.mxu0 0.0
        %3147 = vmatpush.msra.mxu0 0.0
        %v3148 = vand.u32 %v3103, 4294901760
        %v3149 = vsub.f32 %v3103, %v3148
        %v3150 = vand.u32 %v3149, 4294901760
        %v3151 = vsub.f32 %v3149, %v3150
        %v3152 = vand.u32 %v3151, 4294901760
        %3153 = vmatpush.msra.mxu0 %v3152
        %v3154 = vand.u32 %v3105, 4294901760
        %3155 = vmatmul.f32.gmra.mxu0 %v3154
        %v3156 = vpop.f32.mrf.mxu0
        %v3157 = vadd.f32 %v3131, %v3156
        %3158 = vdwg.mxu0
        %3159 = vmatpush.msra.mxu0 0.0
        %3160 = vmatpush.msra.mxu0 0.0
        %3161 = vmatpush.msra.mxu0 0.0
        %3162 = vmatpush.msra.mxu0 0.0
        %3163 = vmatpush.msra.mxu0 0.0
        %3164 = vmatpush.msra.mxu0 0.0
        %3165 = vmatpush.msra.mxu0 0.0
        %3166 = vmatpush.msra.mxu0 0.0
        %3167 = vmatpush.msra.mxu0 0.0
        %3168 = vmatpush.msra.mxu0 0.0
        %3169 = vmatpush.msra.mxu0 0.0
        %3170 = vmatpush.msra.mxu0 0.0
        %3171 = vmatpush.msra.mxu0 0.0
        %3172 = vmatpush.msra.mxu0 0.0
        %3173 = vmatpush.msra.mxu0 0.0
        %v3174 = vand.u32 %v3103, 4294901760
        %v3175 = vsub.f32 %v3103, %v3174
        %3176 = vmatpush.msra.mxu0 %v3175
        %v3177 = vand.u32 %v3105, 4294901760
        %v3178 = vsub.f32 %v3105, %v3177
        %3179 = vmatmul.f32.gmra.mxu0 %v3178
        %v3180 = vpop.f32.mrf.mxu0
        %v3181 = vadd.f32 %v3157, %v3180
        %3182 = vdwg.mxu0
        %3183 = vmatpush.msra.mxu0 0.0
        %3184 = vmatpush.msra.mxu0 0.0
        %3185 = vmatpush.msra.mxu0 0.0
        %3186 = vmatpush.msra.mxu0 0.0
        %3187 = vmatpush.msra.mxu0 0.0
        %3188 = vmatpush.msra.mxu0 0.0
        %3189 = vmatpush.msra.mxu0 0.0
        %3190 = vmatpush.msra.mxu0 0.0
        %3191 = vmatpush.msra.mxu0 0.0
        %3192 = vmatpush.msra.mxu0 0.0
        %3193 = vmatpush.msra.mxu0 0.0
        %3194 = vmatpush.msra.mxu0 0.0
        %3195 = vmatpush.msra.mxu0 0.0
        %3196 = vmatpush.msra.mxu0 0.0
        %3197 = vmatpush.msra.mxu0 0.0
        %v3198 = vand.u32 %v3103, 4294901760
        %3199 = vmatpush.msra.mxu0 %v3198
        %v3200 = vand.u32 %v3105, 4294901760
        %v3201 = vsub.f32 %v3105, %v3200
        %v3202 = vand.u32 %v3201, 4294901760
        %3203 = vmatmul.f32.gmra.mxu0 %v3202
        %v3204 = vpop.f32.mrf.mxu0
        %v3205 = vadd.f32 %v3181, %v3204
        %3206 = vdwg.mxu0
        %3207 = vmatpush.msra.mxu0 0.0
        %3208 = vmatpush.msra.mxu0 0.0
        %3209 = vmatpush.msra.mxu0 0.0
        %3210 = vmatpush.msra.mxu0 0.0
        %3211 = vmatpush.msra.mxu0 0.0
        %3212 = vmatpush.msra.mxu0 0.0
        %3213 = vmatpush.msra.mxu0 0.0
        %3214 = vmatpush.msra.mxu0 0.0
        %3215 = vmatpush.msra.mxu0 0.0
        %3216 = vmatpush.msra.mxu0 0.0
        %3217 = vmatpush.msra.mxu0 0.0
        %3218 = vmatpush.msra.mxu0 0.0
        %3219 = vmatpush.msra.mxu0 0.0
        %3220 = vmatpush.msra.mxu0 0.0
        %3221 = vmatpush.msra.mxu0 0.0
        %v3222 = vand.u32 %v3103, 4294901760
        %v3223 = vsub.f32 %v3103, %v3222
        %v3224 = vand.u32 %v3223, 4294901760
        %3225 = vmatpush.msra.mxu0 %v3224
        %v3226 = vand.u32 %v3105, 4294901760
        %3227 = vmatmul.f32.gmra.mxu0 %v3226
        %v3228 = vpop.f32.mrf.mxu0
        %v3229 = vadd.f32 %v3205, %v3228
        %3230 = vdwg.mxu0
        %3231 = vmatpush.msra.mxu0 0.0
        %3232 = vmatpush.msra.mxu0 0.0
        %3233 = vmatpush.msra.mxu0 0.0
        %3234 = vmatpush.msra.mxu0 0.0
        %3235 = vmatpush.msra.mxu0 0.0
        %3236 = vmatpush.msra.mxu0 0.0
        %3237 = vmatpush.msra.mxu0 0.0
        %3238 = vmatpush.msra.mxu0 0.0
        %3239 = vmatpush.msra.mxu0 0.0
        %3240 = vmatpush.msra.mxu0 0.0
        %3241 = vmatpush.msra.mxu0 0.0
        %3242 = vmatpush.msra.mxu0 0.0
        %3243 = vmatpush.msra.mxu0 0.0
        %3244 = vmatpush.msra.mxu0 0.0
        %3245 = vmatpush.msra.mxu0 0.0
        %v3246 = vand.u32 %v3103, 4294901760
        %3247 = vmatpush.msra.mxu0 %v3246
        %v3248 = vand.u32 %v3105, 4294901760
        %3249 = vmatmul.f32.gmra.mxu0 %v3248
        %v3250 = vpop.f32.mrf.mxu0
        %v3251 = vadd.f32 %v3229, %v3250
        %3252 = vdwg.mxu0
        %v3254 = vsel %vm2802, %v2950, 0
        %3256 = vmatpush.msra.mxu0 0.0
        %3257 = vmatpush.msra.mxu0 0.0
        %3258 = vmatpush.msra.mxu0 0.0
        %3259 = vmatpush.msra.mxu0 0.0
        %3260 = vmatpush.msra.mxu0 0.0
        %3261 = vmatpush.msra.mxu0 0.0
        %3262 = vmatpush.msra.mxu0 0.0
        %3263 = vmatpush.msra.mxu0 0.0
        %3264 = vmatpush.msra.mxu0 0.0
        %3265 = vmatpush.msra.mxu0 0.0
        %3266 = vmatpush.msra.mxu0 0.0
        %3267 = vmatpush.msra.mxu0 0.0
        %3268 = vmatpush.msra.mxu0 0.0
        %3269 = vmatpush.msra.mxu0 0.0
        %3270 = vmatpush.msra.mxu0 0.0
        %v3271 = vand.u32 %v3102, 4294901760
        %3272 = vmatpush.msra.mxu0 %v3271
        %v3273 = vand.u32 %v3254, 4294901760
        %v3274 = vsub.f32 %v3254, %v3273
        %v3275 = vand.u32 %v3274, 4294901760
        %v3276 = vsub.f32 %v3274, %v3275
        %v3277 = vand.u32 %v3276, 4294901760
        %3278 = vmatmul.f32.gmra.mxu0 %v3277
        %v3279 = vpop.f32.mrf.mxu0
        %v3280 = vadd.f32 %v3251, %v3279
        %3281 = vdwg.mxu0
        %3282 = vmatpush.msra.mxu0 0.0
        %3283 = vmatpush.msra.mxu0 0.0
        %3284 = vmatpush.msra.mxu0 0.0
        %3285 = vmatpush.msra.mxu0 0.0
        %3286 = vmatpush.msra.mxu0 0.0
        %3287 = vmatpush.msra.mxu0 0.0
        %3288 = vmatpush.msra.mxu0 0.0
        %3289 = vmatpush.msra.mxu0 0.0
        %3290 = vmatpush.msra.mxu0 0.0
        %3291 = vmatpush.msra.mxu0 0.0
        %3292 = vmatpush.msra.mxu0 0.0
        %3293 = vmatpush.msra.mxu0 0.0
        %3294 = vmatpush.msra.mxu0 0.0
        %3295 = vmatpush.msra.mxu0 0.0
        %3296 = vmatpush.msra.mxu0 0.0
        %v3297 = vand.u32 %v3102, 4294901760
        %v3298 = vsub.f32 %v3102, %v3297
        %v3299 = vand.u32 %v3298, 4294901760
        %v3300 = vsub.f32 %v3298, %v3299
        %v3301 = vand.u32 %v3300, 4294901760
        %3302 = vmatpush.msra.mxu0 %v3301
        %v3303 = vand.u32 %v3254, 4294901760
        %3304 = vmatmul.f32.gmra.mxu0 %v3303
        %v3305 = vpop.f32.mrf.mxu0
        %v3306 = vadd.f32 %v3280, %v3305
        %3307 = vdwg.mxu0
        %3308 = vmatpush.msra.mxu0 0.0
        %3309 = vmatpush.msra.mxu0 0.0
        %3310 = vmatpush.msra.mxu0 0.0
        %3311 = vmatpush.msra.mxu0 0.0
        %3312 = vmatpush.msra.mxu0 0.0
        %3313 = vmatpush.msra.mxu0 0.0
        %3314 = vmatpush.msra.mxu0 0.0
        %3315 = vmatpush.msra.mxu0 0.0
        %3316 = vmatpush.msra.mxu0 0.0
        %3317 = vmatpush.msra.mxu0 0.0
        %3318 = vmatpush.msra.mxu0 0.0
        %3319 = vmatpush.msra.mxu0 0.0
        %3320 = vmatpush.msra.mxu0 0.0
        %3321 = vmatpush.msra.mxu0 0.0
        %3322 = vmatpush.msra.mxu0 0.0
        %v3323 = vand.u32 %v3102, 4294901760
        %v3324 = vsub.f32 %v3102, %v3323
        %3325 = vmatpush.msra.mxu0 %v3324
        %v3326 = vand.u32 %v3254, 4294901760
        %v3327 = vsub.f32 %v3254, %v3326
        %3328 = vmatmul.f32.gmra.mxu0 %v3327
        %v3329 = vpop.f32.mrf.mxu0
        %v3330 = vadd.f32 %v3306, %v3329
        %3331 = vdwg.mxu0
        %3332 = vmatpush.msra.mxu0 0.0
        %3333 = vmatpush.msra.mxu0 0.0
        %3334 = vmatpush.msra.mxu0 0.0
        %3335 = vmatpush.msra.mxu0 0.0
        %3336 = vmatpush.msra.mxu0 0.0
        %3337 = vmatpush.msra.mxu0 0.0
        %3338 = vmatpush.msra.mxu0 0.0
        %3339 = vmatpush.msra.mxu0 0.0
        %3340 = vmatpush.msra.mxu0 0.0
        %3341 = vmatpush.msra.mxu0 0.0
        %3342 = vmatpush.msra.mxu0 0.0
        %3343 = vmatpush.msra.mxu0 0.0
        %3344 = vmatpush.msra.mxu0 0.0
        %3345 = vmatpush.msra.mxu0 0.0
        %3346 = vmatpush.msra.mxu0 0.0
        %v3347 = vand.u32 %v3102, 4294901760
        %3348 = vmatpush.msra.mxu0 %v3347
        %v3349 = vand.u32 %v3254, 4294901760
        %v3350 = vsub.f32 %v3254, %v3349
        %v3351 = vand.u32 %v3350, 4294901760
        %3352 = vmatmul.f32.gmra.mxu0 %v3351
        %v3353 = vpop.f32.mrf.mxu0
        %v3354 = vadd.f32 %v3330, %v3353
        %3355 = vdwg.mxu0
        %3356 = vmatpush.msra.mxu0 0.0
        %3357 = vmatpush.msra.mxu0 0.0
        %3358 = vmatpush.msra.mxu0 0.0
        %3359 = vmatpush.msra.mxu0 0.0
        %3360 = vmatpush.msra.mxu0 0.0
        %3361 = vmatpush.msra.mxu0 0.0
        %3362 = vmatpush.msra.mxu0 0.0
        %3363 = vmatpush.msra.mxu0 0.0
        %3364 = vmatpush.msra.mxu0 0.0
        %3365 = vmatpush.msra.mxu0 0.0
        %3366 = vmatpush.msra.mxu0 0.0
        %3367 = vmatpush.msra.mxu0 0.0
        %3368 = vmatpush.msra.mxu0 0.0
        %3369 = vmatpush.msra.mxu0 0.0
        %3370 = vmatpush.msra.mxu0 0.0
        %v3371 = vand.u32 %v3102, 4294901760
        %v3372 = vsub.f32 %v3102, %v3371
        %v3373 = vand.u32 %v3372, 4294901760
        %3374 = vmatpush.msra.mxu0 %v3373
        %v3375 = vand.u32 %v3254, 4294901760
        %3376 = vmatmul.f32.gmra.mxu0 %v3375
        %v3377 = vpop.f32.mrf.mxu0
        %v3378 = vadd.f32 %v3354, %v3377
        %3379 = vdwg.mxu0
        %3380 = vmatpush.msra.mxu0 0.0
        %3381 = vmatpush.msra.mxu0 0.0
        %3382 = vmatpush.msra.mxu0 0.0
        %3383 = vmatpush.msra.mxu0 0.0
        %3384 = vmatpush.msra.mxu0 0.0
        %3385 = vmatpush.msra.mxu0 0.0
        %3386 = vmatpush.msra.mxu0 0.0
        %3387 = vmatpush.msra.mxu0 0.0
        %3388 = vmatpush.msra.mxu0 0.0
        %3389 = vmatpush.msra.mxu0 0.0
        %3390 = vmatpush.msra.mxu0 0.0
        %3391 = vmatpush.msra.mxu0 0.0
        %3392 = vmatpush.msra.mxu0 0.0
        %3393 = vmatpush.msra.mxu0 0.0
        %3394 = vmatpush.msra.mxu0 0.0
        %v3395 = vand.u32 %v3102, 4294901760
        %3396 = vmatpush.msra.mxu0 %v3395
        %v3397 = vand.u32 %v3254, 4294901760
        %3398 = vmatmul.f32.gmra.mxu0 %v3397
        %v3399 = vpop.f32.mrf.mxu0
        %v3400 = vadd.f32 %v3378, %v3399
        %3401 = vdwg.mxu0
        %s3402 = sld [smem:[#allocation8]]
        %v3403 = vstv %s3402
        %v3404 = vadd.f32 %v3400, %v3403
        %vm3405 = vcmask 0
        %3406 = vst.msk [vmem:[%s580] sm:$0x1] %vm3405, %v3404
        %s3407 = sld [smem:[#allocation8 + $0x1]]
        %v3408 = vstv %s3407
        %v3409 = vadd.f32 %v3400, %v3408
        %s3410 = scalar_lea.vmem %s580, 1
        %3411 = vst.msk [vmem:[%s3410] sm:$0x1] %vm3405, %v3409
        %s3412 = sld [smem:[#allocation8 + $0x2]]
        %v3413 = vstv %s3412
        %v3414 = vadd.f32 %v3400, %v3413
        %s3415 = scalar_lea.vmem %s580, 2
        %3416 = vst.msk [vmem:[%s3415] sm:$0x1] %vm3405, %v3414
        %p3417 = scmp.lt.s32.totalorder %s32, 1
        %s3418 = scalar_select %p3417, %s32, 1
        %s3419 = smul.addr %s3418, 3
        %s3420 = scalar_lea.vmem %s16, %s3419
        // Predicated region
        $region101: #{tpu_custom_call.1} parent=83 // pred_check
          %p3421 = pneg %p391
        $region102: #{tpu_custom_call.1} parent=83 // pred_check_branch
          %3423 = sbr.rel (%p3421) target = $region104
        $region103: #{tpu_custom_call.1} parent=83 // pred_region
          _
        $region104: #{tpu_custom_call.1} parent=83 // pred_fallthru
          _
      $region84: #{tpu_custom_call.1} parent=5 // pred_fallthru
        _
      %p3424 = scmp.le.s32.totalorder 2, %s27
      // Predicated region
      $region105: #{tpu_custom_call.1} parent=5 // pred_check
        %p3425 = pneg %p3424
      $region106: #{tpu_custom_call.1} parent=5 // pred_check_branch
        %3427 = sbr.rel (%p3425) target = $region108
      $region107: #{tpu_custom_call.1} parent=5 // pred_region
        %s3428 = ssub.s32 %s27, 2
        // Predicated region
        $region109: #{tpu_custom_call.1} parent=107 // pred_check
          %p3429 = pneg %p397
        $region110: #{tpu_custom_call.1} parent=107 // pred_check_branch
          %3431 = sbr.rel (%p3429) target = $region112
        $region111: #{tpu_custom_call.1} parent=107 // pred_region
          %p3432 = scmp.lt.s32.totalorder %s33, 1
          %s3433 = scalar_select %p3432, %s33, 1
          %s3434 = smul.addr %s3433, 3
          %s3435 = scalar_lea.vmem %s16, %s3434
        $region112: #{tpu_custom_call.1} parent=107 // pred_fallthru
          _
      $region108: #{tpu_custom_call.1} parent=5 // pred_fallthru
        _
    $region6: #{tpu_custom_call.1} parent=1 // loop_footer
      %s31 = sadd.s32 1, %s27
    $region7: #{tpu_custom_call.1} parent=1 // loop_footer_branch
      %26 = sbr.rel target = $region3
    $region8: #{tpu_custom_call.1} parent=1 // loop_exit
      _
    %3436 = vsyncpa [#allocation3], 1
    %s3437 = scalar_lea.sflag [#allocation3], 1
    %3438 = vsyncpa %s3437, 1
    %3439 = vsyncpa [#allocation4], 1
    %s3440 = scalar_lea.sflag [#allocation4], 1
    %3441 = vsyncpa %s3440, 1
    %3442 = vsyncpa [#allocation7], 1

</llo_original>
